<compile_context>
chip_gen: v6e
topology: v6e:2x2x1
jax: 0.10.0
libtpu: 0.0.40
codegen_flags: <defaults>
</compile_context>

<pallas_src>
import functools

import jax
import jax.numpy as jnp
from jax.experimental import pallas as pl
from jax.experimental.pallas import tpu as pltpu

_LANES = 128
# Explicit scoped-VMEM cap: plenty for these tiles, headroom below v7x's
# 64 MiB physical VMEM (v5e/v6e have 128 MiB).
_VMEM_LIMIT_BYTES = 48 * 1024 * 1024


def _round_up(x, m):
    return (x + m - 1) // m * m


def _pick_row_tile(ho, wo, cop, target_bytes=1 << 20):
    """Largest divisor of `ho` whose (TH*Wo, Cop) f32 tile fits target_bytes.

    If Wo is not a multiple of 8, force TH=1 so the in-kernel
    (TH, Wo, Ci) -> (TH*Wo, Ci) reshape stays layout-trivial.
    """
    if wo % 8 != 0:
        return 1
    best = 1
    for th in range(1, ho + 1):
        if ho % th == 0 and th * wo * cop * 4 <= target_bytes:
            best = th
    return best


def _conv_tile_kernel(x_ref, w_ref, y_ref, s_ref, *, taps, TH, Wo):
    """One grid step = one (image, row-tile); all conv taps unrolled in-kernel.

    x_ref : (P, Hq, Wq, Ci)      phase-split padded input image (bf16), resident
    w_ref : (T, Ci, Cop)         per-tap weights (bf16), resident
    y_ref : (1, 1, TH*Wo, Cop)   pre-BN conv output tile (f32), lane-dense
    s_ref : (1, 1, 2, Cop)       per-tile [sum, sum_of_squares] partials (f32)
    """
    r = pl.program_id(1)
    row0 = r * TH
    cop = w_ref.shape[-1]

    acc = jnp.zeros((TH * Wo, cop), jnp.float32)
    for t, (ph, dyq, dxq) in enumerate(taps):
        # Contiguous shifted window of this tap (phase split removed strides).
        patch = x_ref[ph, pl.ds(row0 + dyq, TH), pl.ds(dxq, Wo), :]
        patch = patch.reshape(TH * Wo, patch.shape[-1])          # (TH*Wo, Ci)
        acc = acc + jnp.dot(patch, w_ref[t],
                            preferred_element_type=jnp.float32)  # MXU, f32 acc

    y_ref[0, 0] = acc.astype(y_ref.dtype)
    s_ref[0, 0, 0:1, :] = jnp.sum(acc, axis=0, keepdims=True)
    s_ref[0, 0, 1:2, :] = jnp.sum(acc * acc, axis=0, keepdims=True)


def _bn_act_kernel(y_ref, scale_ref, shift_ref, o_ref, *, relu):
    """Apply per-channel affine BN (precomputed scale/shift) and optional ReLU."""
    y = y_ref[0, 0].astype(jnp.float32)
    o = y * scale_ref[...] + shift_ref[...]
    if relu:
        o = jnp.maximum(o, 0.0)
    o_ref[0, 0] = o.astype(o_ref.dtype)


def conv_bn_act_pallas(x, w, gamma, beta, *, stride, padding, relu,
                       out_dtype, eps=1e-5):
    """Conv2d(bias=False) + BatchNorm2d(batch stats) [+ ReLU] on NHWC input.

    x: (N, H, W, Ci)  (Ci may already be lane-padded)
    w: (KH, KW, Cw_in, Cout) with Cw_in <= Ci (extra input channels are zeros)
    Returns (N, Ho, Wo, Cop) with Cop = round_up(Cout, 128); channels
    [Cout:Cop] are exactly zero.
    """
    n, h, wdt, ci = x.shape
    kh, kw, cw_in, cout = w.shape
    cop = _round_up(cout, _LANES)
    s = stride
    ho = (h + 2 * padding - kh) // s + 1
    wo = (wdt + 2 * padding - kw) // s + 1

    # ---- wrapper-side layout glue (single size-preserving pass) ----
    xp = jnp.pad(x.astype(jnp.bfloat16),
                 ((0, 0), (padding, padding), (padding, padding), (0, 0)))
    hq = ho + (kh - 1) // s
    wq = wo + (kw - 1) // s

    phase_idx = {}
    phase_arrays = []
    taps = []
    for dy in range(kh):
        for dx in range(kw):
            key = (dy % s, dx % s)
            if key not in phase_idx:
                ph = xp[:, key[0]::s, key[1]::s, :]
                ph = ph[:, :hq, :wq, :]
                ph = jnp.pad(ph, ((0, 0),
                                  (0, hq - ph.shape[1]),
                                  (0, wq - ph.shape[2]),
                                  (0, 0)))
                phase_idx[key] = len(phase_arrays)
                phase_arrays.append(ph)
            taps.append((phase_idx[key], dy // s, dx // s))
    p = len(phase_arrays)
    # (N, P, Hq, Wq, Ci) -> (N*P, Hq, Wq, Ci) so kernel blocks stay 4-D.
    xph = jnp.stack(phase_arrays, axis=1).reshape(n * p, hq, wq, ci)
    taps = tuple(taps)

    # Weights: pad input channels up to Ci (zeros), output channels up to Cop,
    # flatten taps, cast to bf16 (MXU operands).
    w_full = w
    if cw_in < ci:
        w_full = jnp.pad(w_full, ((0, 0), (0, 0), (0, ci - cw_in), (0, 0)))
    w_full = jnp.pad(w_full, ((0, 0), (0, 0), (0, 0), (0, cop - cout)))
    w_t = w_full.reshape(kh * kw, ci, cop).astype(jnp.bfloat16)

    th = _pick_row_tile(ho, wo, cop)
    r_tiles = ho // th
    thw = th * wo

    conv_kernel = functools.partial(_conv_tile_kernel, taps=taps, TH=th, Wo=wo)
    y4, stats = pl.pallas_call(
        conv_kernel,
        grid=(n, r_tiles),
        in_specs=[
            pl.BlockSpec((p, hq, wq, ci), lambda i, j: (i, 0, 0, 0)),
            pl.BlockSpec((kh * kw, ci, cop), lambda i, j: (0, 0, 0)),
        ],
        out_specs=(
            pl.BlockSpec((1, 1, thw, cop), lambda i, j: (i, j, 0, 0)),
            pl.BlockSpec((1, 1, 2, cop), lambda i, j: (i, j, 0, 0)),
        ),
        out_shape=(
            jax.ShapeDtypeStruct((n, r_tiles, thw, cop), jnp.float32),
            jax.ShapeDtypeStruct((n, r_tiles, 2, cop), jnp.float32),
        ),
        compiler_params=pltpu.CompilerParams(
            dimension_semantics=("parallel", "parallel"),
            vmem_limit_bytes=_VMEM_LIMIT_BYTES),
    )(xph, w_t)

    # ---- global BatchNorm statistics (biased variance, training mode) ----
    m = n * ho * wo
    tot = jnp.sum(stats, axis=(0, 1))                # (2, Cop)
    mean = tot[0] / m
    var = jnp.maximum(tot[1] / m - mean * mean, 0.0)
    gamma_p = jnp.pad(gamma.astype(jnp.float32), (0, cop - cout),
                      constant_values=1.0)
    beta_p = jnp.pad(beta.astype(jnp.float32), (0, cop - cout))
    scale = gamma_p * jax.lax.rsqrt(var + eps)
    shift = beta_p - mean * scale
    scale = scale.reshape(1, cop)
    shift = shift.reshape(1, cop)

    o4 = pl.pallas_call(
        functools.partial(_bn_act_kernel, relu=relu),
        grid=(n, r_tiles),
        in_specs=[
            pl.BlockSpec((1, 1, thw, cop), lambda i, j: (i, j, 0, 0)),
            pl.BlockSpec((1, cop), lambda i, j: (0, 0)),
            pl.BlockSpec((1, cop), lambda i, j: (0, 0)),
        ],
        out_specs=pl.BlockSpec((1, 1, thw, cop), lambda i, j: (i, j, 0, 0)),
        out_shape=jax.ShapeDtypeStruct((n, r_tiles, thw, cop), out_dtype),
        compiler_params=pltpu.CompilerParams(
            dimension_semantics=("parallel", "parallel"),
            vmem_limit_bytes=_VMEM_LIMIT_BYTES),
    )(y4, scale, shift)

    return o4.reshape(n, ho, wo, cop)


def init_basic_block_params(key, in_channels, out_channels, stride=1,
                            expansion=1):
    """Deterministic parameter init (shapes follow BasicBlock.__init__)."""
    ks = jax.random.split(key, 6)
    exp_ch = out_channels * expansion
    params = {
        # conv weights stored as (KH, KW, Cin, Cout)
        "w1": jax.random.normal(ks[0], (3, 3, in_channels, out_channels),
                                jnp.float32) * 0.1,
        "g1": jnp.ones((out_channels,), jnp.float32),
        "b1": jnp.zeros((out_channels,), jnp.float32),
        "w2": jax.random.normal(ks[1], (3, 3, out_channels, exp_ch),
                                jnp.float32) * 0.1,
        "g2": jnp.ones((exp_ch,), jnp.float32),
        "b2": jnp.zeros((exp_ch,), jnp.float32),
    }
    if stride != 1 or in_channels != exp_ch:
        params["ws"] = jax.random.normal(ks[2], (1, 1, in_channels, exp_ch),
                                         jnp.float32) * 0.1
        params["gs"] = jnp.ones((exp_ch,), jnp.float32)
        params["bs"] = jnp.zeros((exp_ch,), jnp.float32)
    return params


def basic_block_forward(x_nchw, params, *, in_channels, out_channels,
                        stride=1, expansion=1):
    """Returns (residual_output, shortcut_output) in NCHW, like the module."""
    exp_ch = out_channels * expansion
    x = jnp.transpose(x_nchw, (0, 2, 3, 1))      # NCHW -> NHWC once per block

    # residual_function: conv3x3/s -> BN -> ReLU -> conv3x3 -> BN
    h = conv_bn_act_pallas(x, params["w1"], params["g1"], params["b1"],
                           stride=stride, padding=1, relu=True,
                           out_dtype=jnp.bfloat16)   # lane-padded, bf16 feed
    res_p = conv_bn_act_pallas(h, params["w2"], params["g2"], params["b2"],
                               stride=1, padding=1, relu=False,
                               out_dtype=jnp.float32)
    res = res_p[..., :exp_ch]

    # shortcut: conv1x1/s -> BN, or identity
    if stride != 1 or in_channels != exp_ch:
        sc_p = conv_bn_act_pallas(x, params["ws"], params["gs"], params["bs"],
                                  stride=stride, padding=0, relu=False,
                                  out_dtype=jnp.float32)
        sc = sc_p[..., :exp_ch]
    else:
        sc = x.astype(jnp.float32)

    return (jnp.transpose(res, (0, 3, 1, 2)),     # NHWC -> NCHW
            jnp.transpose(sc, (0, 3, 1, 2)))


if __name__ == "__main__":
    # Small shapes consistent with the module: NCHW input.
    N, Cin, H, W = 2, 4, 16, 16
    Cout, stride, expansion = 8, 2, 1

    key = jax.random.PRNGKey(0)
    kx, kp = jax.random.split(key)
    x = jax.random.normal(kx, (N, Cin, H, W), jnp.float32)
    params = init_basic_block_params(kp, Cin, Cout, stride, expansion)

    fwd = jax.jit(functools.partial(basic_block_forward,
                                    in_channels=Cin, out_channels=Cout,
                                    stride=stride, expansion=expansion))
    res, sc = fwd(x, params)
    jax.block_until_ready(res)
    jax.block_until_ready(sc)

    assert res.shape == (N, Cout * expansion, H // stride, W // stride)
    assert sc.shape == (N, Cout * expansion, H // stride, W // stride)
    assert bool(jnp.all(jnp.isfinite(res))) and bool(jnp.all(jnp.isfinite(sc)))
    print("KERNEL_OK")
</pallas_src>

<mosaic_0001>
module attributes {stable_mosaic.version = 11 : i64} {
  func.func @_bn_act_kernel(%arg0: i32, %arg1: i32, %arg2: memref<1x1x64x128xf32, #tpu.memory_space<vmem>>, %arg3: memref<1x128xf32, #tpu.memory_space<vmem>>, %arg4: memref<1x128xf32, #tpu.memory_space<vmem>>, %arg5: memref<1x1x64x128xf32, #tpu.memory_space<vmem>>) attributes {dimension_semantics = [#tpu.dimension_semantics<parallel>, #tpu.dimension_semantics<parallel>], iteration_bounds = array<i64: 2, 1>, scalar_prefetch = 0 : i64, scratch_operands = 0 : i64, tpu.core_type = #tpu.core_type<tc>, window_params = [{transform_indices = @transform_0, window_bounds = array<i64: 1, 1, 64, 128>}, {pipeline_mode = #tpu.pipeline_mode<synchronous>, transform_indices = @transform_1, window_bounds = array<i64: 1, 128>}, {pipeline_mode = #tpu.pipeline_mode<synchronous>, transform_indices = @transform_2, window_bounds = array<i64: 1, 128>}, {transform_indices = @transform_3, window_bounds = array<i64: 1, 1, 64, 128>}]} {
    %c0 = arith.constant 0 : index
    %c0_0 = arith.constant 0 : index
    %c0_1 = arith.constant 0 : index
    %c0_2 = arith.constant 0 : index
    %0 = vector.load %arg2[%c0, %c0_0, %c0_1, %c0_2] : memref<1x1x64x128xf32, #tpu.memory_space<vmem>>, vector<1x1x64x128xf32>
    %1 = vector.shape_cast %0 : vector<1x1x64x128xf32> to vector<64x128xf32>
    %c0_3 = arith.constant 0 : index
    %c0_4 = arith.constant 0 : index
    %2 = vector.load %arg3[%c0_3, %c0_4] : memref<1x128xf32, #tpu.memory_space<vmem>>, vector<1x128xf32>
    %3 = vector.broadcast %2 : vector<1x128xf32> to vector<64x128xf32>
    %4 = arith.mulf %1, %3 : vector<64x128xf32>
    %c0_5 = arith.constant 0 : index
    %c0_6 = arith.constant 0 : index
    %5 = vector.load %arg4[%c0_5, %c0_6] : memref<1x128xf32, #tpu.memory_space<vmem>>, vector<1x128xf32>
    %6 = vector.broadcast %5 : vector<1x128xf32> to vector<64x128xf32>
    %7 = arith.addf %4, %6 : vector<64x128xf32>
    %c0_7 = arith.constant 0 : index
    %c0_8 = arith.constant 0 : index
    %c0_9 = arith.constant 0 : index
    %c0_10 = arith.constant 0 : index
    %8 = vector.load %arg5[%c0_7, %c0_8, %c0_9, %c0_10] : memref<1x1x64x128xf32, #tpu.memory_space<vmem>>, vector<1x1x64x128xf32>
    %9 = vector.shape_cast %8 : vector<1x1x64x128xf32> to vector<64x128xf32>
    %10 = vector.shape_cast %7 : vector<64x128xf32> to vector<1x1x64x128xf32>
    tpu.vector_store %arg5[%c0_7, %c0_8, %c0_9, %c0_10], %10 {strides = array<i32>} : memref<1x1x64x128xf32, #tpu.memory_space<vmem>>, vector<1x1x64x128xf32>,
    return
  }
  func.func @transform_0(%arg0: i32, %arg1: i32) -> (i32, i32, i32, i32) {
    %c0_i32 = arith.constant 0 : i32
    %c0_i32_0 = arith.constant 0 : i32
    %c0_i32_1 = arith.constant 0 : i32
    return %arg0, %arg1, %c0_i32, %c0_i32_0 : i32, i32, i32, i32
  }
  func.func @transform_1(%arg0: i32, %arg1: i32) -> (i32, i32) {
    %c0_i32 = arith.constant 0 : i32
    %c0_i32_0 = arith.constant 0 : i32
    %c0_i32_1 = arith.constant 0 : i32
    return %c0_i32, %c0_i32_0 : i32, i32
  }
  func.func @transform_2(%arg0: i32, %arg1: i32) -> (i32, i32) {
    %c0_i32 = arith.constant 0 : i32
    %c0_i32_0 = arith.constant 0 : i32
    %c0_i32_1 = arith.constant 0 : i32
    return %c0_i32, %c0_i32_0 : i32, i32
  }
  func.func @transform_3(%arg0: i32, %arg1: i32) -> (i32, i32, i32, i32) {
    %c0_i32 = arith.constant 0 : i32
    %c0_i32_0 = arith.constant 0 : i32
    %c0_i32_1 = arith.constant 0 : i32
    return %arg0, %arg1, %c0_i32, %c0_i32_0 : i32, i32, i32, i32
  }
}

module attributes {stable_mosaic.version = 11 : i64} {
  func.func @_conv_tile_kernel(%arg0: i32, %arg1: i32, %arg2: memref<1x8x8x4xbf16, #tpu.memory_space<vmem>>, %arg3: memref<1x4x128xbf16, #tpu.memory_space<vmem>>, %arg4: memref<1x1x64x128xf32, #tpu.memory_space<vmem>>, %arg5: memref<1x1x2x128xf32, #tpu.memory_space<vmem>>) attributes {dimension_semantics = [#tpu.dimension_semantics<parallel>, #tpu.dimension_semantics<parallel>], iteration_bounds = array<i64: 2, 1>, scalar_prefetch = 0 : i64, scratch_operands = 0 : i64, tpu.core_type = #tpu.core_type<tc>, window_params = [{transform_indices = @transform_0, window_bounds = array<i64: 1, 8, 8, 4>}, {pipeline_mode = #tpu.pipeline_mode<synchronous>, transform_indices = @transform_1, window_bounds = array<i64: 1, 4, 128>}, {transform_indices = @transform_2, window_bounds = array<i64: 1, 1, 64, 128>}, {transform_indices = @transform_3, window_bounds = array<i64: 1, 1, 2, 128>}]} {
    %c8_i32 = arith.constant 8 : i32
    %0 = arith.muli %arg1, %c8_i32 : i32
    %cst = arith.constant 0.000000e+00 : f32
    %1 = vector.broadcast %cst : f32 to vector<64x128xf32>
    %c0_i32 = arith.constant 0 : i32
    %2 = arith.addi %0, %c0_i32 : i32
    %c0 = arith.constant 0 : index
    %3 = arith.index_cast %2 : i32 to index
    %c0_0 = arith.constant 0 : index
    %c0_1 = arith.constant 0 : index
    %4 = vector.load %arg2[%c0, %3, %c0_0, %c0_1] : memref<1x8x8x4xbf16, #tpu.memory_space<vmem>>, vector<1x8x8x4xbf16>
    %5 = vector.shape_cast %4 : vector<1x8x8x4xbf16> to vector<8x8x4xbf16>
    %6 = vector.shape_cast %5 : vector<8x8x4xbf16> to vector<64x4xbf16>
    %c0_2 = arith.constant 0 : index
    %c0_3 = arith.constant 0 : index
    %c0_4 = arith.constant 0 : index
    %7 = vector.load %arg3[%c0_2, %c0_3, %c0_4] : memref<1x4x128xbf16, #tpu.memory_space<vmem>>, vector<1x4x128xbf16>
    %8 = vector.shape_cast %7 : vector<1x4x128xbf16> to vector<4x128xbf16>
    %cst_5 = arith.constant dense<0.000000e+00> : vector<64x128xf32>
    %9 = tpu.matmul %6, %8, %cst_5 {dimension_numbers = #tpu.dot_dimension_numbers<[1], [0], [0], [1], [0, 0, 1, 1], [], []>} : vector<64x4xbf16>, vector<4x128xbf16>, vector<64x128xf32> -> vector<64x128xf32>
    %10 = arith.addf %1, %9 : vector<64x128xf32>
    %c0_6 = arith.constant 0 : index
    %c0_7 = arith.constant 0 : index
    %c0_8 = arith.constant 0 : index
    %c0_9 = arith.constant 0 : index
    %11 = vector.load %arg4[%c0_6, %c0_7, %c0_8, %c0_9] : memref<1x1x64x128xf32, #tpu.memory_space<vmem>>, vector<1x1x64x128xf32>
    %12 = vector.shape_cast %11 : vector<1x1x64x128xf32> to vector<64x128xf32>
    %13 = vector.shape_cast %10 : vector<64x128xf32> to vector<1x1x64x128xf32>
    tpu.vector_store %arg4[%c0_6, %c0_7, %c0_8, %c0_9], %13 {strides = array<i32>} : memref<1x1x64x128xf32, #tpu.memory_space<vmem>>, vector<1x1x64x128xf32>,
    %cst_10 = arith.constant dense<0.000000e+00> : vector<128xf32>
    %14 = vector.multi_reduction <add>, %10, %cst_10 [0] : vector<64x128xf32> to vector<128xf32>
    %15 = vector.shape_cast %14 : vector<128xf32> to vector<1x128xf32>
    %c0_11 = arith.constant 0 : index
    %c0_12 = arith.constant 0 : index
    %c0_13 = arith.constant 0 : index
    %c0_14 = arith.constant 0 : index
    %16 = vector.load %arg5[%c0_11, %c0_12, %c0_13, %c0_14] : memref<1x1x2x128xf32, #tpu.memory_space<vmem>>, vector<1x1x1x128xf32>
    %17 = vector.shape_cast %16 : vector<1x1x1x128xf32> to vector<1x128xf32>
    %18 = vector.shape_cast %15 : vector<1x128xf32> to vector<1x1x1x128xf32>
    tpu.vector_store %arg5[%c0_11, %c0_12, %c0_13, %c0_14], %18 {strides = array<i32>} : memref<1x1x2x128xf32, #tpu.memory_space<vmem>>, vector<1x1x1x128xf32>,
    %19 = arith.mulf %10, %10 : vector<64x128xf32>
    %cst_15 = arith.constant dense<0.000000e+00> : vector<128xf32>
    %20 = vector.multi_reduction <add>, %19, %cst_15 [0] : vector<64x128xf32> to vector<128xf32>
    %21 = vector.shape_cast %20 : vector<128xf32> to vector<1x128xf32>
    %c0_16 = arith.constant 0 : index
    %c0_17 = arith.constant 0 : index
    %c1 = arith.constant 1 : index
    %c0_18 = arith.constant 0 : index
    %22 = vector.load %arg5[%c0_16, %c0_17, %c1, %c0_18] : memref<1x1x2x128xf32, #tpu.memory_space<vmem>>, vector<1x1x1x128xf32>
    %23 = vector.shape_cast %22 : vector<1x1x1x128xf32> to vector<1x128xf32>
    %24 = vector.shape_cast %21 : vector<1x128xf32> to vector<1x1x1x128xf32>
    tpu.vector_store %arg5[%c0_16, %c0_17, %c1, %c0_18], %24 {strides = array<i32>} : memref<1x1x2x128xf32, #tpu.memory_space<vmem>>, vector<1x1x1x128xf32>,
    return
  }
  func.func @transform_0(%arg0: i32, %arg1: i32) -> (i32, i32, i32, i32) {
    %c0_i32 = arith.constant 0 : i32
    %c0_i32_0 = arith.constant 0 : i32
    %c0_i32_1 = arith.constant 0 : i32
    %c0_i32_2 = arith.constant 0 : i32
    return %arg0, %c0_i32, %c0_i32_0, %c0_i32_1 : i32, i32, i32, i32
  }
  func.func @transform_1(%arg0: i32, %arg1: i32) -> (i32, i32, i32) {
    %c0_i32 = arith.constant 0 : i32
    %c0_i32_0 = arith.constant 0 : i32
    %c0_i32_1 = arith.constant 0 : i32
    %c0_i32_2 = arith.constant 0 : i32
    return %c0_i32, %c0_i32_0, %c0_i32_1 : i32, i32, i32
  }
  func.func @transform_2(%arg0: i32, %arg1: i32) -> (i32, i32, i32, i32) {
    %c0_i32 = arith.constant 0 : i32
    %c0_i32_0 = arith.constant 0 : i32
    %c0_i32_1 = arith.constant 0 : i32
    return %arg0, %arg1, %c0_i32, %c0_i32_0 : i32, i32, i32, i32
  }
  func.func @transform_3(%arg0: i32, %arg1: i32) -> (i32, i32, i32, i32) {
    %c0_i32 = arith.constant 0 : i32
    %c0_i32_0 = arith.constant 0 : i32
    %c0_i32_1 = arith.constant 0 : i32
    return %arg0, %arg1, %c0_i32, %c0_i32_0 : i32, i32, i32, i32
  }
}

module attributes {stable_mosaic.version = 11 : i64} {
  func.func @_conv_tile_kernel(%arg0: i32, %arg1: i32, %arg2: memref<4x9x9x4xbf16, #tpu.memory_space<vmem>>, %arg3: memref<9x4x128xbf16, #tpu.memory_space<vmem>>, %arg4: memref<1x1x64x128xf32, #tpu.memory_space<vmem>>, %arg5: memref<1x1x2x128xf32, #tpu.memory_space<vmem>>) attributes {dimension_semantics = [#tpu.dimension_semantics<parallel>, #tpu.dimension_semantics<parallel>], iteration_bounds = array<i64: 2, 1>, scalar_prefetch = 0 : i64, scratch_operands = 0 : i64, tpu.core_type = #tpu.core_type<tc>, window_params = [{transform_indices = @transform_0, window_bounds = array<i64: 4, 9, 9, 4>}, {pipeline_mode = #tpu.pipeline_mode<synchronous>, transform_indices = @transform_1, window_bounds = array<i64: 9, 4, 128>}, {transform_indices = @transform_2, window_bounds = array<i64: 1, 1, 64, 128>}, {transform_indices = @transform_3, window_bounds = array<i64: 1, 1, 2, 128>}]} {
    %c8_i32 = arith.constant 8 : i32
    %0 = arith.muli %arg1, %c8_i32 : i32
    %cst = arith.constant 0.000000e+00 : f32
    %1 = vector.broadcast %cst : f32 to vector<64x128xf32>
    %c0_i32 = arith.constant 0 : i32
    %2 = arith.addi %0, %c0_i32 : i32
    %c0 = arith.constant 0 : index
    %3 = arith.index_cast %2 : i32 to index
    %c0_0 = arith.constant 0 : index
    %c0_1 = arith.constant 0 : index
    %4 = vector.load %arg2[%c0, %3, %c0_0, %c0_1] : memref<4x9x9x4xbf16, #tpu.memory_space<vmem>>, vector<1x8x8x4xbf16>
    %5 = vector.shape_cast %4 : vector<1x8x8x4xbf16> to vector<8x8x4xbf16>
    %6 = vector.shape_cast %5 : vector<8x8x4xbf16> to vector<64x4xbf16>
    %c0_2 = arith.constant 0 : index
    %c0_3 = arith.constant 0 : index
    %c0_4 = arith.constant 0 : index
    %7 = vector.load %arg3[%c0_2, %c0_3, %c0_4] : memref<9x4x128xbf16, #tpu.memory_space<vmem>>, vector<1x4x128xbf16>
    %8 = vector.shape_cast %7 : vector<1x4x128xbf16> to vector<4x128xbf16>
    %cst_5 = arith.constant dense<0.000000e+00> : vector<64x128xf32>
    %9 = tpu.matmul %6, %8, %cst_5 {dimension_numbers = #tpu.dot_dimension_numbers<[1], [0], [0], [1], [0, 0, 1, 1], [], []>} : vector<64x4xbf16>, vector<4x128xbf16>, vector<64x128xf32> -> vector<64x128xf32>
    %10 = arith.addf %1, %9 : vector<64x128xf32>
    %c0_i32_6 = arith.constant 0 : i32
    %11 = arith.addi %0, %c0_i32_6 : i32
    %c1 = arith.constant 1 : index
    %12 = arith.index_cast %11 : i32 to index
    %c0_7 = arith.constant 0 : index
    %c0_8 = arith.constant 0 : index
    %13 = vector.load %arg2[%c1, %12, %c0_7, %c0_8] : memref<4x9x9x4xbf16, #tpu.memory_space<vmem>>, vector<1x8x8x4xbf16>
    %14 = vector.shape_cast %13 : vector<1x8x8x4xbf16> to vector<8x8x4xbf16>
    %15 = vector.shape_cast %14 : vector<8x8x4xbf16> to vector<64x4xbf16>
    %c1_9 = arith.constant 1 : index
    %c0_10 = arith.constant 0 : index
    %c0_11 = arith.constant 0 : index
    %16 = vector.load %arg3[%c1_9, %c0_10, %c0_11] : memref<9x4x128xbf16, #tpu.memory_space<vmem>>, vector<1x4x128xbf16>
    %17 = vector.shape_cast %16 : vector<1x4x128xbf16> to vector<4x128xbf16>
    %cst_12 = arith.constant dense<0.000000e+00> : vector<64x128xf32>
    %18 = tpu.matmul %15, %17, %cst_12 {dimension_numbers = #tpu.dot_dimension_numbers<[1], [0], [0], [1], [0, 0, 1, 1], [], []>} : vector<64x4xbf16>, vector<4x128xbf16>, vector<64x128xf32> -> vector<64x128xf32>
    %19 = arith.addf %10, %18 : vector<64x128xf32>
    %c0_i32_13 = arith.constant 0 : i32
    %20 = arith.addi %0, %c0_i32_13 : i32
    %c0_14 = arith.constant 0 : index
    %21 = arith.index_cast %20 : i32 to index
    %c1_15 = arith.constant 1 : index
    %c0_16 = arith.constant 0 : index
    %22 = vector.load %arg2[%c0_14, %21, %c1_15, %c0_16] : memref<4x9x9x4xbf16, #tpu.memory_space<vmem>>, vector<1x8x8x4xbf16>
    %23 = vector.shape_cast %22 : vector<1x8x8x4xbf16> to vector<8x8x4xbf16>
    %24 = vector.shape_cast %23 : vector<8x8x4xbf16> to vector<64x4xbf16>
    %c2 = arith.constant 2 : index
    %c0_17 = arith.constant 0 : index
    %c0_18 = arith.constant 0 : index
    %25 = vector.load %arg3[%c2, %c0_17, %c0_18] : memref<9x4x128xbf16, #tpu.memory_space<vmem>>, vector<1x4x128xbf16>
    %26 = vector.shape_cast %25 : vector<1x4x128xbf16> to vector<4x128xbf16>
    %cst_19 = arith.constant dense<0.000000e+00> : vector<64x128xf32>
    %27 = tpu.matmul %24, %26, %cst_19 {dimension_numbers = #tpu.dot_dimension_numbers<[1], [0], [0], [1], [0, 0, 1, 1], [], []>} : vector<64x4xbf16>, vector<4x128xbf16>, vector<64x128xf32> -> vector<64x128xf32>
    %28 = arith.addf %19, %27 : vector<64x128xf32>
    %c0_i32_20 = arith.constant 0 : i32
    %29 = arith.addi %0, %c0_i32_20 : i32
    %c2_21 = arith.constant 2 : index
    %30 = arith.index_cast %29 : i32 to index
    %c0_22 = arith.constant 0 : index
    %c0_23 = arith.constant 0 : index
    %31 = vector.load %arg2[%c2_21, %30, %c0_22, %c0_23] : memref<4x9x9x4xbf16, #tpu.memory_space<vmem>>, vector<1x8x8x4xbf16>
    %32 = vector.shape_cast %31 : vector<1x8x8x4xbf16> to vector<8x8x4xbf16>
    %33 = vector.shape_cast %32 : vector<8x8x4xbf16> to vector<64x4xbf16>
    %c3 = arith.constant 3 : index
    %c0_24 = arith.constant 0 : index
    %c0_25 = arith.constant 0 : index
    %34 = vector.load %arg3[%c3, %c0_24, %c0_25] : memref<9x4x128xbf16, #tpu.memory_space<vmem>>, vector<1x4x128xbf16>
    %35 = vector.shape_cast %34 : vector<1x4x128xbf16> to vector<4x128xbf16>
    %cst_26 = arith.constant dense<0.000000e+00> : vector<64x128xf32>
    %36 = tpu.matmul %33, %35, %cst_26 {dimension_numbers = #tpu.dot_dimension_numbers<[1], [0], [0], [1], [0, 0, 1, 1], [], []>} : vector<64x4xbf16>, vector<4x128xbf16>, vector<64x128xf32> -> vector<64x128xf32>
    %37 = arith.addf %28, %36 : vector<64x128xf32>
    %c0_i32_27 = arith.constant 0 : i32
    %38 = arith.addi %0, %c0_i32_27 : i32
    %c3_28 = arith.constant 3 : index
    %39 = arith.index_cast %38 : i32 to index
    %c0_29 = arith.constant 0 : index
    %c0_30 = arith.constant 0 : index
    %40 = vector.load %arg2[%c3_28, %39, %c0_29, %c0_30] : memref<4x9x9x4xbf16, #tpu.memory_space<vmem>>, vector<1x8x8x4xbf16>
    %41 = vector.shape_cast %40 : vector<1x8x8x4xbf16> to vector<8x8x4xbf16>
    %42 = vector.shape_cast %41 : vector<8x8x4xbf16> to vector<64x4xbf16>
    %c4 = arith.constant 4 : index
    %c0_31 = arith.constant 0 : index
    %c0_32 = arith.constant 0 : index
    %43 = vector.load %arg3[%c4, %c0_31, %c0_32] : memref<9x4x128xbf16, #tpu.memory_space<vmem>>, vector<1x4x128xbf16>
    %44 = vector.shape_cast %43 : vector<1x4x128xbf16> to vector<4x128xbf16>
    %cst_33 = arith.constant dense<0.000000e+00> : vector<64x128xf32>
    %45 = tpu.matmul %42, %44, %cst_33 {dimension_numbers = #tpu.dot_dimension_numbers<[1], [0], [0], [1], [0, 0, 1, 1], [], []>} : vector<64x4xbf16>, vector<4x128xbf16>, vector<64x128xf32> -> vector<64x128xf32>
    %46 = arith.addf %37, %45 : vector<64x128xf32>
    %c0_i32_34 = arith.constant 0 : i32
    %47 = arith.addi %0, %c0_i32_34 : i32
    %c2_35 = arith.constant 2 : index
    %48 = arith.index_cast %47 : i32 to index
    %c1_36 = arith.constant 1 : index
    %c0_37 = arith.constant 0 : index
    %49 = vector.load %arg2[%c2_35, %48, %c1_36, %c0_37] : memref<4x9x9x4xbf16, #tpu.memory_space<vmem>>, vector<1x8x8x4xbf16>
    %50 = vector.shape_cast %49 : vector<1x8x8x4xbf16> to vector<8x8x4xbf16>
    %51 = vector.shape_cast %50 : vector<8x8x4xbf16> to vector<64x4xbf16>
    %c5 = arith.constant 5 : index
    %c0_38 = arith.constant 0 : index
    %c0_39 = arith.constant 0 : index
    %52 = vector.load %arg3[%c5, %c0_38, %c0_39] : memref<9x4x128xbf16, #tpu.memory_space<vmem>>, vector<1x4x128xbf16>
    %53 = vector.shape_cast %52 : vector<1x4x128xbf16> to vector<4x128xbf16>
    %cst_40 = arith.constant dense<0.000000e+00> : vector<64x128xf32>
    %54 = tpu.matmul %51, %53, %cst_40 {dimension_numbers = #tpu.dot_dimension_numbers<[1], [0], [0], [1], [0, 0, 1, 1], [], []>} : vector<64x4xbf16>, vector<4x128xbf16>, vector<64x128xf32> -> vector<64x128xf32>
    %55 = arith.addf %46, %54 : vector<64x128xf32>
    %c1_i32 = arith.constant 1 : i32
    %56 = arith.addi %0, %c1_i32 : i32
    %c0_41 = arith.constant 0 : index
    %57 = arith.index_cast %56 : i32 to index
    %c0_42 = arith.constant 0 : index
    %c0_43 = arith.constant 0 : index
    %58 = vector.load %arg2[%c0_41, %57, %c0_42, %c0_43] : memref<4x9x9x4xbf16, #tpu.memory_space<vmem>>, vector<1x8x8x4xbf16>
    %59 = vector.shape_cast %58 : vector<1x8x8x4xbf16> to vector<8x8x4xbf16>
    %60 = vector.shape_cast %59 : vector<8x8x4xbf16> to vector<64x4xbf16>
    %c6 = arith.constant 6 : index
    %c0_44 = arith.constant 0 : index
    %c0_45 = arith.constant 0 : index
    %61 = vector.load %arg3[%c6, %c0_44, %c0_45] : memref<9x4x128xbf16, #tpu.memory_space<vmem>>, vector<1x4x128xbf16>
    %62 = vector.shape_cast %61 : vector<1x4x128xbf16> to vector<4x128xbf16>
    %cst_46 = arith.constant dense<0.000000e+00> : vector<64x128xf32>
    %63 = tpu.matmul %60, %62, %cst_46 {dimension_numbers = #tpu.dot_dimension_numbers<[1], [0], [0], [1], [0, 0, 1, 1], [], []>} : vector<64x4xbf16>, vector<4x128xbf16>, vector<64x128xf32> -> vector<64x128xf32>
    %64 = arith.addf %55, %63 : vector<64x128xf32>
    %c1_i32_47 = arith.constant 1 : i32
    %65 = arith.addi %0, %c1_i32_47 : i32
    %c1_48 = arith.constant 1 : index
    %66 = arith.index_cast %65 : i32 to index
    %c0_49 = arith.constant 0 : index
    %c0_50 = arith.constant 0 : index
    %67 = vector.load %arg2[%c1_48, %66, %c0_49, %c0_50] : memref<4x9x9x4xbf16, #tpu.memory_space<vmem>>, vector<1x8x8x4xbf16>
    %68 = vector.shape_cast %67 : vector<1x8x8x4xbf16> to vector<8x8x4xbf16>
    %69 = vector.shape_cast %68 : vector<8x8x4xbf16> to vector<64x4xbf16>
    %c7 = arith.constant 7 : index
    %c0_51 = arith.constant 0 : index
    %c0_52 = arith.constant 0 : index
    %70 = vector.load %arg3[%c7, %c0_51, %c0_52] : memref<9x4x128xbf16, #tpu.memory_space<vmem>>, vector<1x4x128xbf16>
    %71 = vector.shape_cast %70 : vector<1x4x128xbf16> to vector<4x128xbf16>
    %cst_53 = arith.constant dense<0.000000e+00> : vector<64x128xf32>
    %72 = tpu.matmul %69, %71, %cst_53 {dimension_numbers = #tpu.dot_dimension_numbers<[1], [0], [0], [1], [0, 0, 1, 1], [], []>} : vector<64x4xbf16>, vector<4x128xbf16>, vector<64x128xf32> -> vector<64x128xf32>
    %73 = arith.addf %64, %72 : vector<64x128xf32>
    %c1_i32_54 = arith.constant 1 : i32
    %74 = arith.addi %0, %c1_i32_54 : i32
    %c0_55 = arith.constant 0 : index
    %75 = arith.index_cast %74 : i32 to index
    %c1_56 = arith.constant 1 : index
    %c0_57 = arith.constant 0 : index
    %76 = vector.load %arg2[%c0_55, %75, %c1_56, %c0_57] : memref<4x9x9x4xbf16, #tpu.memory_space<vmem>>, vector<1x8x8x4xbf16>
    %77 = vector.shape_cast %76 : vector<1x8x8x4xbf16> to vector<8x8x4xbf16>
    %78 = vector.shape_cast %77 : vector<8x8x4xbf16> to vector<64x4xbf16>
    %c8 = arith.constant 8 : index
    %c0_58 = arith.constant 0 : index
    %c0_59 = arith.constant 0 : index
    %79 = vector.load %arg3[%c8, %c0_58, %c0_59] : memref<9x4x128xbf16, #tpu.memory_space<vmem>>, vector<1x4x128xbf16>
    %80 = vector.shape_cast %79 : vector<1x4x128xbf16> to vector<4x128xbf16>
    %cst_60 = arith.constant dense<0.000000e+00> : vector<64x128xf32>
    %81 = tpu.matmul %78, %80, %cst_60 {dimension_numbers = #tpu.dot_dimension_numbers<[1], [0], [0], [1], [0, 0, 1, 1], [], []>} : vector<64x4xbf16>, vector<4x128xbf16>, vector<64x128xf32> -> vector<64x128xf32>
    %82 = arith.addf %73, %81 : vector<64x128xf32>
    %c0_61 = arith.constant 0 : index
    %c0_62 = arith.constant 0 : index
    %c0_63 = arith.constant 0 : index
    %c0_64 = arith.constant 0 : index
    %83 = vector.load %arg4[%c0_61, %c0_62, %c0_63, %c0_64] : memref<1x1x64x128xf32, #tpu.memory_space<vmem>>, vector<1x1x64x128xf32>
    %84 = vector.shape_cast %83 : vector<1x1x64x128xf32> to vector<64x128xf32>
    %85 = vector.shape_cast %82 : vector<64x128xf32> to vector<1x1x64x128xf32>
    tpu.vector_store %arg4[%c0_61, %c0_62, %c0_63, %c0_64], %85 {strides = array<i32>} : memref<1x1x64x128xf32, #tpu.memory_space<vmem>>, vector<1x1x64x128xf32>,
    %cst_65 = arith.constant dense<0.000000e+00> : vector<128xf32>
    %86 = vector.multi_reduction <add>, %82, %cst_65 [0] : vector<64x128xf32> to vector<128xf32>
    %87 = vector.shape_cast %86 : vector<128xf32> to vector<1x128xf32>
    %c0_66 = arith.constant 0 : index
    %c0_67 = arith.constant 0 : index
    %c0_68 = arith.constant 0 : index
    %c0_69 = arith.constant 0 : index
    %88 = vector.load %arg5[%c0_66, %c0_67, %c0_68, %c0_69] : memref<1x1x2x128xf32, #tpu.memory_space<vmem>>, vector<1x1x1x128xf32>
    %89 = vector.shape_cast %88 : vector<1x1x1x128xf32> to vector<1x128xf32>
    %90 = vector.shape_cast %87 : vector<1x128xf32> to vector<1x1x1x128xf32>
    tpu.vector_store %arg5[%c0_66, %c0_67, %c0_68, %c0_69], %90 {strides = array<i32>} : memref<1x1x2x128xf32, #tpu.memory_space<vmem>>, vector<1x1x1x128xf32>,
    %91 = arith.mulf %82, %82 : vector<64x128xf32>
    %cst_70 = arith.constant dense<0.000000e+00> : vector<128xf32>
    %92 = vector.multi_reduction <add>, %91, %cst_70 [0] : vector<64x128xf32> to vector<128xf32>
    %93 = vector.shape_cast %92 : vector<128xf32> to vector<1x128xf32>
    %c0_71 = arith.constant 0 : index
    %c0_72 = arith.constant 0 : index
    %c1_73 = arith.constant 1 : index
    %c0_74 = arith.constant 0 : index
    %94 = vector.load %arg5[%c0_71, %c0_72, %c1_73, %c0_74] : memref<1x1x2x128xf32, #tpu.memory_space<vmem>>, vector<1x1x1x128xf32>
    %95 = vector.shape_cast %94 : vector<1x1x1x128xf32> to vector<1x128xf32>
    %96 = vector.shape_cast %93 : vector<1x128xf32> to vector<1x1x1x128xf32>
    tpu.vector_store %arg5[%c0_71, %c0_72, %c1_73, %c0_74], %96 {strides = array<i32>} : memref<1x1x2x128xf32, #tpu.memory_space<vmem>>, vector<1x1x1x128xf32>,
    return
  }
  func.func @transform_0(%arg0: i32, %arg1: i32) -> (i32, i32, i32, i32) {
    %c0_i32 = arith.constant 0 : i32
    %c0_i32_0 = arith.constant 0 : i32
    %c0_i32_1 = arith.constant 0 : i32
    %c0_i32_2 = arith.constant 0 : i32
    return %arg0, %c0_i32, %c0_i32_0, %c0_i32_1 : i32, i32, i32, i32
  }
  func.func @transform_1(%arg0: i32, %arg1: i32) -> (i32, i32, i32) {
    %c0_i32 = arith.constant 0 : i32
    %c0_i32_0 = arith.constant 0 : i32
    %c0_i32_1 = arith.constant 0 : i32
    %c0_i32_2 = arith.constant 0 : i32
    return %c0_i32, %c0_i32_0, %c0_i32_1 : i32, i32, i32
  }
  func.func @transform_2(%arg0: i32, %arg1: i32) -> (i32, i32, i32, i32) {
    %c0_i32 = arith.constant 0 : i32
    %c0_i32_0 = arith.constant 0 : i32
    %c0_i32_1 = arith.constant 0 : i32
    return %arg0, %arg1, %c0_i32, %c0_i32_0 : i32, i32, i32, i32
  }
  func.func @transform_3(%arg0: i32, %arg1: i32) -> (i32, i32, i32, i32) {
    %c0_i32 = arith.constant 0 : i32
    %c0_i32_0 = arith.constant 0 : i32
    %c0_i32_1 = arith.constant 0 : i32
    return %arg0, %arg1, %c0_i32, %c0_i32_0 : i32, i32, i32, i32
  }
}

module attributes {stable_mosaic.version = 11 : i64} {
  func.func @_bn_act_kernel(%arg0: i32, %arg1: i32, %arg2: memref<1x1x64x128xf32, #tpu.memory_space<vmem>>, %arg3: memref<1x128xf32, #tpu.memory_space<vmem>>, %arg4: memref<1x128xf32, #tpu.memory_space<vmem>>, %arg5: memref<1x1x64x128xbf16, #tpu.memory_space<vmem>>) attributes {dimension_semantics = [#tpu.dimension_semantics<parallel>, #tpu.dimension_semantics<parallel>], iteration_bounds = array<i64: 2, 1>, scalar_prefetch = 0 : i64, scratch_operands = 0 : i64, tpu.core_type = #tpu.core_type<tc>, window_params = [{transform_indices = @transform_0, window_bounds = array<i64: 1, 1, 64, 128>}, {pipeline_mode = #tpu.pipeline_mode<synchronous>, transform_indices = @transform_1, window_bounds = array<i64: 1, 128>}, {pipeline_mode = #tpu.pipeline_mode<synchronous>, transform_indices = @transform_2, window_bounds = array<i64: 1, 128>}, {transform_indices = @transform_3, window_bounds = array<i64: 1, 1, 64, 128>}]} {
    %c0 = arith.constant 0 : index
    %c0_0 = arith.constant 0 : index
    %c0_1 = arith.constant 0 : index
    %c0_2 = arith.constant 0 : index
    %0 = vector.load %arg2[%c0, %c0_0, %c0_1, %c0_2] : memref<1x1x64x128xf32, #tpu.memory_space<vmem>>, vector<1x1x64x128xf32>
    %1 = vector.shape_cast %0 : vector<1x1x64x128xf32> to vector<64x128xf32>
    %c0_3 = arith.constant 0 : index
    %c0_4 = arith.constant 0 : index
    %2 = vector.load %arg3[%c0_3, %c0_4] : memref<1x128xf32, #tpu.memory_space<vmem>>, vector<1x128xf32>
    %3 = vector.broadcast %2 : vector<1x128xf32> to vector<64x128xf32>
    %4 = arith.mulf %1, %3 : vector<64x128xf32>
    %c0_5 = arith.constant 0 : index
    %c0_6 = arith.constant 0 : index
    %5 = vector.load %arg4[%c0_5, %c0_6] : memref<1x128xf32, #tpu.memory_space<vmem>>, vector<1x128xf32>
    %6 = vector.broadcast %5 : vector<1x128xf32> to vector<64x128xf32>
    %7 = arith.addf %4, %6 : vector<64x128xf32>
    %cst = arith.constant 0.000000e+00 : f32
    %8 = vector.broadcast %cst : f32 to vector<64x128xf32>
    %9 = arith.maximumf %7, %8 : vector<64x128xf32>
    %10 = arith.truncf %9 : vector<64x128xf32> to vector<64x128xbf16>
    %c0_7 = arith.constant 0 : index
    %c0_8 = arith.constant 0 : index
    %c0_9 = arith.constant 0 : index
    %c0_10 = arith.constant 0 : index
    %11 = vector.load %arg5[%c0_7, %c0_8, %c0_9, %c0_10] : memref<1x1x64x128xbf16, #tpu.memory_space<vmem>>, vector<1x1x64x128xbf16>
    %12 = vector.shape_cast %11 : vector<1x1x64x128xbf16> to vector<64x128xbf16>
    %13 = vector.shape_cast %10 : vector<64x128xbf16> to vector<1x1x64x128xbf16>
    tpu.vector_store %arg5[%c0_7, %c0_8, %c0_9, %c0_10], %13 {strides = array<i32>} : memref<1x1x64x128xbf16, #tpu.memory_space<vmem>>, vector<1x1x64x128xbf16>,
    return
  }
  func.func @transform_0(%arg0: i32, %arg1: i32) -> (i32, i32, i32, i32) {
    %c0_i32 = arith.constant 0 : i32
    %c0_i32_0 = arith.constant 0 : i32
    %c0_i32_1 = arith.constant 0 : i32
    return %arg0, %arg1, %c0_i32, %c0_i32_0 : i32, i32, i32, i32
  }
  func.func @transform_1(%arg0: i32, %arg1: i32) -> (i32, i32) {
    %c0_i32 = arith.constant 0 : i32
    %c0_i32_0 = arith.constant 0 : i32
    %c0_i32_1 = arith.constant 0 : i32
    return %c0_i32, %c0_i32_0 : i32, i32
  }
  func.func @transform_2(%arg0: i32, %arg1: i32) -> (i32, i32) {
    %c0_i32 = arith.constant 0 : i32
    %c0_i32_0 = arith.constant 0 : i32
    %c0_i32_1 = arith.constant 0 : i32
    return %c0_i32, %c0_i32_0 : i32, i32
  }
  func.func @transform_3(%arg0: i32, %arg1: i32) -> (i32, i32, i32, i32) {
    %c0_i32 = arith.constant 0 : i32
    %c0_i32_0 = arith.constant 0 : i32
    %c0_i32_1 = arith.constant 0 : i32
    return %arg0, %arg1, %c0_i32, %c0_i32_0 : i32, i32, i32, i32
  }
}

module attributes {stable_mosaic.version = 11 : i64} {
  func.func @_conv_tile_kernel(%arg0: i32, %arg1: i32, %arg2: memref<1x10x10x128xbf16, #tpu.memory_space<vmem>>, %arg3: memref<9x128x128xbf16, #tpu.memory_space<vmem>>, %arg4: memref<1x1x64x128xf32, #tpu.memory_space<vmem>>, %arg5: memref<1x1x2x128xf32, #tpu.memory_space<vmem>>) attributes {dimension_semantics = [#tpu.dimension_semantics<parallel>, #tpu.dimension_semantics<parallel>], iteration_bounds = array<i64: 2, 1>, scalar_prefetch = 0 : i64, scratch_operands = 0 : i64, tpu.core_type = #tpu.core_type<tc>, window_params = [{transform_indices = @transform_0, window_bounds = array<i64: 1, 10, 10, 128>}, {pipeline_mode = #tpu.pipeline_mode<synchronous>, transform_indices = @transform_1, window_bounds = array<i64: 9, 128, 128>}, {transform_indices = @transform_2, window_bounds = array<i64: 1, 1, 64, 128>}, {transform_indices = @transform_3, window_bounds = array<i64: 1, 1, 2, 128>}]} {
    %c8_i32 = arith.constant 8 : i32
    %0 = arith.muli %arg1, %c8_i32 : i32
    %cst = arith.constant 0.000000e+00 : f32
    %1 = vector.broadcast %cst : f32 to vector<64x128xf32>
    %c0_i32 = arith.constant 0 : i32
    %2 = arith.addi %0, %c0_i32 : i32
    %c0 = arith.constant 0 : index
    %3 = arith.index_cast %2 : i32 to index
    %c0_0 = arith.constant 0 : index
    %c0_1 = arith.constant 0 : index
    %4 = vector.load %arg2[%c0, %3, %c0_0, %c0_1] : memref<1x10x10x128xbf16, #tpu.memory_space<vmem>>, vector<1x8x8x128xbf16>
    %5 = vector.shape_cast %4 : vector<1x8x8x128xbf16> to vector<8x8x128xbf16>
    %6 = vector.shape_cast %5 : vector<8x8x128xbf16> to vector<64x128xbf16>
    %c0_2 = arith.constant 0 : index
    %c0_3 = arith.constant 0 : index
    %c0_4 = arith.constant 0 : index
    %7 = vector.load %arg3[%c0_2, %c0_3, %c0_4] : memref<9x128x128xbf16, #tpu.memory_space<vmem>>, vector<1x128x128xbf16>
    %8 = vector.shape_cast %7 : vector<1x128x128xbf16> to vector<128x128xbf16>
    %cst_5 = arith.constant dense<0.000000e+00> : vector<64x128xf32>
    %9 = tpu.matmul %6, %8, %cst_5 {dimension_numbers = #tpu.dot_dimension_numbers<[1], [0], [0], [1], [0, 0, 1, 1], [], []>} : vector<64x128xbf16>, vector<128x128xbf16>, vector<64x128xf32> -> vector<64x128xf32>
    %10 = arith.addf %1, %9 : vector<64x128xf32>
    %c0_i32_6 = arith.constant 0 : i32
    %11 = arith.addi %0, %c0_i32_6 : i32
    %c0_7 = arith.constant 0 : index
    %12 = arith.index_cast %11 : i32 to index
    %c1 = arith.constant 1 : index
    %c0_8 = arith.constant 0 : index
    %13 = vector.load %arg2[%c0_7, %12, %c1, %c0_8] : memref<1x10x10x128xbf16, #tpu.memory_space<vmem>>, vector<1x8x8x128xbf16>
    %14 = vector.shape_cast %13 : vector<1x8x8x128xbf16> to vector<8x8x128xbf16>
    %15 = vector.shape_cast %14 : vector<8x8x128xbf16> to vector<64x128xbf16>
    %c1_9 = arith.constant 1 : index
    %c0_10 = arith.constant 0 : index
    %c0_11 = arith.constant 0 : index
    %16 = vector.load %arg3[%c1_9, %c0_10, %c0_11] : memref<9x128x128xbf16, #tpu.memory_space<vmem>>, vector<1x128x128xbf16>
    %17 = vector.shape_cast %16 : vector<1x128x128xbf16> to vector<128x128xbf16>
    %cst_12 = arith.constant dense<0.000000e+00> : vector<64x128xf32>
    %18 = tpu.matmul %15, %17, %cst_12 {dimension_numbers = #tpu.dot_dimension_numbers<[1], [0], [0], [1], [0, 0, 1, 1], [], []>} : vector<64x128xbf16>, vector<128x128xbf16>, vector<64x128xf32> -> vector<64x128xf32>
    %19 = arith.addf %10, %18 : vector<64x128xf32>
    %c0_i32_13 = arith.constant 0 : i32
    %20 = arith.addi %0, %c0_i32_13 : i32
    %c0_14 = arith.constant 0 : index
    %21 = arith.index_cast %20 : i32 to index
    %c2 = arith.constant 2 : index
    %c0_15 = arith.constant 0 : index
    %22 = vector.load %arg2[%c0_14, %21, %c2, %c0_15] : memref<1x10x10x128xbf16, #tpu.memory_space<vmem>>, vector<1x8x8x128xbf16>
    %23 = vector.shape_cast %22 : vector<1x8x8x128xbf16> to vector<8x8x128xbf16>
    %24 = vector.shape_cast %23 : vector<8x8x128xbf16> to vector<64x128xbf16>
    %c2_16 = arith.constant 2 : index
    %c0_17 = arith.constant 0 : index
    %c0_18 = arith.constant 0 : index
    %25 = vector.load %arg3[%c2_16, %c0_17, %c0_18] : memref<9x128x128xbf16, #tpu.memory_space<vmem>>, vector<1x128x128xbf16>
    %26 = vector.shape_cast %25 : vector<1x128x128xbf16> to vector<128x128xbf16>
    %cst_19 = arith.constant dense<0.000000e+00> : vector<64x128xf32>
    %27 = tpu.matmul %24, %26, %cst_19 {dimension_numbers = #tpu.dot_dimension_numbers<[1], [0], [0], [1], [0, 0, 1, 1], [], []>} : vector<64x128xbf16>, vector<128x128xbf16>, vector<64x128xf32> -> vector<64x128xf32>
    %28 = arith.addf %19, %27 : vector<64x128xf32>
    %c1_i32 = arith.constant 1 : i32
    %29 = arith.addi %0, %c1_i32 : i32
    %c0_20 = arith.constant 0 : index
    %30 = arith.index_cast %29 : i32 to index
    %c0_21 = arith.constant 0 : index
    %c0_22 = arith.constant 0 : index
    %31 = vector.load %arg2[%c0_20, %30, %c0_21, %c0_22] : memref<1x10x10x128xbf16, #tpu.memory_space<vmem>>, vector<1x8x8x128xbf16>
    %32 = vector.shape_cast %31 : vector<1x8x8x128xbf16> to vector<8x8x128xbf16>
    %33 = vector.shape_cast %32 : vector<8x8x128xbf16> to vector<64x128xbf16>
    %c3 = arith.constant 3 : index
    %c0_23 = arith.constant 0 : index
    %c0_24 = arith.constant 0 : index
    %34 = vector.load %arg3[%c3, %c0_23, %c0_24] : memref<9x128x128xbf16, #tpu.memory_space<vmem>>, vector<1x128x128xbf16>
    %35 = vector.shape_cast %34 : vector<1x128x128xbf16> to vector<128x128xbf16>
    %cst_25 = arith.constant dense<0.000000e+00> : vector<64x128xf32>
    %36 = tpu.matmul %33, %35, %cst_25 {dimension_numbers = #tpu.dot_dimension_numbers<[1], [0], [0], [1], [0, 0, 1, 1], [], []>} : vector<64x128xbf16>, vector<128x128xbf16>, vector<64x128xf32> -> vector<64x128xf32>
    %37 = arith.addf %28, %36 : vector<64x128xf32>
    %c1_i32_26 = arith.constant 1 : i32
    %38 = arith.addi %0, %c1_i32_26 : i32
    %c0_27 = arith.constant 0 : index
    %39 = arith.index_cast %38 : i32 to index
    %c1_28 = arith.constant 1 : index
    %c0_29 = arith.constant 0 : index
    %40 = vector.load %arg2[%c0_27, %39, %c1_28, %c0_29] : memref<1x10x10x128xbf16, #tpu.memory_space<vmem>>, vector<1x8x8x128xbf16>
    %41 = vector.shape_cast %40 : vector<1x8x8x128xbf16> to vector<8x8x128xbf16>
    %42 = vector.shape_cast %41 : vector<8x8x128xbf16> to vector<64x128xbf16>
    %c4 = arith.constant 4 : index
    %c0_30 = arith.constant 0 : index
    %c0_31 = arith.constant 0 : index
    %43 = vector.load %arg3[%c4, %c0_30, %c0_31] : memref<9x128x128xbf16, #tpu.memory_space<vmem>>, vector<1x128x128xbf16>
    %44 = vector.shape_cast %43 : vector<1x128x128xbf16> to vector<128x128xbf16>
    %cst_32 = arith.constant dense<0.000000e+00> : vector<64x128xf32>
    %45 = tpu.matmul %42, %44, %cst_32 {dimension_numbers = #tpu.dot_dimension_numbers<[1], [0], [0], [1], [0, 0, 1, 1], [], []>} : vector<64x128xbf16>, vector<128x128xbf16>, vector<64x128xf32> -> vector<64x128xf32>
    %46 = arith.addf %37, %45 : vector<64x128xf32>
    %c1_i32_33 = arith.constant 1 : i32
    %47 = arith.addi %0, %c1_i32_33 : i32
    %c0_34 = arith.constant 0 : index
    %48 = arith.index_cast %47 : i32 to index
    %c2_35 = arith.constant 2 : index
    %c0_36 = arith.constant 0 : index
    %49 = vector.load %arg2[%c0_34, %48, %c2_35, %c0_36] : memref<1x10x10x128xbf16, #tpu.memory_space<vmem>>, vector<1x8x8x128xbf16>
    %50 = vector.shape_cast %49 : vector<1x8x8x128xbf16> to vector<8x8x128xbf16>
    %51 = vector.shape_cast %50 : vector<8x8x128xbf16> to vector<64x128xbf16>
    %c5 = arith.constant 5 : index
    %c0_37 = arith.constant 0 : index
    %c0_38 = arith.constant 0 : index
    %52 = vector.load %arg3[%c5, %c0_37, %c0_38] : memref<9x128x128xbf16, #tpu.memory_space<vmem>>, vector<1x128x128xbf16>
    %53 = vector.shape_cast %52 : vector<1x128x128xbf16> to vector<128x128xbf16>
    %cst_39 = arith.constant dense<0.000000e+00> : vector<64x128xf32>
    %54 = tpu.matmul %51, %53, %cst_39 {dimension_numbers = #tpu.dot_dimension_numbers<[1], [0], [0], [1], [0, 0, 1, 1], [], []>} : vector<64x128xbf16>, vector<128x128xbf16>, vector<64x128xf32> -> vector<64x128xf32>
    %55 = arith.addf %46, %54 : vector<64x128xf32>
    %c2_i32 = arith.constant 2 : i32
    %56 = arith.addi %0, %c2_i32 : i32
    %c0_40 = arith.constant 0 : index
    %57 = arith.index_cast %56 : i32 to index
    %c0_41 = arith.constant 0 : index
    %c0_42 = arith.constant 0 : index
    %58 = vector.load %arg2[%c0_40, %57, %c0_41, %c0_42] : memref<1x10x10x128xbf16, #tpu.memory_space<vmem>>, vector<1x8x8x128xbf16>
    %59 = vector.shape_cast %58 : vector<1x8x8x128xbf16> to vector<8x8x128xbf16>
    %60 = vector.shape_cast %59 : vector<8x8x128xbf16> to vector<64x128xbf16>
    %c6 = arith.constant 6 : index
    %c0_43 = arith.constant 0 : index
    %c0_44 = arith.constant 0 : index
    %61 = vector.load %arg3[%c6, %c0_43, %c0_44] : memref<9x128x128xbf16, #tpu.memory_space<vmem>>, vector<1x128x128xbf16>
    %62 = vector.shape_cast %61 : vector<1x128x128xbf16> to vector<128x128xbf16>
    %cst_45 = arith.constant dense<0.000000e+00> : vector<64x128xf32>
    %63 = tpu.matmul %60, %62, %cst_45 {dimension_numbers = #tpu.dot_dimension_numbers<[1], [0], [0], [1], [0, 0, 1, 1], [], []>} : vector<64x128xbf16>, vector<128x128xbf16>, vector<64x128xf32> -> vector<64x128xf32>
    %64 = arith.addf %55, %63 : vector<64x128xf32>
    %c2_i32_46 = arith.constant 2 : i32
    %65 = arith.addi %0, %c2_i32_46 : i32
    %c0_47 = arith.constant 0 : index
    %66 = arith.index_cast %65 : i32 to index
    %c1_48 = arith.constant 1 : index
    %c0_49 = arith.constant 0 : index
    %67 = vector.load %arg2[%c0_47, %66, %c1_48, %c0_49] : memref<1x10x10x128xbf16, #tpu.memory_space<vmem>>, vector<1x8x8x128xbf16>
    %68 = vector.shape_cast %67 : vector<1x8x8x128xbf16> to vector<8x8x128xbf16>
    %69 = vector.shape_cast %68 : vector<8x8x128xbf16> to vector<64x128xbf16>
    %c7 = arith.constant 7 : index
    %c0_50 = arith.constant 0 : index
    %c0_51 = arith.constant 0 : index
    %70 = vector.load %arg3[%c7, %c0_50, %c0_51] : memref<9x128x128xbf16, #tpu.memory_space<vmem>>, vector<1x128x128xbf16>
    %71 = vector.shape_cast %70 : vector<1x128x128xbf16> to vector<128x128xbf16>
    %cst_52 = arith.constant dense<0.000000e+00> : vector<64x128xf32>
    %72 = tpu.matmul %69, %71, %cst_52 {dimension_numbers = #tpu.dot_dimension_numbers<[1], [0], [0], [1], [0, 0, 1, 1], [], []>} : vector<64x128xbf16>, vector<128x128xbf16>, vector<64x128xf32> -> vector<64x128xf32>
    %73 = arith.addf %64, %72 : vector<64x128xf32>
    %c2_i32_53 = arith.constant 2 : i32
    %74 = arith.addi %0, %c2_i32_53 : i32
    %c0_54 = arith.constant 0 : index
    %75 = arith.index_cast %74 : i32 to index
    %c2_55 = arith.constant 2 : index
    %c0_56 = arith.constant 0 : index
    %76 = vector.load %arg2[%c0_54, %75, %c2_55, %c0_56] : memref<1x10x10x128xbf16, #tpu.memory_space<vmem>>, vector<1x8x8x128xbf16>
    %77 = vector.shape_cast %76 : vector<1x8x8x128xbf16> to vector<8x8x128xbf16>
    %78 = vector.shape_cast %77 : vector<8x8x128xbf16> to vector<64x128xbf16>
    %c8 = arith.constant 8 : index
    %c0_57 = arith.constant 0 : index
    %c0_58 = arith.constant 0 : index
    %79 = vector.load %arg3[%c8, %c0_57, %c0_58] : memref<9x128x128xbf16, #tpu.memory_space<vmem>>, vector<1x128x128xbf16>
    %80 = vector.shape_cast %79 : vector<1x128x128xbf16> to vector<128x128xbf16>
    %cst_59 = arith.constant dense<0.000000e+00> : vector<64x128xf32>
    %81 = tpu.matmul %78, %80, %cst_59 {dimension_numbers = #tpu.dot_dimension_numbers<[1], [0], [0], [1], [0, 0, 1, 1], [], []>} : vector<64x128xbf16>, vector<128x128xbf16>, vector<64x128xf32> -> vector<64x128xf32>
    %82 = arith.addf %73, %81 : vector<64x128xf32>
    %c0_60 = arith.constant 0 : index
    %c0_61 = arith.constant 0 : index
    %c0_62 = arith.constant 0 : index
    %c0_63 = arith.constant 0 : index
    %83 = vector.load %arg4[%c0_60, %c0_61, %c0_62, %c0_63] : memref<1x1x64x128xf32, #tpu.memory_space<vmem>>, vector<1x1x64x128xf32>
    %84 = vector.shape_cast %83 : vector<1x1x64x128xf32> to vector<64x128xf32>
    %85 = vector.shape_cast %82 : vector<64x128xf32> to vector<1x1x64x128xf32>
    tpu.vector_store %arg4[%c0_60, %c0_61, %c0_62, %c0_63], %85 {strides = array<i32>} : memref<1x1x64x128xf32, #tpu.memory_space<vmem>>, vector<1x1x64x128xf32>,
    %cst_64 = arith.constant dense<0.000000e+00> : vector<128xf32>
    %86 = vector.multi_reduction <add>, %82, %cst_64 [0] : vector<64x128xf32> to vector<128xf32>
    %87 = vector.shape_cast %86 : vector<128xf32> to vector<1x128xf32>
    %c0_65 = arith.constant 0 : index
    %c0_66 = arith.constant 0 : index
    %c0_67 = arith.constant 0 : index
    %c0_68 = arith.constant 0 : index
    %88 = vector.load %arg5[%c0_65, %c0_66, %c0_67, %c0_68] : memref<1x1x2x128xf32, #tpu.memory_space<vmem>>, vector<1x1x1x128xf32>
    %89 = vector.shape_cast %88 : vector<1x1x1x128xf32> to vector<1x128xf32>
    %90 = vector.shape_cast %87 : vector<1x128xf32> to vector<1x1x1x128xf32>
    tpu.vector_store %arg5[%c0_65, %c0_66, %c0_67, %c0_68], %90 {strides = array<i32>} : memref<1x1x2x128xf32, #tpu.memory_space<vmem>>, vector<1x1x1x128xf32>,
    %91 = arith.mulf %82, %82 : vector<64x128xf32>
    %cst_69 = arith.constant dense<0.000000e+00> : vector<128xf32>
    %92 = vector.multi_reduction <add>, %91, %cst_69 [0] : vector<64x128xf32> to vector<128xf32>
    %93 = vector.shape_cast %92 : vector<128xf32> to vector<1x128xf32>
    %c0_70 = arith.constant 0 : index
    %c0_71 = arith.constant 0 : index
    %c1_72 = arith.constant 1 : index
    %c0_73 = arith.constant 0 : index
    %94 = vector.load %arg5[%c0_70, %c0_71, %c1_72, %c0_73] : memref<1x1x2x128xf32, #tpu.memory_space<vmem>>, vector<1x1x1x128xf32>
    %95 = vector.shape_cast %94 : vector<1x1x1x128xf32> to vector<1x128xf32>
    %96 = vector.shape_cast %93 : vector<1x128xf32> to vector<1x1x1x128xf32>
    tpu.vector_store %arg5[%c0_70, %c0_71, %c1_72, %c0_73], %96 {strides = array<i32>} : memref<1x1x2x128xf32, #tpu.memory_space<vmem>>, vector<1x1x1x128xf32>,
    return
  }
  func.func @transform_0(%arg0: i32, %arg1: i32) -> (i32, i32, i32, i32) {
    %c0_i32 = arith.constant 0 : i32
    %c0_i32_0 = arith.constant 0 : i32
    %c0_i32_1 = arith.constant 0 : i32
    %c0_i32_2 = arith.constant 0 : i32
    return %arg0, %c0_i32, %c0_i32_0, %c0_i32_1 : i32, i32, i32, i32
  }
  func.func @transform_1(%arg0: i32, %arg1: i32) -> (i32, i32, i32) {
    %c0_i32 = arith.constant 0 : i32
    %c0_i32_0 = arith.constant 0 : i32
    %c0_i32_1 = arith.constant 0 : i32
    %c0_i32_2 = arith.constant 0 : i32
    return %c0_i32, %c0_i32_0, %c0_i32_1 : i32, i32, i32
  }
  func.func @transform_2(%arg0: i32, %arg1: i32) -> (i32, i32, i32, i32) {
    %c0_i32 = arith.constant 0 : i32
    %c0_i32_0 = arith.constant 0 : i32
    %c0_i32_1 = arith.constant 0 : i32
    return %arg0, %arg1, %c0_i32, %c0_i32_0 : i32, i32, i32, i32
  }
  func.func @transform_3(%arg0: i32, %arg1: i32) -> (i32, i32, i32, i32) {
    %c0_i32 = arith.constant 0 : i32
    %c0_i32_0 = arith.constant 0 : i32
    %c0_i32_1 = arith.constant 0 : i32
    return %arg0, %arg1, %c0_i32, %c0_i32_0 : i32, i32, i32, i32
  }
}

</mosaic_0001>

<llo_original>
// kernel: basic_block_forward.11
$region0: #{basic_block_forward.11}
  #allocation0 [shape = 'u32[]', space=smem, size = 0x4, offset = 0x4, fixed_abs, tag = 'smem constant byte address 0x4 - core index']
  #allocation1 [shape = 'u32[144,128]{1,0:T(1,128)}', space=vmem, size = 0x12000, scoped, tag = 'internal scratch']
  %s0 = inlined_call_operand.vmem [shape: f32[2,1,64,128], index: 0, kind: input, shape index: {}]
  %s1 = inlined_call_operand.vmem [shape: f32[1,128], index: 1, kind: input, shape index: {}]
  %s2 = inlined_call_operand.vmem [shape: f32[1,128], index: 2, kind: input, shape index: {}]
  %s3 = inlined_call_operand.vmem [shape: f32[2,1,64,128], index: 3, kind: output, shape index: {}]
  %s4 = sld [smem:[#allocation0]]
  $region45: #{basic_block_forward.11} parent=0
    _
  %s6 = ssub.s32 1, %s4
  %s7 = scalar_select 0, %s6, %s4
  loop: start=0, step=1, limit=4
  $region2: #{basic_block_forward.11} parent=0 // loop_pre_header
    _
  $region3: #{basic_block_forward.11} parent=0 // loop_header
    %s9 = sphi 0, %s13
    %p10 = scmp.ge.s32.totalorder %s9, 4
    %s16 = sphi 0, %s28
    %s17 = sphi 0, %s24
    %s18 = sphi 0, %s16
    %s19 = sphi 0, %s17
    %s20 = sphi 0, %s18
    %s21 = sphi 0, %s19
    %s33 = sphi 0, %s35
    %s36 = sphi 0, %s33
    %s37 = sphi 0, %s36
    %s53 = sphi 0, %s37
    %s57 = sphi 0, %s57
    %s59 = sphi 0, %s57
    %s60 = sphi 0, %s59
    %s74 = sphi 0, %s60
    %s78 = sphi 0, %s78
    %s80 = sphi 0, %s78
    %s81 = sphi 0, %s80
    %s95 = sphi 0, %s81
    %s103 = sphi 0, %s105
    %s106 = sphi 0, %s103
    %s107 = sphi 0, %s106
    %s123 = sphi 0, %s107
  $region4: #{basic_block_forward.11} parent=0 // loop_header_branch
    %12 = sbr.rel (%p10) target = $region8
  $region5: #{basic_block_forward.11} parent=0 // loop_body
    %s14 = ssub.s32 %s9, 1
    %s15 = ssub.s32 %s9, 2
    %s22 = sadd.s32 1, %s17
    %p23 = scmp.ge.s32.totalorder %s22, 1
    %s24 = scalar_select %p23, 0, %s22
    %s25 = sadd.s32 1, %s16
    %s26 = scalar_select %p23, %s25, %s16
    %p27 = scmp.ge.s32.totalorder %s26, 2
    %s28 = scalar_select %p27, 0, %s26
    %s29 = ssub.s32 %s16, %s28
    %s30 = ssub.s32 %s17, %s24
    %s31 = sor.u32 %s29, %s30
    %p32 = scmp.eq.s32.totalorder %s31, 0
    %s34 = sadd.s32 %s33, 1
    %s35 = scalar_select %p32, %s33, %s34
    %p38 = pneg %p32
    %p39 = scmp.eq.s32.totalorder %s9, 1
    %p40 = por %p38, %p39
    %p41 = scmp.ne.s32.totalorder %s33, %s36
    %p42 = scmp.eq.s32.totalorder %s9, 0
    %p43 = por %p41, %p42
    %p44 = scmp.ne.s32.totalorder %s33, %s36
    %p45 = scmp.eq.s32.totalorder %s14, 1
    %p46 = por %p44, %p45
    %p47 = scmp.ne.s32.totalorder %s36, %s37
    %p48 = scmp.eq.s32.totalorder %s14, 0
    %p49 = por %p47, %p48
    %p50 = scmp.ne.s32.totalorder %s36, %s37
    %p51 = scmp.eq.s32.totalorder %s15, 1
    %p52 = por %p50, %p51
    %p54 = scmp.ne.s32.totalorder %s37, %s53
    %p55 = scmp.eq.s32.totalorder %s15, 0
    %p56 = por %p54, %p55
    %s58 = sadd.s32 %s57, 1
    %p61 = scmp.eq.s32.totalorder %s9, 1
    %p62 = scmp.ne.s32.totalorder %s57, %s59
    %p63 = scmp.eq.s32.totalorder %s9, 0
    %p64 = por %p62, %p63
    %p65 = scmp.ne.s32.totalorder %s57, %s59
    %p66 = scmp.eq.s32.totalorder %s14, 1
    %p67 = por %p65, %p66
    %p68 = scmp.ne.s32.totalorder %s59, %s60
    %p69 = scmp.eq.s32.totalorder %s14, 0
    %p70 = por %p68, %p69
    %p71 = scmp.ne.s32.totalorder %s59, %s60
    %p72 = scmp.eq.s32.totalorder %s15, 1
    %p73 = por %p71, %p72
    %p75 = scmp.ne.s32.totalorder %s60, %s74
    %p76 = scmp.eq.s32.totalorder %s15, 0
    %p77 = por %p75, %p76
    %s79 = sadd.s32 %s78, 1
    %p82 = scmp.eq.s32.totalorder %s9, 1
    %p83 = scmp.ne.s32.totalorder %s78, %s80
    %p84 = scmp.eq.s32.totalorder %s9, 0
    %p85 = por %p83, %p84
    %p86 = scmp.ne.s32.totalorder %s78, %s80
    %p87 = scmp.eq.s32.totalorder %s14, 1
    %p88 = por %p86, %p87
    %p89 = scmp.ne.s32.totalorder %s80, %s81
    %p90 = scmp.eq.s32.totalorder %s14, 0
    %p91 = por %p89, %p90
    %p92 = scmp.ne.s32.totalorder %s80, %s81
    %p93 = scmp.eq.s32.totalorder %s15, 1
    %p94 = por %p92, %p93
    %p96 = scmp.ne.s32.totalorder %s81, %s95
    %p97 = scmp.eq.s32.totalorder %s15, 0
    %p98 = por %p96, %p97
    %s99 = ssub.s32 %s16, %s28
    %s100 = ssub.s32 %s17, %s24
    %s101 = sor.u32 %s99, %s100
    %p102 = scmp.eq.s32.totalorder %s101, 0
    %s104 = sadd.s32 %s103, 1
    %s105 = scalar_select %p102, %s103, %s104
    %p108 = pneg %p102
    %p109 = scmp.eq.s32.totalorder %s9, 1
    %p110 = por %p108, %p109
    %p111 = scmp.ne.s32.totalorder %s103, %s106
    %p112 = scmp.eq.s32.totalorder %s9, 0
    %p113 = por %p111, %p112
    %p114 = scmp.ne.s32.totalorder %s103, %s106
    %p115 = scmp.eq.s32.totalorder %s14, 1
    %p116 = por %p114, %p115
    %p117 = scmp.ne.s32.totalorder %s106, %s107
    %p118 = scmp.eq.s32.totalorder %s14, 0
    %p119 = por %p117, %p118
    %p120 = scmp.ne.s32.totalorder %s106, %s107
    %p121 = scmp.eq.s32.totalorder %s15, 1
    %p122 = por %p120, %p121
    %p124 = scmp.ne.s32.totalorder %s107, %s123
    %p125 = scmp.eq.s32.totalorder %s15, 0
    %p126 = por %p124, %p125
    %p127 = scmp.le.s32.totalorder 1, %s9
    %p128 = scmp.lt.s32.totalorder %s9, 3
    %p129 = pnand %p127, %p128
    %p130 = pneg %p129
    // Predicated region
    $region9: #{basic_block_forward.11} parent=5 // pred_check
      _
    $region10: #{basic_block_forward.11} parent=5 // pred_check_branch
      %132 = sbr.rel (%p129) target = $region12
    $region11: #{basic_block_forward.11} parent=5 // pred_region
      %s133 = ssub.s32 %s9, 1
      // Predicated region
      $region13: #{basic_block_forward.11} parent=11 // pred_check
        %p134 = pneg %p70
      $region14: #{basic_block_forward.11} parent=11 // pred_check_branch
        %136 = sbr.rel (%p134) target = $region16
      $region15: #{basic_block_forward.11} parent=11 // pred_region
        _
      $region16: #{basic_block_forward.11} parent=11 // pred_fallthru
        _
      // Predicated region
      $region17: #{basic_block_forward.11} parent=11 // pred_check
        %p137 = pneg %p91
      $region18: #{basic_block_forward.11} parent=11 // pred_check_branch
        %139 = sbr.rel (%p137) target = $region20
      $region19: #{basic_block_forward.11} parent=11 // pred_region
        _
      $region20: #{basic_block_forward.11} parent=11 // pred_fallthru
        _
    $region12: #{basic_block_forward.11} parent=5 // pred_fallthru
      _
    %p140 = scmp.lt.s32.totalorder %s9, 2
    // Predicated region
    $region21: #{basic_block_forward.11} parent=5 // pred_check
      %p141 = pneg %p140
    $region22: #{basic_block_forward.11} parent=5 // pred_check_branch
      %143 = sbr.rel (%p141) target = $region24
    $region23: #{basic_block_forward.11} parent=5 // pred_region
      // Predicated region
      $region25: #{basic_block_forward.11} parent=23 // pred_check
        %p144 = pneg %p43
      $region26: #{basic_block_forward.11} parent=23 // pred_check_branch
        %146 = sbr.rel (%p144) target = $region28
      $region27: #{basic_block_forward.11} parent=23 // pred_region
        %p147 = scmp.lt.s32.totalorder %s16, 1
        %s148 = scalar_select %p147, %s16, 1
        %p149 = scmp.lt.s32.totalorder %s17, 0
        %s150 = scalar_select %p149, %s17, 0
        %s151 = smul.addr %s150, 8
        %s152 = smul.addr %s148, 8
        %s153 = sadd.s32 %s151, %s152
        %s154 = smul.addr %s153, 8
        %s155 = scalar_lea.vmem %s0, %s154
      $region28: #{basic_block_forward.11} parent=23 // pred_fallthru
        _
    $region24: #{basic_block_forward.11} parent=5 // pred_fallthru
      _
    %p156 = scmp.le.s32.totalorder 1, %s9
    %p157 = scmp.lt.s32.totalorder %s9, 3
    %p158 = pnand %p156, %p157
    %p159 = pneg %p158
    // Predicated region
    $region29: #{basic_block_forward.11} parent=5 // pred_check
      _
    $region30: #{basic_block_forward.11} parent=5 // pred_check_branch
      %161 = sbr.rel (%p158) target = $region32
    $region31: #{basic_block_forward.11} parent=5 // pred_region
      %s162 = ssub.s32 %s9, 1
      %p163 = scmp.lt.s32.totalorder %s18, 1
      %s164 = scalar_select %p163, %s18, 1
      %p165 = scmp.lt.s32.totalorder %s19, 0
      %s166 = scalar_select %p165, %s19, 0
      %s167 = smul.addr %s166, 8
      %s168 = smul.addr %s164, 8
      %s169 = sadd.s32 %s167, %s168
      %s170 = smul.addr %s169, 8
      %s171 = scalar_lea.vmem %s0, %s170
      %p172 = pneg %p49
      %p173 = pneg %p46
      %p174 = pneg %p70
      %p175 = pneg %p67
      %p176 = pneg %p91
      %p177 = pneg %p88
      %p178 = pneg %p119
      %p179 = pneg %p116
      %p180 = scmp.lt.s32.totalorder %s18, 1
      %s181 = scalar_select %p180, %s18, 1
      %p182 = scmp.lt.s32.totalorder %s19, 0
      %s183 = scalar_select %p182, %s19, 0
      %s184 = smul.addr %s183, 8
      %s185 = smul.addr %s181, 8
      %s186 = sadd.s32 %s184, %s185
      %s187 = smul.addr %s186, 8
      %s188 = scalar_lea.vmem %s3, %s187
      %p189 = scmp.lt.s32.totalorder %s18, 1
      %s190 = scalar_select %p189, %s18, 1
      %p191 = scmp.lt.s32.totalorder %s19, 0
      %s192 = scalar_select %p191, %s19, 0
      %s193 = smul.addr %s192, 8
      %s194 = smul.addr %s190, 8
      %s195 = sadd.s32 %s193, %s194
      %s196 = smul.addr %s195, 8
      %s197 = scalar_lea.vmem %s0, %s196
      %p198 = scmp.lt.s32.totalorder %s18, 1
      %s199 = scalar_select %p198, %s18, 1
      %p200 = scmp.lt.s32.totalorder %s19, 0
      %s201 = scalar_select %p200, %s19, 0
      %s202 = smul.addr %s201, 8
      %s203 = smul.addr %s199, 8
      %s204 = sadd.s32 %s202, %s203
      %s205 = smul.addr %s204, 8
      %s206 = scalar_lea.vmem %s3, %s205
      %v207 = vld [vmem:[%s197] sm:$0xff]
      %v208 = vld [vmem:[%s197 + $0x8] sm:$0xff]
      %v209 = vld [vmem:[%s197 + $0x10] sm:$0xff]
      %v210 = vld [vmem:[%s197 + $0x18] sm:$0xff]
      %v211 = vld [vmem:[%s197 + $0x20] sm:$0xff]
      %v212 = vld [vmem:[%s197 + $0x28] sm:$0xff]
      %v213 = vld [vmem:[%s197 + $0x30] sm:$0xff]
      %v214 = vld [vmem:[%s197 + $0x38] sm:$0xff]
      %v215 = vld [vmem:[%s1] sm:$0x1]
      %v217 = vlaneseq
      %v218 = vshrl.u32 %v217, 7
      %v219 = vsub.s32 0, %v218
      %v220 = vrot.slane %v215, %v219
      %v222 = vmul.f32 %v207, %v220
      %v223 = vmul.f32 %v208, %v220
      %v224 = vmul.f32 %v209, %v220
      %v225 = vmul.f32 %v210, %v220
      %v226 = vmul.f32 %v211, %v220
      %v227 = vmul.f32 %v212, %v220
      %v228 = vmul.f32 %v213, %v220
      %v229 = vmul.f32 %v214, %v220
      %v230 = vld [vmem:[%s2] sm:$0x1]
      %v232 = vlaneseq
      %v233 = vshrl.u32 %v232, 7
      %v234 = vsub.s32 0, %v233
      %v235 = vrot.slane %v230, %v234
      %v237 = vadd.f32 %v222, %v235
      %v238 = vadd.f32 %v223, %v235
      %v239 = vadd.f32 %v224, %v235
      %v240 = vadd.f32 %v225, %v235
      %v241 = vadd.f32 %v226, %v235
      %v242 = vadd.f32 %v227, %v235
      %v243 = vadd.f32 %v228, %v235
      %v244 = vadd.f32 %v229, %v235
      %245 = vst [vmem:[%s206] sm:$0xff] %v237
      %246 = vst [vmem:[%s206 + $0x8] sm:$0xff] %v238
      %247 = vst [vmem:[%s206 + $0x10] sm:$0xff] %v239
      %248 = vst [vmem:[%s206 + $0x18] sm:$0xff] %v240
      %249 = vst [vmem:[%s206 + $0x20] sm:$0xff] %v241
      %250 = vst [vmem:[%s206 + $0x28] sm:$0xff] %v242
      %251 = vst [vmem:[%s206 + $0x30] sm:$0xff] %v243
      %252 = vst [vmem:[%s206 + $0x38] sm:$0xff] %v244
      %p253 = scmp.lt.s32.totalorder %s18, 1
      %s254 = scalar_select %p253, %s18, 1
      %p255 = scmp.lt.s32.totalorder %s19, 0
      %s256 = scalar_select %p255, %s19, 0
      %s257 = smul.addr %s256, 8
      %s258 = smul.addr %s254, 8
      %s259 = sadd.s32 %s257, %s258
      %s260 = smul.addr %s259, 8
      %s261 = scalar_lea.vmem %s3, %s260
      // Predicated region
      $region33: #{basic_block_forward.11} parent=31 // pred_check
        %p262 = pneg %p116
      $region34: #{basic_block_forward.11} parent=31 // pred_check_branch
        %264 = sbr.rel (%p262) target = $region36
      $region35: #{basic_block_forward.11} parent=31 // pred_region
        _
      $region36: #{basic_block_forward.11} parent=31 // pred_fallthru
        _
    $region32: #{basic_block_forward.11} parent=5 // pred_fallthru
      _
    %p265 = scmp.le.s32.totalorder 2, %s9
    // Predicated region
    $region37: #{basic_block_forward.11} parent=5 // pred_check
      %p266 = pneg %p265
    $region38: #{basic_block_forward.11} parent=5 // pred_check_branch
      %268 = sbr.rel (%p266) target = $region40
    $region39: #{basic_block_forward.11} parent=5 // pred_region
      %s269 = ssub.s32 %s9, 2
      // Predicated region
      $region41: #{basic_block_forward.11} parent=39 // pred_check
        %p270 = pneg %p122
      $region42: #{basic_block_forward.11} parent=39 // pred_check_branch
        %272 = sbr.rel (%p270) target = $region44
      $region43: #{basic_block_forward.11} parent=39 // pred_region
        %p273 = scmp.lt.s32.totalorder %s20, 1
        %s274 = scalar_select %p273, %s20, 1
        %p275 = scmp.lt.s32.totalorder %s21, 0
        %s276 = scalar_select %p275, %s21, 0
        %s277 = smul.addr %s276, 8
        %s278 = smul.addr %s274, 8
        %s279 = sadd.s32 %s277, %s278
        %s280 = smul.addr %s279, 8
        %s281 = scalar_lea.vmem %s3, %s280
      $region44: #{basic_block_forward.11} parent=39 // pred_fallthru
        _
    $region40: #{basic_block_forward.11} parent=5 // pred_fallthru
      _
  $region6: #{basic_block_forward.11} parent=0 // loop_footer
    %s13 = sadd.s32 1, %s9
  $region7: #{basic_block_forward.11} parent=0 // loop_footer_branch
    %8 = sbr.rel target = $region3
  $region8: #{basic_block_forward.11} parent=0 // loop_exit
    _

// kernel: basic_block_forward.10
$region0: #{basic_block_forward.10}
  #allocation0 [shape = 'u32[]', space=smem, size = 0x4, offset = 0x4, fixed_abs, tag = 'smem constant byte address 0x4 - core index']
  #allocation1 [shape = 'u32[144,128]{1,0:T(1,128)}', space=vmem, size = 0x12000, scoped, tag = 'internal scratch']
  %s0 = inlined_call_operand.vmem [shape: bf16[2,8,8,4], index: 0, kind: input, shape index: {}]
  %s1 = inlined_call_operand.vmem [shape: bf16[1,4,128], index: 1, kind: input, shape index: {}]
  %s2 = inlined_call_operand.vmem [shape: f32[2,1,64,128], index: 2, kind: output, shape index: {0}]
  %s3 = inlined_call_operand.vmem [shape: f32[2,1,2,128], index: 3, kind: output, shape index: {1}]
  %4 = xla_tuple %s2, %s3
  %s5 = sld [smem:[#allocation0]]
  $region49: #{basic_block_forward.10} parent=0
    _
  %s7 = ssub.s32 1, %s5
  %s8 = scalar_select 0, %s7, %s5
  loop: start=0, step=1, limit=4
  $region2: #{basic_block_forward.10} parent=0 // loop_pre_header
    _
  $region3: #{basic_block_forward.10} parent=0 // loop_header
    %s10 = sphi 0, %s14
    %p11 = scmp.ge.s32.totalorder %s10, 4
    %s17 = sphi 0, %s29
    %s18 = sphi 0, %s25
    %s19 = sphi 0, %s17
    %s20 = sphi 0, %s18
    %s21 = sphi 0, %s19
    %s22 = sphi 0, %s20
    %s32 = sphi 0, %s34
    %s35 = sphi 0, %s32
    %s36 = sphi 0, %s35
    %s52 = sphi 0, %s36
    %s56 = sphi 0, %s56
    %s58 = sphi 0, %s56
    %s59 = sphi 0, %s58
    %s73 = sphi 0, %s59
    %s81 = sphi 0, %s83
    %s84 = sphi 0, %s81
    %s85 = sphi 0, %s84
    %s101 = sphi 0, %s85
    %s109 = sphi 0, %s111
    %s112 = sphi 0, %s109
    %s113 = sphi 0, %s112
    %s129 = sphi 0, %s113
  $region4: #{basic_block_forward.10} parent=0 // loop_header_branch
    %13 = sbr.rel (%p11) target = $region8
  $region5: #{basic_block_forward.10} parent=0 // loop_body
    %s15 = ssub.s32 %s10, 1
    %s16 = ssub.s32 %s10, 2
    %s23 = sadd.s32 1, %s18
    %p24 = scmp.ge.s32.totalorder %s23, 1
    %s25 = scalar_select %p24, 0, %s23
    %s26 = sadd.s32 1, %s17
    %s27 = scalar_select %p24, %s26, %s17
    %p28 = scmp.ge.s32.totalorder %s27, 2
    %s29 = scalar_select %p28, 0, %s27
    %s30 = ssub.s32 %s17, %s29
    %p31 = scmp.eq.s32.totalorder %s30, 0
    %s33 = sadd.s32 %s32, 1
    %s34 = scalar_select %p31, %s32, %s33
    %p37 = pneg %p31
    %p38 = scmp.eq.s32.totalorder %s10, 1
    %p39 = por %p37, %p38
    %p40 = scmp.ne.s32.totalorder %s32, %s35
    %p41 = scmp.eq.s32.totalorder %s10, 0
    %p42 = por %p40, %p41
    %p43 = scmp.ne.s32.totalorder %s32, %s35
    %p44 = scmp.eq.s32.totalorder %s15, 1
    %p45 = por %p43, %p44
    %p46 = scmp.ne.s32.totalorder %s35, %s36
    %p47 = scmp.eq.s32.totalorder %s15, 0
    %p48 = por %p46, %p47
    %p49 = scmp.ne.s32.totalorder %s35, %s36
    %p50 = scmp.eq.s32.totalorder %s16, 1
    %p51 = por %p49, %p50
    %p53 = scmp.ne.s32.totalorder %s36, %s52
    %p54 = scmp.eq.s32.totalorder %s16, 0
    %p55 = por %p53, %p54
    %s57 = sadd.s32 %s56, 1
    %p60 = scmp.eq.s32.totalorder %s10, 1
    %p61 = scmp.ne.s32.totalorder %s56, %s58
    %p62 = scmp.eq.s32.totalorder %s10, 0
    %p63 = por %p61, %p62
    %p64 = scmp.ne.s32.totalorder %s56, %s58
    %p65 = scmp.eq.s32.totalorder %s15, 1
    %p66 = por %p64, %p65
    %p67 = scmp.ne.s32.totalorder %s58, %s59
    %p68 = scmp.eq.s32.totalorder %s15, 0
    %p69 = por %p67, %p68
    %p70 = scmp.ne.s32.totalorder %s58, %s59
    %p71 = scmp.eq.s32.totalorder %s16, 1
    %p72 = por %p70, %p71
    %p74 = scmp.ne.s32.totalorder %s59, %s73
    %p75 = scmp.eq.s32.totalorder %s16, 0
    %p76 = por %p74, %p75
    %s77 = ssub.s32 %s17, %s29
    %s78 = ssub.s32 %s18, %s25
    %s79 = sor.u32 %s77, %s78
    %p80 = scmp.eq.s32.totalorder %s79, 0
    %s82 = sadd.s32 %s81, 1
    %s83 = scalar_select %p80, %s81, %s82
    %p86 = pneg %p80
    %p87 = scmp.eq.s32.totalorder %s10, 1
    %p88 = por %p86, %p87
    %p89 = scmp.ne.s32.totalorder %s81, %s84
    %p90 = scmp.eq.s32.totalorder %s10, 0
    %p91 = por %p89, %p90
    %p92 = scmp.ne.s32.totalorder %s81, %s84
    %p93 = scmp.eq.s32.totalorder %s15, 1
    %p94 = por %p92, %p93
    %p95 = scmp.ne.s32.totalorder %s84, %s85
    %p96 = scmp.eq.s32.totalorder %s15, 0
    %p97 = por %p95, %p96
    %p98 = scmp.ne.s32.totalorder %s84, %s85
    %p99 = scmp.eq.s32.totalorder %s16, 1
    %p100 = por %p98, %p99
    %p102 = scmp.ne.s32.totalorder %s85, %s101
    %p103 = scmp.eq.s32.totalorder %s16, 0
    %p104 = por %p102, %p103
    %s105 = ssub.s32 %s17, %s29
    %s106 = ssub.s32 %s18, %s25
    %s107 = sor.u32 %s105, %s106
    %p108 = scmp.eq.s32.totalorder %s107, 0
    %s110 = sadd.s32 %s109, 1
    %s111 = scalar_select %p108, %s109, %s110
    %p114 = pneg %p108
    %p115 = scmp.eq.s32.totalorder %s10, 1
    %p116 = por %p114, %p115
    %p117 = scmp.ne.s32.totalorder %s109, %s112
    %p118 = scmp.eq.s32.totalorder %s10, 0
    %p119 = por %p117, %p118
    %p120 = scmp.ne.s32.totalorder %s109, %s112
    %p121 = scmp.eq.s32.totalorder %s15, 1
    %p122 = por %p120, %p121
    %p123 = scmp.ne.s32.totalorder %s112, %s113
    %p124 = scmp.eq.s32.totalorder %s15, 0
    %p125 = por %p123, %p124
    %p126 = scmp.ne.s32.totalorder %s112, %s113
    %p127 = scmp.eq.s32.totalorder %s16, 1
    %p128 = por %p126, %p127
    %p130 = scmp.ne.s32.totalorder %s113, %s129
    %p131 = scmp.eq.s32.totalorder %s16, 0
    %p132 = por %p130, %p131
    %p133 = scmp.le.s32.totalorder 1, %s10
    %p134 = scmp.lt.s32.totalorder %s10, 3
    %p135 = pnand %p133, %p134
    %p136 = pneg %p135
    // Predicated region
    $region9: #{basic_block_forward.10} parent=5 // pred_check
      _
    $region10: #{basic_block_forward.10} parent=5 // pred_check_branch
      %138 = sbr.rel (%p135) target = $region12
    $region11: #{basic_block_forward.10} parent=5 // pred_region
      %s139 = ssub.s32 %s10, 1
      // Predicated region
      $region13: #{basic_block_forward.10} parent=11 // pred_check
        %p140 = pneg %p69
      $region14: #{basic_block_forward.10} parent=11 // pred_check_branch
        %142 = sbr.rel (%p140) target = $region16
      $region15: #{basic_block_forward.10} parent=11 // pred_region
        _
      $region16: #{basic_block_forward.10} parent=11 // pred_fallthru
        _
    $region12: #{basic_block_forward.10} parent=5 // pred_fallthru
      _
    %p143 = scmp.lt.s32.totalorder %s10, 2
    // Predicated region
    $region17: #{basic_block_forward.10} parent=5 // pred_check
      %p144 = pneg %p143
    $region18: #{basic_block_forward.10} parent=5 // pred_check_branch
      %146 = sbr.rel (%p144) target = $region20
    $region19: #{basic_block_forward.10} parent=5 // pred_region
      // Predicated region
      $region21: #{basic_block_forward.10} parent=19 // pred_check
        %p147 = pneg %p42
      $region22: #{basic_block_forward.10} parent=19 // pred_check_branch
        %149 = sbr.rel (%p147) target = $region24
      $region23: #{basic_block_forward.10} parent=19 // pred_region
        %p150 = scmp.lt.s32.totalorder %s17, 1
        %s151 = scalar_select %p150, %s17, 1
        %s152 = smul.addr %s151, 8
        %s153 = smul.addr %s152, 4
        %s154 = scalar_lea.vmem %s0, %s153
      $region24: #{basic_block_forward.10} parent=19 // pred_fallthru
        _
    $region20: #{basic_block_forward.10} parent=5 // pred_fallthru
      _
    %p155 = scmp.le.s32.totalorder 1, %s10
    %p156 = scmp.lt.s32.totalorder %s10, 3
    %p157 = pnand %p155, %p156
    %p158 = pneg %p157
    // Predicated region
    $region25: #{basic_block_forward.10} parent=5 // pred_check
      _
    $region26: #{basic_block_forward.10} parent=5 // pred_check_branch
      %160 = sbr.rel (%p157) target = $region28
    $region27: #{basic_block_forward.10} parent=5 // pred_region
      %s161 = ssub.s32 %s10, 1
      %p162 = scmp.lt.s32.totalorder %s19, 1
      %s163 = scalar_select %p162, %s19, 1
      %s164 = smul.addr %s163, 8
      %s165 = smul.addr %s164, 4
      %s166 = scalar_lea.vmem %s0, %s165
      %p167 = pneg %p48
      %p168 = pneg %p45
      %p169 = pneg %p69
      %p170 = pneg %p66
      %p171 = pneg %p97
      %p172 = pneg %p94
      %p173 = scmp.lt.s32.totalorder %s19, 1
      %s174 = scalar_select %p173, %s19, 1
      %p175 = scmp.lt.s32.totalorder %s20, 0
      %s176 = scalar_select %p175, %s20, 0
      %s177 = smul.addr %s176, 8
      %s178 = smul.addr %s174, 8
      %s179 = sadd.s32 %s177, %s178
      %s180 = smul.addr %s179, 8
      %s181 = scalar_lea.vmem %s2, %s180
      %p182 = pneg %p125
      %p183 = pneg %p122
      %p184 = scmp.lt.s32.totalorder %s19, 1
      %s185 = scalar_select %p184, %s19, 1
      %p186 = scmp.lt.s32.totalorder %s20, 0
      %s187 = scalar_select %p186, %s20, 0
      %s188 = sadd.s32 %s187, %s185
      %s189 = smul.addr %s188, 2
      %s190 = scalar_lea.vmem %s3, %s189
      %p191 = scmp.lt.s32.totalorder %s19, 1
      %s192 = scalar_select %p191, %s19, 1
      %s193 = smul.addr %s192, 8
      %s194 = smul.addr %s193, 4
      %s195 = scalar_lea.vmem %s0, %s194
      %p196 = scmp.lt.s32.totalorder %s19, 1
      %s197 = scalar_select %p196, %s19, 1
      %p198 = scmp.lt.s32.totalorder %s20, 0
      %s199 = scalar_select %p198, %s20, 0
      %s200 = smul.addr %s199, 8
      %s201 = smul.addr %s197, 8
      %s202 = sadd.s32 %s200, %s201
      %s203 = smul.addr %s202, 8
      %s204 = scalar_lea.vmem %s2, %s203
      %p205 = scmp.lt.s32.totalorder %s19, 1
      %s206 = scalar_select %p205, %s19, 1
      %p207 = scmp.lt.s32.totalorder %s20, 0
      %s208 = scalar_select %p207, %s20, 0
      %s209 = sadd.s32 %s208, %s206
      %s210 = smul.addr %s209, 2
      %s211 = scalar_lea.vmem %s3, %s210
      %s213 = smul.u32 %s20, 8
      %s214 = smul.addr %s213, 4
      %s215 = scalar_lea.vmem %s195, %s214
      %v216 = vld [vmem:[%s215] sm:$0xf]
      %v217 = vld [vmem:[%s215 + $0x4] sm:$0xf]
      %v218 = vld [vmem:[%s215 + $0x8] sm:$0xf]
      %v219 = vld [vmem:[%s215 + $0xc] sm:$0xf]
      %v220 = vld [vmem:[%s215 + $0x10] sm:$0xf]
      %v221 = vld [vmem:[%s215 + $0x14] sm:$0xf]
      %v222 = vld [vmem:[%s215 + $0x18] sm:$0xf]
      %v223 = vld [vmem:[%s215 + $0x1c] sm:$0xf]
      %v224 = vld [vmem:[%s1] sm:$0x3]
      %v233 = vunpack.c.l.b16 %v216
      %v234 = vunpack.c.l.b16 %v217
      %v235 = vunpack.c.l.b16 %v218
      %v236 = vunpack.c.l.b16 %v219
      %v237 = vunpack.c.l.b16 %v220
      %v238 = vunpack.c.l.b16 %v221
      %v239 = vunpack.c.l.b16 %v222
      %v240 = vunpack.c.l.b16 %v223
      %v241 = vpack.c.b16 %v234, %v233
      %v242 = vpack.c.b16 %v236, %v235
      %v243 = vpack.c.b16 %v238, %v237
      %v244 = vpack.c.b16 %v240, %v239
      %vm245 = vcmask 31744
      %v247 = vsel %vm245, %v241, 0
      %v250 = vsel %vm245, %v242, 0
      %v253 = vsel %vm245, %v243, 0
      %v256 = vsel %vm245, %v244, 0
      %vm258 = vcmask 1041408
      %v260 = vsel %vm258, %v224, 0
      %262 = vmatprep.subr.bf16.mxu0 0
      %263 = vmatpush1.bf16.msra.mxu0 0
      %264 = vmatprep.subr.bf16.mxu0 0
      %265 = vmatpush1.bf16.msra.mxu0 0
      %266 = vmatprep.subr.bf16.mxu0 0
      %267 = vmatpush1.bf16.msra.mxu0 0
      %268 = vmatprep.subr.bf16.mxu0 0
      %269 = vmatpush1.bf16.msra.mxu0 0
      %270 = vmatprep.subr.bf16.mxu0 0
      %271 = vmatpush1.bf16.msra.mxu0 0
      %272 = vmatprep.subr.bf16.mxu0 0
      %273 = vmatpush1.bf16.msra.mxu0 0
      %274 = vmatprep.subr.bf16.mxu0 0
      %275 = vmatpush1.bf16.msra.mxu0 0
      %276 = vmatprep.subr.bf16.mxu0 0
      %277 = vmatpush1.bf16.msra.mxu0 %v260
      %278 = vmatprep.subr.bf16.mxu0 0
      %279 = vmatpush2.bf16.msra.mxu0 0
      %280 = vmatprep.subr.bf16.mxu0 0
      %281 = vmatpush2.bf16.msra.mxu0 0
      %282 = vmatprep.subr.bf16.mxu0 0
      %283 = vmatpush2.bf16.msra.mxu0 0
      %284 = vmatprep.subr.bf16.mxu0 0
      %285 = vmatpush2.bf16.msra.mxu0 0
      %286 = vmatprep.subr.bf16.mxu0 0
      %287 = vmatpush2.bf16.msra.mxu0 0
      %288 = vmatprep.subr.bf16.mxu0 0
      %289 = vmatpush2.bf16.msra.mxu0 0
      %290 = vmatprep.subr.bf16.mxu0 0
      %291 = vmatpush2.bf16.msra.mxu0 0
      %292 = vmatprep.subr.bf16.mxu0 0
      %293 = vmatpush2.bf16.msra.mxu0 0
      %294 = vmatprep.mubr.bf16.mxu0 0
      %295 = vmatmul.mubr.bf16.gmra.mxu0 %v247
      %v296 = vpop.f32.mrf.mxu0
      %v297 = vadd.f32 0.0, %v296
      %v298 = vpop.f32.mrf.mxu0
      %v299 = vpop.f32.mrf.mxu0
      %v300 = vadd.f32 0.0, %v299
      %v301 = vpop.f32.mrf.mxu0
      %302 = vmatprep.mubr.bf16.mxu0 0
      %303 = vmatmul.mubr.bf16.gmra.mxu0 %v250
      %v304 = vpop.f32.mrf.mxu0
      %v305 = vadd.f32 0.0, %v304
      %v306 = vpop.f32.mrf.mxu0
      %v307 = vpop.f32.mrf.mxu0
      %v308 = vadd.f32 0.0, %v307
      %v309 = vpop.f32.mrf.mxu0
      %310 = vmatprep.mubr.bf16.mxu0 0
      %311 = vmatmul.mubr.bf16.gmra.mxu0 %v253
      %v312 = vpop.f32.mrf.mxu0
      %v313 = vadd.f32 0.0, %v312
      %v314 = vpop.f32.mrf.mxu0
      %v315 = vpop.f32.mrf.mxu0
      %v316 = vadd.f32 0.0, %v315
      %v317 = vpop.f32.mrf.mxu0
      %318 = vmatprep.mubr.bf16.mxu0 0
      %319 = vmatmul.mubr.bf16.gmra.mxu0 %v256
      %v320 = vpop.f32.mrf.mxu0
      %v321 = vadd.f32 0.0, %v320
      %v322 = vpop.f32.mrf.mxu0
      %v323 = vpop.f32.mrf.mxu0
      %v324 = vadd.f32 0.0, %v323
      %v325 = vpop.f32.mrf.mxu0
      %326 = vdwg.mxu0
      %327 = vst [vmem:[%s204] sm:$0xff] %v297
      %328 = vst [vmem:[%s204 + $0x8] sm:$0xff] %v300
      %329 = vst [vmem:[%s204 + $0x10] sm:$0xff] %v305
      %330 = vst [vmem:[%s204 + $0x18] sm:$0xff] %v308
      %331 = vst [vmem:[%s204 + $0x20] sm:$0xff] %v313
      %332 = vst [vmem:[%s204 + $0x28] sm:$0xff] %v316
      %333 = vst [vmem:[%s204 + $0x30] sm:$0xff] %v321
      %334 = vst [vmem:[%s204 + $0x38] sm:$0xff] %v324
      %v335 = vadd.f32 %v297, %v300
      %v336 = vadd.f32 %v335, %v305
      %v337 = vadd.f32 %v336, %v308
      %v338 = vadd.f32 %v337, %v313
      %v339 = vadd.f32 %v338, %v316
      %v340 = vadd.f32 %v339, %v321
      %v341 = vadd.f32 %v340, %v324
      %v342 = vrot.slane %v341, 4
      %v343 = vadd.f32 %v341, %v342
      %v344 = vrot.slane %v343, 2
      %v345 = vadd.f32 %v343, %v344
      %v346 = vrot.slane %v345, 1
      %v347 = vadd.f32 %v345, %v346
      %348 = vst [vmem:[%s211] sm:$0x1] %v347
      %v349 = vmul.f32 %v297, %v297
      %v350 = vmul.f32 %v300, %v300
      %v351 = vmul.f32 %v305, %v305
      %v352 = vmul.f32 %v308, %v308
      %v353 = vmul.f32 %v313, %v313
      %v354 = vmul.f32 %v316, %v316
      %v355 = vmul.f32 %v321, %v321
      %v356 = vmul.f32 %v324, %v324
      %v357 = vadd.f32 %v349, %v350
      %v358 = vadd.f32 %v357, %v351
      %v359 = vadd.f32 %v358, %v352
      %v360 = vadd.f32 %v359, %v353
      %v361 = vadd.f32 %v360, %v354
      %v362 = vadd.f32 %v361, %v355
      %v363 = vadd.f32 %v362, %v356
      %v364 = vrot.slane %v363, 4
      %v365 = vadd.f32 %v363, %v364
      %v366 = vrot.slane %v365, 2
      %v367 = vadd.f32 %v365, %v366
      %v368 = vrot.slane %v367, 1
      %v369 = vadd.f32 %v367, %v368
      %370 = vst [vmem:[%s211 + $0x1] sm:$0x1] %v369
      %p371 = scmp.lt.s32.totalorder %s19, 1
      %s372 = scalar_select %p371, %s19, 1
      %p373 = scmp.lt.s32.totalorder %s20, 0
      %s374 = scalar_select %p373, %s20, 0
      %s375 = smul.addr %s374, 8
      %s376 = smul.addr %s372, 8
      %s377 = sadd.s32 %s375, %s376
      %s378 = smul.addr %s377, 8
      %s379 = scalar_lea.vmem %s2, %s378
      %p380 = scmp.lt.s32.totalorder %s19, 1
      %s381 = scalar_select %p380, %s19, 1
      %p382 = scmp.lt.s32.totalorder %s20, 0
      %s383 = scalar_select %p382, %s20, 0
      %s384 = sadd.s32 %s383, %s381
      %s385 = smul.addr %s384, 2
      %s386 = scalar_lea.vmem %s3, %s385
      // Predicated region
      $region29: #{basic_block_forward.10} parent=27 // pred_check
        %p387 = pneg %p94
      $region30: #{basic_block_forward.10} parent=27 // pred_check_branch
        %389 = sbr.rel (%p387) target = $region32
      $region31: #{basic_block_forward.10} parent=27 // pred_region
        _
      $region32: #{basic_block_forward.10} parent=27 // pred_fallthru
        _
      // Predicated region
      $region33: #{basic_block_forward.10} parent=27 // pred_check
        %p390 = pneg %p122
      $region34: #{basic_block_forward.10} parent=27 // pred_check_branch
        %392 = sbr.rel (%p390) target = $region36
      $region35: #{basic_block_forward.10} parent=27 // pred_region
        _
      $region36: #{basic_block_forward.10} parent=27 // pred_fallthru
        _
    $region28: #{basic_block_forward.10} parent=5 // pred_fallthru
      _
    %p393 = scmp.le.s32.totalorder 2, %s10
    // Predicated region
    $region37: #{basic_block_forward.10} parent=5 // pred_check
      %p394 = pneg %p393
    $region38: #{basic_block_forward.10} parent=5 // pred_check_branch
      %396 = sbr.rel (%p394) target = $region40
    $region39: #{basic_block_forward.10} parent=5 // pred_region
      %s397 = ssub.s32 %s10, 2
      // Predicated region
      $region41: #{basic_block_forward.10} parent=39 // pred_check
        %p398 = pneg %p100
      $region42: #{basic_block_forward.10} parent=39 // pred_check_branch
        %400 = sbr.rel (%p398) target = $region44
      $region43: #{basic_block_forward.10} parent=39 // pred_region
        %p401 = scmp.lt.s32.totalorder %s21, 1
        %s402 = scalar_select %p401, %s21, 1
        %p403 = scmp.lt.s32.totalorder %s22, 0
        %s404 = scalar_select %p403, %s22, 0
        %s405 = smul.addr %s404, 8
        %s406 = smul.addr %s402, 8
        %s407 = sadd.s32 %s405, %s406
        %s408 = smul.addr %s407, 8
        %s409 = scalar_lea.vmem %s2, %s408
      $region44: #{basic_block_forward.10} parent=39 // pred_fallthru
        _
      // Predicated region
      $region45: #{basic_block_forward.10} parent=39 // pred_check
        %p410 = pneg %p128
      $region46: #{basic_block_forward.10} parent=39 // pred_check_branch
        %412 = sbr.rel (%p410) target = $region48
      $region47: #{basic_block_forward.10} parent=39 // pred_region
        %p413 = scmp.lt.s32.totalorder %s21, 1
        %s414 = scalar_select %p413, %s21, 1
        %p415 = scmp.lt.s32.totalorder %s22, 0
        %s416 = scalar_select %p415, %s22, 0
        %s417 = sadd.s32 %s416, %s414
        %s418 = smul.addr %s417, 2
        %s419 = scalar_lea.vmem %s3, %s418
      $region48: #{basic_block_forward.10} parent=39 // pred_fallthru
        _
    $region40: #{basic_block_forward.10} parent=5 // pred_fallthru
      _
  $region6: #{basic_block_forward.10} parent=0 // loop_footer
    %s14 = sadd.s32 1, %s10
  $region7: #{basic_block_forward.10} parent=0 // loop_footer_branch
    %9 = sbr.rel target = $region3
  $region8: #{basic_block_forward.10} parent=0 // loop_exit
    _

// kernel: basic_block_forward.7
$region0: #{basic_block_forward.7}
  #allocation0 [shape = 'u32[]', space=smem, size = 0x4, offset = 0x4, fixed_abs, tag = 'smem constant byte address 0x4 - core index']
  #allocation1 [shape = 'u32[144,128]{1,0:T(1,128)}', space=vmem, size = 0x12000, scoped, tag = 'internal scratch']
  %s0 = inlined_call_operand.vmem [shape: f32[2,1,64,128], index: 0, kind: input, shape index: {}]
  %s1 = inlined_call_operand.vmem [shape: f32[1,128], index: 1, kind: input, shape index: {}]
  %s2 = inlined_call_operand.vmem [shape: f32[1,128], index: 2, kind: input, shape index: {}]
  %s3 = inlined_call_operand.vmem [shape: bf16[2,1,64,128], index: 3, kind: output, shape index: {}]
  %s4 = sld [smem:[#allocation0]]
  $region45: #{basic_block_forward.7} parent=0
    _
  %s6 = ssub.s32 1, %s4
  %s7 = scalar_select 0, %s6, %s4
  loop: start=0, step=1, limit=4
  $region2: #{basic_block_forward.7} parent=0 // loop_pre_header
    _
  $region3: #{basic_block_forward.7} parent=0 // loop_header
    %s9 = sphi 0, %s13
    %p10 = scmp.ge.s32.totalorder %s9, 4
    %s16 = sphi 0, %s28
    %s17 = sphi 0, %s24
    %s18 = sphi 0, %s16
    %s19 = sphi 0, %s17
    %s20 = sphi 0, %s18
    %s21 = sphi 0, %s19
    %s33 = sphi 0, %s35
    %s36 = sphi 0, %s33
    %s37 = sphi 0, %s36
    %s53 = sphi 0, %s37
    %s57 = sphi 0, %s57
    %s59 = sphi 0, %s57
    %s60 = sphi 0, %s59
    %s74 = sphi 0, %s60
    %s78 = sphi 0, %s78
    %s80 = sphi 0, %s78
    %s81 = sphi 0, %s80
    %s95 = sphi 0, %s81
    %s103 = sphi 0, %s105
    %s106 = sphi 0, %s103
    %s107 = sphi 0, %s106
    %s123 = sphi 0, %s107
  $region4: #{basic_block_forward.7} parent=0 // loop_header_branch
    %12 = sbr.rel (%p10) target = $region8
  $region5: #{basic_block_forward.7} parent=0 // loop_body
    %s14 = ssub.s32 %s9, 1
    %s15 = ssub.s32 %s9, 2
    %s22 = sadd.s32 1, %s17
    %p23 = scmp.ge.s32.totalorder %s22, 1
    %s24 = scalar_select %p23, 0, %s22
    %s25 = sadd.s32 1, %s16
    %s26 = scalar_select %p23, %s25, %s16
    %p27 = scmp.ge.s32.totalorder %s26, 2
    %s28 = scalar_select %p27, 0, %s26
    %s29 = ssub.s32 %s16, %s28
    %s30 = ssub.s32 %s17, %s24
    %s31 = sor.u32 %s29, %s30
    %p32 = scmp.eq.s32.totalorder %s31, 0
    %s34 = sadd.s32 %s33, 1
    %s35 = scalar_select %p32, %s33, %s34
    %p38 = pneg %p32
    %p39 = scmp.eq.s32.totalorder %s9, 1
    %p40 = por %p38, %p39
    %p41 = scmp.ne.s32.totalorder %s33, %s36
    %p42 = scmp.eq.s32.totalorder %s9, 0
    %p43 = por %p41, %p42
    %p44 = scmp.ne.s32.totalorder %s33, %s36
    %p45 = scmp.eq.s32.totalorder %s14, 1
    %p46 = por %p44, %p45
    %p47 = scmp.ne.s32.totalorder %s36, %s37
    %p48 = scmp.eq.s32.totalorder %s14, 0
    %p49 = por %p47, %p48
    %p50 = scmp.ne.s32.totalorder %s36, %s37
    %p51 = scmp.eq.s32.totalorder %s15, 1
    %p52 = por %p50, %p51
    %p54 = scmp.ne.s32.totalorder %s37, %s53
    %p55 = scmp.eq.s32.totalorder %s15, 0
    %p56 = por %p54, %p55
    %s58 = sadd.s32 %s57, 1
    %p61 = scmp.eq.s32.totalorder %s9, 1
    %p62 = scmp.ne.s32.totalorder %s57, %s59
    %p63 = scmp.eq.s32.totalorder %s9, 0
    %p64 = por %p62, %p63
    %p65 = scmp.ne.s32.totalorder %s57, %s59
    %p66 = scmp.eq.s32.totalorder %s14, 1
    %p67 = por %p65, %p66
    %p68 = scmp.ne.s32.totalorder %s59, %s60
    %p69 = scmp.eq.s32.totalorder %s14, 0
    %p70 = por %p68, %p69
    %p71 = scmp.ne.s32.totalorder %s59, %s60
    %p72 = scmp.eq.s32.totalorder %s15, 1
    %p73 = por %p71, %p72
    %p75 = scmp.ne.s32.totalorder %s60, %s74
    %p76 = scmp.eq.s32.totalorder %s15, 0
    %p77 = por %p75, %p76
    %s79 = sadd.s32 %s78, 1
    %p82 = scmp.eq.s32.totalorder %s9, 1
    %p83 = scmp.ne.s32.totalorder %s78, %s80
    %p84 = scmp.eq.s32.totalorder %s9, 0
    %p85 = por %p83, %p84
    %p86 = scmp.ne.s32.totalorder %s78, %s80
    %p87 = scmp.eq.s32.totalorder %s14, 1
    %p88 = por %p86, %p87
    %p89 = scmp.ne.s32.totalorder %s80, %s81
    %p90 = scmp.eq.s32.totalorder %s14, 0
    %p91 = por %p89, %p90
    %p92 = scmp.ne.s32.totalorder %s80, %s81
    %p93 = scmp.eq.s32.totalorder %s15, 1
    %p94 = por %p92, %p93
    %p96 = scmp.ne.s32.totalorder %s81, %s95
    %p97 = scmp.eq.s32.totalorder %s15, 0
    %p98 = por %p96, %p97
    %s99 = ssub.s32 %s16, %s28
    %s100 = ssub.s32 %s17, %s24
    %s101 = sor.u32 %s99, %s100
    %p102 = scmp.eq.s32.totalorder %s101, 0
    %s104 = sadd.s32 %s103, 1
    %s105 = scalar_select %p102, %s103, %s104
    %p108 = pneg %p102
    %p109 = scmp.eq.s32.totalorder %s9, 1
    %p110 = por %p108, %p109
    %p111 = scmp.ne.s32.totalorder %s103, %s106
    %p112 = scmp.eq.s32.totalorder %s9, 0
    %p113 = por %p111, %p112
    %p114 = scmp.ne.s32.totalorder %s103, %s106
    %p115 = scmp.eq.s32.totalorder %s14, 1
    %p116 = por %p114, %p115
    %p117 = scmp.ne.s32.totalorder %s106, %s107
    %p118 = scmp.eq.s32.totalorder %s14, 0
    %p119 = por %p117, %p118
    %p120 = scmp.ne.s32.totalorder %s106, %s107
    %p121 = scmp.eq.s32.totalorder %s15, 1
    %p122 = por %p120, %p121
    %p124 = scmp.ne.s32.totalorder %s107, %s123
    %p125 = scmp.eq.s32.totalorder %s15, 0
    %p126 = por %p124, %p125
    %p127 = scmp.le.s32.totalorder 1, %s9
    %p128 = scmp.lt.s32.totalorder %s9, 3
    %p129 = pnand %p127, %p128
    %p130 = pneg %p129
    // Predicated region
    $region9: #{basic_block_forward.7} parent=5 // pred_check
      _
    $region10: #{basic_block_forward.7} parent=5 // pred_check_branch
      %132 = sbr.rel (%p129) target = $region12
    $region11: #{basic_block_forward.7} parent=5 // pred_region
      %s133 = ssub.s32 %s9, 1
      // Predicated region
      $region13: #{basic_block_forward.7} parent=11 // pred_check
        %p134 = pneg %p70
      $region14: #{basic_block_forward.7} parent=11 // pred_check_branch
        %136 = sbr.rel (%p134) target = $region16
      $region15: #{basic_block_forward.7} parent=11 // pred_region
        _
      $region16: #{basic_block_forward.7} parent=11 // pred_fallthru
        _
      // Predicated region
      $region17: #{basic_block_forward.7} parent=11 // pred_check
        %p137 = pneg %p91
      $region18: #{basic_block_forward.7} parent=11 // pred_check_branch
        %139 = sbr.rel (%p137) target = $region20
      $region19: #{basic_block_forward.7} parent=11 // pred_region
        _
      $region20: #{basic_block_forward.7} parent=11 // pred_fallthru
        _
    $region12: #{basic_block_forward.7} parent=5 // pred_fallthru
      _
    %p140 = scmp.lt.s32.totalorder %s9, 2
    // Predicated region
    $region21: #{basic_block_forward.7} parent=5 // pred_check
      %p141 = pneg %p140
    $region22: #{basic_block_forward.7} parent=5 // pred_check_branch
      %143 = sbr.rel (%p141) target = $region24
    $region23: #{basic_block_forward.7} parent=5 // pred_region
      // Predicated region
      $region25: #{basic_block_forward.7} parent=23 // pred_check
        %p144 = pneg %p43
      $region26: #{basic_block_forward.7} parent=23 // pred_check_branch
        %146 = sbr.rel (%p144) target = $region28
      $region27: #{basic_block_forward.7} parent=23 // pred_region
        %p147 = scmp.lt.s32.totalorder %s16, 1
        %s148 = scalar_select %p147, %s16, 1
        %p149 = scmp.lt.s32.totalorder %s17, 0
        %s150 = scalar_select %p149, %s17, 0
        %s151 = smul.addr %s150, 8
        %s152 = smul.addr %s148, 8
        %s153 = sadd.s32 %s151, %s152
        %s154 = smul.addr %s153, 8
        %s155 = scalar_lea.vmem %s0, %s154
      $region28: #{basic_block_forward.7} parent=23 // pred_fallthru
        _
    $region24: #{basic_block_forward.7} parent=5 // pred_fallthru
      _
    %p156 = scmp.le.s32.totalorder 1, %s9
    %p157 = scmp.lt.s32.totalorder %s9, 3
    %p158 = pnand %p156, %p157
    %p159 = pneg %p158
    // Predicated region
    $region29: #{basic_block_forward.7} parent=5 // pred_check
      _
    $region30: #{basic_block_forward.7} parent=5 // pred_check_branch
      %161 = sbr.rel (%p158) target = $region32
    $region31: #{basic_block_forward.7} parent=5 // pred_region
      %s162 = ssub.s32 %s9, 1
      %p163 = scmp.lt.s32.totalorder %s18, 1
      %s164 = scalar_select %p163, %s18, 1
      %p165 = scmp.lt.s32.totalorder %s19, 0
      %s166 = scalar_select %p165, %s19, 0
      %s167 = smul.addr %s166, 8
      %s168 = smul.addr %s164, 8
      %s169 = sadd.s32 %s167, %s168
      %s170 = smul.addr %s169, 8
      %s171 = scalar_lea.vmem %s0, %s170
      %p172 = pneg %p49
      %p173 = pneg %p46
      %p174 = pneg %p70
      %p175 = pneg %p67
      %p176 = pneg %p91
      %p177 = pneg %p88
      %p178 = pneg %p119
      %p179 = pneg %p116
      %p180 = scmp.lt.s32.totalorder %s18, 1
      %s181 = scalar_select %p180, %s18, 1
      %p182 = scmp.lt.s32.totalorder %s19, 0
      %s183 = scalar_select %p182, %s19, 0
      %s184 = smul.addr %s183, 8
      %s185 = smul.addr %s181, 8
      %s186 = sadd.s32 %s184, %s185
      %s187 = smul.addr %s186, 4
      %s188 = scalar_lea.vmem %s3, %s187
      %p189 = scmp.lt.s32.totalorder %s18, 1
      %s190 = scalar_select %p189, %s18, 1
      %p191 = scmp.lt.s32.totalorder %s19, 0
      %s192 = scalar_select %p191, %s19, 0
      %s193 = smul.addr %s192, 8
      %s194 = smul.addr %s190, 8
      %s195 = sadd.s32 %s193, %s194
      %s196 = smul.addr %s195, 8
      %s197 = scalar_lea.vmem %s0, %s196
      %p198 = scmp.lt.s32.totalorder %s18, 1
      %s199 = scalar_select %p198, %s18, 1
      %p200 = scmp.lt.s32.totalorder %s19, 0
      %s201 = scalar_select %p200, %s19, 0
      %s202 = smul.addr %s201, 8
      %s203 = smul.addr %s199, 8
      %s204 = sadd.s32 %s202, %s203
      %s205 = smul.addr %s204, 4
      %s206 = scalar_lea.vmem %s3, %s205
      %v207 = vld [vmem:[%s197] sm:$0xff]
      %v208 = vld [vmem:[%s197 + $0x8] sm:$0xff]
      %v209 = vld [vmem:[%s197 + $0x10] sm:$0xff]
      %v210 = vld [vmem:[%s197 + $0x18] sm:$0xff]
      %v211 = vld [vmem:[%s197 + $0x20] sm:$0xff]
      %v212 = vld [vmem:[%s197 + $0x28] sm:$0xff]
      %v213 = vld [vmem:[%s197 + $0x30] sm:$0xff]
      %v214 = vld [vmem:[%s197 + $0x38] sm:$0xff]
      %v215 = vld [vmem:[%s1] sm:$0x1]
      %v217 = vlaneseq
      %v218 = vshrl.u32 %v217, 7
      %v219 = vsub.s32 0, %v218
      %v220 = vrot.slane %v215, %v219
      %v222 = vmul.f32 %v207, %v220
      %v223 = vmul.f32 %v208, %v220
      %v224 = vmul.f32 %v209, %v220
      %v225 = vmul.f32 %v210, %v220
      %v226 = vmul.f32 %v211, %v220
      %v227 = vmul.f32 %v212, %v220
      %v228 = vmul.f32 %v213, %v220
      %v229 = vmul.f32 %v214, %v220
      %v230 = vld [vmem:[%s2] sm:$0x1]
      %v232 = vlaneseq
      %v233 = vshrl.u32 %v232, 7
      %v234 = vsub.s32 0, %v233
      %v235 = vrot.slane %v230, %v234
      %v237 = vadd.f32 %v222, %v235
      %v238 = vadd.f32 %v223, %v235
      %v239 = vadd.f32 %v224, %v235
      %v240 = vadd.f32 %v225, %v235
      %v241 = vadd.f32 %v226, %v235
      %v242 = vadd.f32 %v227, %v235
      %v243 = vadd.f32 %v228, %v235
      %v244 = vadd.f32 %v229, %v235
      %v245 = vmax.f32 %v237, 0.0
      %v246 = vmax.f32 %v238, 0.0
      %v247 = vmax.f32 %v239, 0.0
      %v248 = vmax.f32 %v240, 0.0
      %v249 = vmax.f32 %v241, 0.0
      %v250 = vmax.f32 %v242, 0.0
      %v251 = vmax.f32 %v243, 0.0
      %v252 = vmax.f32 %v244, 0.0
      %v253 = vpack.c.bf16 %v246, %v245
      %v254 = vpack.c.bf16 %v248, %v247
      %v255 = vpack.c.bf16 %v250, %v249
      %v256 = vpack.c.bf16 %v252, %v251
      %v261 = vunpack.c.l.b16 %v253
      %v262 = vunpack.c.h.b16 %v253
      %v263 = vunpack.c.l.b16 %v254
      %v264 = vunpack.c.h.b16 %v254
      %v265 = vunpack.c.l.b16 %v255
      %v266 = vunpack.c.h.b16 %v255
      %v267 = vunpack.c.l.b16 %v256
      %v268 = vunpack.c.h.b16 %v256
      %v269 = vpack.c.b16 %v261, %v261
      %v270 = vpack.c.b16 %v262, %v262
      %v271 = vpack.c.b16 %v263, %v263
      %v272 = vpack.c.b16 %v264, %v264
      %v273 = vpack.c.b16 %v265, %v265
      %v274 = vpack.c.b16 %v266, %v266
      %v275 = vpack.c.b16 %v267, %v267
      %v276 = vpack.c.b16 %v268, %v268
      %285 = vst [vmem:[%s206] sm:$0xf] %v269
      %286 = vst [vmem:[%s206 + $0x4] sm:$0xf] %v270
      %287 = vst [vmem:[%s206 + $0x8] sm:$0xf] %v271
      %288 = vst [vmem:[%s206 + $0xc] sm:$0xf] %v272
      %289 = vst [vmem:[%s206 + $0x10] sm:$0xf] %v273
      %290 = vst [vmem:[%s206 + $0x14] sm:$0xf] %v274
      %291 = vst [vmem:[%s206 + $0x18] sm:$0xf] %v275
      %292 = vst [vmem:[%s206 + $0x1c] sm:$0xf] %v276
      %p293 = scmp.lt.s32.totalorder %s18, 1
      %s294 = scalar_select %p293, %s18, 1
      %p295 = scmp.lt.s32.totalorder %s19, 0
      %s296 = scalar_select %p295, %s19, 0
      %s297 = smul.addr %s296, 8
      %s298 = smul.addr %s294, 8
      %s299 = sadd.s32 %s297, %s298
      %s300 = smul.addr %s299, 4
      %s301 = scalar_lea.vmem %s3, %s300
      // Predicated region
      $region33: #{basic_block_forward.7} parent=31 // pred_check
        %p302 = pneg %p116
      $region34: #{basic_block_forward.7} parent=31 // pred_check_branch
        %304 = sbr.rel (%p302) target = $region36
      $region35: #{basic_block_forward.7} parent=31 // pred_region
        _
      $region36: #{basic_block_forward.7} parent=31 // pred_fallthru
        _
    $region32: #{basic_block_forward.7} parent=5 // pred_fallthru
      _
    %p305 = scmp.le.s32.totalorder 2, %s9
    // Predicated region
    $region37: #{basic_block_forward.7} parent=5 // pred_check
      %p306 = pneg %p305
    $region38: #{basic_block_forward.7} parent=5 // pred_check_branch
      %308 = sbr.rel (%p306) target = $region40
    $region39: #{basic_block_forward.7} parent=5 // pred_region
      %s309 = ssub.s32 %s9, 2
      // Predicated region
      $region41: #{basic_block_forward.7} parent=39 // pred_check
        %p310 = pneg %p122
      $region42: #{basic_block_forward.7} parent=39 // pred_check_branch
        %312 = sbr.rel (%p310) target = $region44
      $region43: #{basic_block_forward.7} parent=39 // pred_region
        %p313 = scmp.lt.s32.totalorder %s20, 1
        %s314 = scalar_select %p313, %s20, 1
        %p315 = scmp.lt.s32.totalorder %s21, 0
        %s316 = scalar_select %p315, %s21, 0
        %s317 = smul.addr %s316, 8
        %s318 = smul.addr %s314, 8
        %s319 = sadd.s32 %s317, %s318
        %s320 = smul.addr %s319, 4
        %s321 = scalar_lea.vmem %s3, %s320
      $region44: #{basic_block_forward.7} parent=39 // pred_fallthru
        _
    $region40: #{basic_block_forward.7} parent=5 // pred_fallthru
      _
  $region6: #{basic_block_forward.7} parent=0 // loop_footer
    %s13 = sadd.s32 1, %s9
  $region7: #{basic_block_forward.7} parent=0 // loop_footer_branch
    %8 = sbr.rel target = $region3
  $region8: #{basic_block_forward.7} parent=0 // loop_exit
    _

// kernel: basic_block_forward.6
$region0: #{basic_block_forward.6}
  #allocation0 [shape = 'u32[]', space=smem, size = 0x4, offset = 0x4, fixed_abs, tag = 'smem constant byte address 0x4 - core index']
  #allocation1 [shape = 'u32[144,128]{1,0:T(1,128)}', space=vmem, size = 0x12000, scoped, tag = 'internal scratch']
  %s0 = inlined_call_operand.vmem [shape: bf16[8,9,9,4], index: 0, kind: input, shape index: {}]
  %s1 = inlined_call_operand.vmem [shape: bf16[9,4,128], index: 1, kind: input, shape index: {}]
  %s2 = inlined_call_operand.vmem [shape: f32[2,1,64,128], index: 2, kind: output, shape index: {0}]
  %s3 = inlined_call_operand.vmem [shape: f32[2,1,2,128], index: 3, kind: output, shape index: {1}]
  %4 = xla_tuple %s2, %s3
  %s5 = sld [smem:[#allocation0]]
  $region49: #{basic_block_forward.6} parent=0
    _
  %s7 = ssub.s32 1, %s5
  %s8 = scalar_select 0, %s7, %s5
  loop: start=0, step=1, limit=4
  $region2: #{basic_block_forward.6} parent=0 // loop_pre_header
    _
  $region3: #{basic_block_forward.6} parent=0 // loop_header
    %s10 = sphi 0, %s14
    %p11 = scmp.ge.s32.totalorder %s10, 4
    %s17 = sphi 0, %s29
    %s18 = sphi 0, %s25
    %s19 = sphi 0, %s17
    %s20 = sphi 0, %s18
    %s21 = sphi 0, %s19
    %s22 = sphi 0, %s20
    %s32 = sphi 0, %s34
    %s35 = sphi 0, %s32
    %s36 = sphi 0, %s35
    %s52 = sphi 0, %s36
    %s56 = sphi 0, %s56
    %s58 = sphi 0, %s56
    %s59 = sphi 0, %s58
    %s73 = sphi 0, %s59
    %s81 = sphi 0, %s83
    %s84 = sphi 0, %s81
    %s85 = sphi 0, %s84
    %s101 = sphi 0, %s85
    %s109 = sphi 0, %s111
    %s112 = sphi 0, %s109
    %s113 = sphi 0, %s112
    %s129 = sphi 0, %s113
  $region4: #{basic_block_forward.6} parent=0 // loop_header_branch
    %13 = sbr.rel (%p11) target = $region8
  $region5: #{basic_block_forward.6} parent=0 // loop_body
    %s15 = ssub.s32 %s10, 1
    %s16 = ssub.s32 %s10, 2
    %s23 = sadd.s32 1, %s18
    %p24 = scmp.ge.s32.totalorder %s23, 1
    %s25 = scalar_select %p24, 0, %s23
    %s26 = sadd.s32 1, %s17
    %s27 = scalar_select %p24, %s26, %s17
    %p28 = scmp.ge.s32.totalorder %s27, 2
    %s29 = scalar_select %p28, 0, %s27
    %s30 = ssub.s32 %s17, %s29
    %p31 = scmp.eq.s32.totalorder %s30, 0
    %s33 = sadd.s32 %s32, 1
    %s34 = scalar_select %p31, %s32, %s33
    %p37 = pneg %p31
    %p38 = scmp.eq.s32.totalorder %s10, 1
    %p39 = por %p37, %p38
    %p40 = scmp.ne.s32.totalorder %s32, %s35
    %p41 = scmp.eq.s32.totalorder %s10, 0
    %p42 = por %p40, %p41
    %p43 = scmp.ne.s32.totalorder %s32, %s35
    %p44 = scmp.eq.s32.totalorder %s15, 1
    %p45 = por %p43, %p44
    %p46 = scmp.ne.s32.totalorder %s35, %s36
    %p47 = scmp.eq.s32.totalorder %s15, 0
    %p48 = por %p46, %p47
    %p49 = scmp.ne.s32.totalorder %s35, %s36
    %p50 = scmp.eq.s32.totalorder %s16, 1
    %p51 = por %p49, %p50
    %p53 = scmp.ne.s32.totalorder %s36, %s52
    %p54 = scmp.eq.s32.totalorder %s16, 0
    %p55 = por %p53, %p54
    %s57 = sadd.s32 %s56, 1
    %p60 = scmp.eq.s32.totalorder %s10, 1
    %p61 = scmp.ne.s32.totalorder %s56, %s58
    %p62 = scmp.eq.s32.totalorder %s10, 0
    %p63 = por %p61, %p62
    %p64 = scmp.ne.s32.totalorder %s56, %s58
    %p65 = scmp.eq.s32.totalorder %s15, 1
    %p66 = por %p64, %p65
    %p67 = scmp.ne.s32.totalorder %s58, %s59
    %p68 = scmp.eq.s32.totalorder %s15, 0
    %p69 = por %p67, %p68
    %p70 = scmp.ne.s32.totalorder %s58, %s59
    %p71 = scmp.eq.s32.totalorder %s16, 1
    %p72 = por %p70, %p71
    %p74 = scmp.ne.s32.totalorder %s59, %s73
    %p75 = scmp.eq.s32.totalorder %s16, 0
    %p76 = por %p74, %p75
    %s77 = ssub.s32 %s17, %s29
    %s78 = ssub.s32 %s18, %s25
    %s79 = sor.u32 %s77, %s78
    %p80 = scmp.eq.s32.totalorder %s79, 0
    %s82 = sadd.s32 %s81, 1
    %s83 = scalar_select %p80, %s81, %s82
    %p86 = pneg %p80
    %p87 = scmp.eq.s32.totalorder %s10, 1
    %p88 = por %p86, %p87
    %p89 = scmp.ne.s32.totalorder %s81, %s84
    %p90 = scmp.eq.s32.totalorder %s10, 0
    %p91 = por %p89, %p90
    %p92 = scmp.ne.s32.totalorder %s81, %s84
    %p93 = scmp.eq.s32.totalorder %s15, 1
    %p94 = por %p92, %p93
    %p95 = scmp.ne.s32.totalorder %s84, %s85
    %p96 = scmp.eq.s32.totalorder %s15, 0
    %p97 = por %p95, %p96
    %p98 = scmp.ne.s32.totalorder %s84, %s85
    %p99 = scmp.eq.s32.totalorder %s16, 1
    %p100 = por %p98, %p99
    %p102 = scmp.ne.s32.totalorder %s85, %s101
    %p103 = scmp.eq.s32.totalorder %s16, 0
    %p104 = por %p102, %p103
    %s105 = ssub.s32 %s17, %s29
    %s106 = ssub.s32 %s18, %s25
    %s107 = sor.u32 %s105, %s106
    %p108 = scmp.eq.s32.totalorder %s107, 0
    %s110 = sadd.s32 %s109, 1
    %s111 = scalar_select %p108, %s109, %s110
    %p114 = pneg %p108
    %p115 = scmp.eq.s32.totalorder %s10, 1
    %p116 = por %p114, %p115
    %p117 = scmp.ne.s32.totalorder %s109, %s112
    %p118 = scmp.eq.s32.totalorder %s10, 0
    %p119 = por %p117, %p118
    %p120 = scmp.ne.s32.totalorder %s109, %s112
    %p121 = scmp.eq.s32.totalorder %s15, 1
    %p122 = por %p120, %p121
    %p123 = scmp.ne.s32.totalorder %s112, %s113
    %p124 = scmp.eq.s32.totalorder %s15, 0
    %p125 = por %p123, %p124
    %p126 = scmp.ne.s32.totalorder %s112, %s113
    %p127 = scmp.eq.s32.totalorder %s16, 1
    %p128 = por %p126, %p127
    %p130 = scmp.ne.s32.totalorder %s113, %s129
    %p131 = scmp.eq.s32.totalorder %s16, 0
    %p132 = por %p130, %p131
    %p133 = scmp.le.s32.totalorder 1, %s10
    %p134 = scmp.lt.s32.totalorder %s10, 3
    %p135 = pnand %p133, %p134
    %p136 = pneg %p135
    // Predicated region
    $region9: #{basic_block_forward.6} parent=5 // pred_check
      _
    $region10: #{basic_block_forward.6} parent=5 // pred_check_branch
      %138 = sbr.rel (%p135) target = $region12
    $region11: #{basic_block_forward.6} parent=5 // pred_region
      %s139 = ssub.s32 %s10, 1
      // Predicated region
      $region13: #{basic_block_forward.6} parent=11 // pred_check
        %p140 = pneg %p69
      $region14: #{basic_block_forward.6} parent=11 // pred_check_branch
        %142 = sbr.rel (%p140) target = $region16
      $region15: #{basic_block_forward.6} parent=11 // pred_region
        _
      $region16: #{basic_block_forward.6} parent=11 // pred_fallthru
        _
    $region12: #{basic_block_forward.6} parent=5 // pred_fallthru
      _
    %p143 = scmp.lt.s32.totalorder %s10, 2
    // Predicated region
    $region17: #{basic_block_forward.6} parent=5 // pred_check
      %p144 = pneg %p143
    $region18: #{basic_block_forward.6} parent=5 // pred_check_branch
      %146 = sbr.rel (%p144) target = $region20
    $region19: #{basic_block_forward.6} parent=5 // pred_region
      // Predicated region
      $region21: #{basic_block_forward.6} parent=19 // pred_check
        %p147 = pneg %p42
      $region22: #{basic_block_forward.6} parent=19 // pred_check_branch
        %149 = sbr.rel (%p147) target = $region24
      $region23: #{basic_block_forward.6} parent=19 // pred_region
        %s150 = smul.u32 4, %s17
        %p151 = scmp.lt.s32.totalorder %s150, 7
        %s152 = scalar_select %p151, %s150, 7
        %s153 = smul.addr %s152, 18
        %s154 = smul.addr %s153, 4
        %s155 = scalar_lea.vmem %s0, %s154
        %s156 = smul.u32 4, %s17
      $region24: #{basic_block_forward.6} parent=19 // pred_fallthru
        _
    $region20: #{basic_block_forward.6} parent=5 // pred_fallthru
      _
    %p157 = scmp.le.s32.totalorder 1, %s10
    %p158 = scmp.lt.s32.totalorder %s10, 3
    %p159 = pnand %p157, %p158
    %p160 = pneg %p159
    // Predicated region
    $region25: #{basic_block_forward.6} parent=5 // pred_check
      _
    $region26: #{basic_block_forward.6} parent=5 // pred_check_branch
      %162 = sbr.rel (%p159) target = $region28
    $region27: #{basic_block_forward.6} parent=5 // pred_region
      %s163 = ssub.s32 %s10, 1
      %s164 = smul.u32 4, %s19
      %p165 = scmp.lt.s32.totalorder %s164, 7
      %s166 = scalar_select %p165, %s164, 7
      %s167 = smul.addr %s166, 18
      %s168 = smul.addr %s167, 4
      %s169 = scalar_lea.vmem %s0, %s168
      %p170 = pneg %p48
      %p171 = pneg %p45
      %p172 = pneg %p69
      %p173 = pneg %p66
      %p174 = pneg %p97
      %p175 = pneg %p94
      %p176 = scmp.lt.s32.totalorder %s19, 1
      %s177 = scalar_select %p176, %s19, 1
      %p178 = scmp.lt.s32.totalorder %s20, 0
      %s179 = scalar_select %p178, %s20, 0
      %s180 = smul.addr %s179, 8
      %s181 = smul.addr %s177, 8
      %s182 = sadd.s32 %s180, %s181
      %s183 = smul.addr %s182, 8
      %s184 = scalar_lea.vmem %s2, %s183
      %p185 = pneg %p125
      %p186 = pneg %p122
      %p187 = scmp.lt.s32.totalorder %s19, 1
      %s188 = scalar_select %p187, %s19, 1
      %p189 = scmp.lt.s32.totalorder %s20, 0
      %s190 = scalar_select %p189, %s20, 0
      %s191 = sadd.s32 %s190, %s188
      %s192 = smul.addr %s191, 2
      %s193 = scalar_lea.vmem %s3, %s192
      %s194 = smul.u32 4, %s19
      %p195 = scmp.lt.s32.totalorder %s194, 7
      %s196 = scalar_select %p195, %s194, 7
      %s197 = smul.addr %s196, 18
      %s198 = smul.addr %s197, 4
      %s199 = scalar_lea.vmem %s0, %s198
      %s200 = smul.u32 4, %s19
      %p201 = scmp.lt.s32.totalorder %s19, 1
      %s202 = scalar_select %p201, %s19, 1
      %p203 = scmp.lt.s32.totalorder %s20, 0
      %s204 = scalar_select %p203, %s20, 0
      %s205 = smul.addr %s204, 8
      %s206 = smul.addr %s202, 8
      %s207 = sadd.s32 %s205, %s206
      %s208 = smul.addr %s207, 8
      %s209 = scalar_lea.vmem %s2, %s208
      %p210 = scmp.lt.s32.totalorder %s19, 1
      %s211 = scalar_select %p210, %s19, 1
      %p212 = scmp.lt.s32.totalorder %s20, 0
      %s213 = scalar_select %p212, %s20, 0
      %s214 = sadd.s32 %s213, %s211
      %s215 = smul.addr %s214, 2
      %s216 = scalar_lea.vmem %s3, %s215
      %s218 = smul.u32 %s20, 8
      %s219 = smul.u32 %s218, 2
      %s220 = smul.addr %s219, 4
      %s221 = scalar_lea.vmem %s199, %s220
      %v222 = vld [vmem:[%s221] sm:$0xf]
      %v223 = vld [vmem:[%s221 + $0x8] sm:$0xf]
      %v224 = vld [vmem:[%s221 + $0x10] sm:$0xf]
      %v225 = vld [vmem:[%s221 + $0x18] sm:$0xf]
      %v226 = vld [vmem:[%s221 + $0x20] sm:$0xf]
      %v227 = vld [vmem:[%s221 + $0x28] sm:$0xf]
      %v228 = vld [vmem:[%s221 + $0x30] sm:$0xf]
      %v229 = vld [vmem:[%s221 + $0x38] sm:$0xf]
      %v230 = vld [vmem:[%s1] sm:$0x3]
      %s231 = sadd.s32 %s219, 18
      %s232 = smul.addr %s231, 4
      %s233 = scalar_lea.vmem %s199, %s232
      %v234 = vld [vmem:[%s233] sm:$0xf]
      %v235 = vld [vmem:[%s233 + $0x8] sm:$0xf]
      %v236 = vld [vmem:[%s233 + $0x10] sm:$0xf]
      %v237 = vld [vmem:[%s233 + $0x18] sm:$0xf]
      %v238 = vld [vmem:[%s233 + $0x20] sm:$0xf]
      %v239 = vld [vmem:[%s233 + $0x28] sm:$0xf]
      %v240 = vld [vmem:[%s233 + $0x30] sm:$0xf]
      %v241 = vld [vmem:[%s233 + $0x38] sm:$0xf]
      %s242 = scalar_lea.vmem %s1, 2
      %v243 = vld [vmem:[%s242] sm:$0x3]
      %v252 = vunpack.c.l.b16 %v234
      %v253 = vunpack.c.l.b16 %v235
      %v254 = vunpack.c.l.b16 %v236
      %v255 = vunpack.c.l.b16 %v237
      %v256 = vunpack.c.l.b16 %v238
      %v257 = vunpack.c.l.b16 %v239
      %v258 = vunpack.c.l.b16 %v240
      %v259 = vunpack.c.l.b16 %v241
      %v260 = vpack.c.b16 %v253, %v252
      %v261 = vpack.c.b16 %v255, %v254
      %v262 = vpack.c.b16 %v257, %v256
      %v263 = vpack.c.b16 %v259, %v258
      %vm264 = vcmask 31744
      %v266 = vsel %vm264, %v260, 0
      %v269 = vsel %vm264, %v261, 0
      %v272 = vsel %vm264, %v262, 0
      %v275 = vsel %vm264, %v263, 0
      %vm277 = vcmask 1041408
      %v279 = vsel %vm277, %v243, 0
      %281 = vmatprep.subr.bf16.mxu0 0
      %282 = vmatpush1.bf16.msra.mxu0 0
      %283 = vmatprep.subr.bf16.mxu0 0
      %284 = vmatpush1.bf16.msra.mxu0 0
      %285 = vmatprep.subr.bf16.mxu0 0
      %286 = vmatpush1.bf16.msra.mxu0 0
      %287 = vmatprep.subr.bf16.mxu0 0
      %288 = vmatpush1.bf16.msra.mxu0 0
      %289 = vmatprep.subr.bf16.mxu0 0
      %290 = vmatpush1.bf16.msra.mxu0 0
      %291 = vmatprep.subr.bf16.mxu0 0
      %292 = vmatpush1.bf16.msra.mxu0 0
      %293 = vmatprep.subr.bf16.mxu0 0
      %294 = vmatpush1.bf16.msra.mxu0 0
      %295 = vmatprep.subr.bf16.mxu0 0
      %296 = vmatpush1.bf16.msra.mxu0 %v279
      %297 = vmatprep.subr.bf16.mxu0 0
      %298 = vmatpush2.bf16.msra.mxu0 0
      %299 = vmatprep.subr.bf16.mxu0 0
      %300 = vmatpush2.bf16.msra.mxu0 0
      %301 = vmatprep.subr.bf16.mxu0 0
      %302 = vmatpush2.bf16.msra.mxu0 0
      %303 = vmatprep.subr.bf16.mxu0 0
      %304 = vmatpush2.bf16.msra.mxu0 0
      %305 = vmatprep.subr.bf16.mxu0 0
      %306 = vmatpush2.bf16.msra.mxu0 0
      %307 = vmatprep.subr.bf16.mxu0 0
      %308 = vmatpush2.bf16.msra.mxu0 0
      %309 = vmatprep.subr.bf16.mxu0 0
      %310 = vmatpush2.bf16.msra.mxu0 0
      %311 = vmatprep.subr.bf16.mxu0 0
      %312 = vmatpush2.bf16.msra.mxu0 0
      %313 = vmatprep.mubr.bf16.mxu0 0
      %314 = vmatmul.mubr.bf16.gmra.mxu0 %v266
      %v315 = vpop.f32.mrf.mxu0
      %v316 = vadd.f32 0.0, %v315
      %v317 = vpop.f32.mrf.mxu0
      %v318 = vpop.f32.mrf.mxu0
      %v319 = vadd.f32 0.0, %v318
      %v320 = vpop.f32.mrf.mxu0
      %321 = vmatprep.mubr.bf16.mxu0 0
      %322 = vmatmul.mubr.bf16.gmra.mxu0 %v269
      %v323 = vpop.f32.mrf.mxu0
      %v324 = vadd.f32 0.0, %v323
      %v325 = vpop.f32.mrf.mxu0
      %v326 = vpop.f32.mrf.mxu0
      %v327 = vadd.f32 0.0, %v326
      %v328 = vpop.f32.mrf.mxu0
      %329 = vmatprep.mubr.bf16.mxu0 0
      %330 = vmatmul.mubr.bf16.gmra.mxu0 %v272
      %v331 = vpop.f32.mrf.mxu0
      %v332 = vadd.f32 0.0, %v331
      %v333 = vpop.f32.mrf.mxu0
      %v334 = vpop.f32.mrf.mxu0
      %v335 = vadd.f32 0.0, %v334
      %v336 = vpop.f32.mrf.mxu0
      %337 = vmatprep.mubr.bf16.mxu0 0
      %338 = vmatmul.mubr.bf16.gmra.mxu0 %v275
      %v339 = vpop.f32.mrf.mxu0
      %v340 = vadd.f32 0.0, %v339
      %v341 = vpop.f32.mrf.mxu0
      %v342 = vpop.f32.mrf.mxu0
      %v343 = vadd.f32 0.0, %v342
      %v344 = vpop.f32.mrf.mxu0
      %345 = vdwg.mxu0
      %v354 = vunpack.c.l.b16 %v222
      %v355 = vunpack.c.l.b16 %v223
      %v356 = vunpack.c.l.b16 %v224
      %v357 = vunpack.c.l.b16 %v225
      %v358 = vunpack.c.l.b16 %v226
      %v359 = vunpack.c.l.b16 %v227
      %v360 = vunpack.c.l.b16 %v228
      %v361 = vunpack.c.l.b16 %v229
      %v362 = vpack.c.b16 %v355, %v354
      %v363 = vpack.c.b16 %v357, %v356
      %v364 = vpack.c.b16 %v359, %v358
      %v365 = vpack.c.b16 %v361, %v360
      %v367 = vsel %vm264, %v362, 0
      %v370 = vsel %vm264, %v363, 0
      %v373 = vsel %vm264, %v364, 0
      %v376 = vsel %vm264, %v365, 0
      %v379 = vsel %vm277, %v230, 0
      %381 = vmatprep.subr.bf16.mxu0 0
      %382 = vmatpush1.bf16.msra.mxu0 0
      %383 = vmatprep.subr.bf16.mxu0 0
      %384 = vmatpush1.bf16.msra.mxu0 0
      %385 = vmatprep.subr.bf16.mxu0 0
      %386 = vmatpush1.bf16.msra.mxu0 0
      %387 = vmatprep.subr.bf16.mxu0 0
      %388 = vmatpush1.bf16.msra.mxu0 0
      %389 = vmatprep.subr.bf16.mxu0 0
      %390 = vmatpush1.bf16.msra.mxu0 0
      %391 = vmatprep.subr.bf16.mxu0 0
      %392 = vmatpush1.bf16.msra.mxu0 0
      %393 = vmatprep.subr.bf16.mxu0 0
      %394 = vmatpush1.bf16.msra.mxu0 0
      %395 = vmatprep.subr.bf16.mxu0 0
      %396 = vmatpush1.bf16.msra.mxu0 %v379
      %397 = vmatprep.subr.bf16.mxu0 0
      %398 = vmatpush2.bf16.msra.mxu0 0
      %399 = vmatprep.subr.bf16.mxu0 0
      %400 = vmatpush2.bf16.msra.mxu0 0
      %401 = vmatprep.subr.bf16.mxu0 0
      %402 = vmatpush2.bf16.msra.mxu0 0
      %403 = vmatprep.subr.bf16.mxu0 0
      %404 = vmatpush2.bf16.msra.mxu0 0
      %405 = vmatprep.subr.bf16.mxu0 0
      %406 = vmatpush2.bf16.msra.mxu0 0
      %407 = vmatprep.subr.bf16.mxu0 0
      %408 = vmatpush2.bf16.msra.mxu0 0
      %409 = vmatprep.subr.bf16.mxu0 0
      %410 = vmatpush2.bf16.msra.mxu0 0
      %411 = vmatprep.subr.bf16.mxu0 0
      %412 = vmatpush2.bf16.msra.mxu0 0
      %413 = vmatprep.mubr.bf16.mxu0 0
      %414 = vmatmul.mubr.bf16.gmra.mxu0 %v367
      %v415 = vpop.f32.mrf.mxu0
      %v416 = vadd.f32 %v316, %v415
      %v417 = vpop.f32.mrf.mxu0
      %v418 = vpop.f32.mrf.mxu0
      %v419 = vadd.f32 %v319, %v418
      %v420 = vpop.f32.mrf.mxu0
      %421 = vmatprep.mubr.bf16.mxu0 0
      %422 = vmatmul.mubr.bf16.gmra.mxu0 %v370
      %v423 = vpop.f32.mrf.mxu0
      %v424 = vadd.f32 %v324, %v423
      %v425 = vpop.f32.mrf.mxu0
      %v426 = vpop.f32.mrf.mxu0
      %v427 = vadd.f32 %v327, %v426
      %v428 = vpop.f32.mrf.mxu0
      %429 = vmatprep.mubr.bf16.mxu0 0
      %430 = vmatmul.mubr.bf16.gmra.mxu0 %v373
      %v431 = vpop.f32.mrf.mxu0
      %v432 = vadd.f32 %v332, %v431
      %v433 = vpop.f32.mrf.mxu0
      %v434 = vpop.f32.mrf.mxu0
      %v435 = vadd.f32 %v335, %v434
      %v436 = vpop.f32.mrf.mxu0
      %437 = vmatprep.mubr.bf16.mxu0 0
      %438 = vmatmul.mubr.bf16.gmra.mxu0 %v376
      %v439 = vpop.f32.mrf.mxu0
      %v440 = vadd.f32 %v340, %v439
      %v441 = vpop.f32.mrf.mxu0
      %v442 = vpop.f32.mrf.mxu0
      %v443 = vadd.f32 %v343, %v442
      %v444 = vpop.f32.mrf.mxu0
      %445 = vdwg.mxu0
      %v446 = vld [vmem:[%s221] sm:$0xf]
      %v447 = vld [vmem:[%s221 + $0x4] sm:$0x1]
      %v448 = vld [vmem:[%s221 + $0x8] sm:$0xf]
      %v449 = vld [vmem:[%s221 + $0xc] sm:$0x1]
      %v450 = vld [vmem:[%s221 + $0x10] sm:$0xf]
      %v451 = vld [vmem:[%s221 + $0x14] sm:$0x1]
      %v452 = vld [vmem:[%s221 + $0x18] sm:$0xf]
      %v453 = vld [vmem:[%s221 + $0x1c] sm:$0x1]
      %v454 = vld [vmem:[%s221 + $0x20] sm:$0xf]
      %v455 = vld [vmem:[%s221 + $0x24] sm:$0x1]
      %v456 = vld [vmem:[%s221 + $0x28] sm:$0xf]
      %v457 = vld [vmem:[%s221 + $0x2c] sm:$0x1]
      %v458 = vld [vmem:[%s221 + $0x30] sm:$0xf]
      %v459 = vld [vmem:[%s221 + $0x34] sm:$0x1]
      %v460 = vld [vmem:[%s221 + $0x38] sm:$0xf]
      %v461 = vld [vmem:[%s221 + $0x3c] sm:$0x1]
      %vm462 = vsmask.f32 3328
      %vm463 = vsmask.f32 7440
      %vm464 = vmor %vm462, %vm463
      %v466 = vshrl.u32 %v446, 16
      %v468 = vrot.slane %v466, 4
      %v469 = vshll.u32 %v446, 16
      %v471 = vrot.slane %v469, 5
      %v472 = vor.u32 %v468, %v471
      %v473 = vrot.slane %v472, 4
      %v475 = vshll.u32 %v447, 16
      %v477 = vrot.slane %v475, 5
      %v478 = vsel %vm464, %v473, %v477
      %v480 = vshrl.u32 %v448, 16
      %v482 = vrot.slane %v480, 4
      %v483 = vshll.u32 %v448, 16
      %v485 = vrot.slane %v483, 5
      %v486 = vor.u32 %v482, %v485
      %v487 = vrot.slane %v486, 4
      %v489 = vshll.u32 %v449, 16
      %v491 = vrot.slane %v489, 5
      %v492 = vsel %vm464, %v487, %v491
      %v494 = vshrl.u32 %v450, 16
      %v496 = vrot.slane %v494, 4
      %v497 = vshll.u32 %v450, 16
      %v499 = vrot.slane %v497, 5
      %v500 = vor.u32 %v496, %v499
      %v501 = vrot.slane %v500, 4
      %v503 = vshll.u32 %v451, 16
      %v505 = vrot.slane %v503, 5
      %v506 = vsel %vm464, %v501, %v505
      %v508 = vshrl.u32 %v452, 16
      %v510 = vrot.slane %v508, 4
      %v511 = vshll.u32 %v452, 16
      %v513 = vrot.slane %v511, 5
      %v514 = vor.u32 %v510, %v513
      %v515 = vrot.slane %v514, 4
      %v517 = vshll.u32 %v453, 16
      %v519 = vrot.slane %v517, 5
      %v520 = vsel %vm464, %v515, %v519
      %v522 = vshrl.u32 %v454, 16
      %v524 = vrot.slane %v522, 4
      %v525 = vshll.u32 %v454, 16
      %v527 = vrot.slane %v525, 5
      %v528 = vor.u32 %v524, %v527
      %v529 = vrot.slane %v528, 4
      %v531 = vshll.u32 %v455, 16
      %v533 = vrot.slane %v531, 5
      %v534 = vsel %vm464, %v529, %v533
      %v536 = vshrl.u32 %v456, 16
      %v538 = vrot.slane %v536, 4
      %v539 = vshll.u32 %v456, 16
      %v541 = vrot.slane %v539, 5
      %v542 = vor.u32 %v538, %v541
      %v543 = vrot.slane %v542, 4
      %v545 = vshll.u32 %v457, 16
      %v547 = vrot.slane %v545, 5
      %v548 = vsel %vm464, %v543, %v547
      %v550 = vshrl.u32 %v458, 16
      %v552 = vrot.slane %v550, 4
      %v553 = vshll.u32 %v458, 16
      %v555 = vrot.slane %v553, 5
      %v556 = vor.u32 %v552, %v555
      %v557 = vrot.slane %v556, 4
      %v559 = vshll.u32 %v459, 16
      %v561 = vrot.slane %v559, 5
      %v562 = vsel %vm464, %v557, %v561
      %v564 = vshrl.u32 %v460, 16
      %v566 = vrot.slane %v564, 4
      %v567 = vshll.u32 %v460, 16
      %v569 = vrot.slane %v567, 5
      %v570 = vor.u32 %v566, %v569
      %v571 = vrot.slane %v570, 4
      %v573 = vshll.u32 %v461, 16
      %v575 = vrot.slane %v573, 5
      %v576 = vsel %vm464, %v571, %v575
      %s577 = scalar_lea.vmem %s1, 4
      %v578 = vld [vmem:[%s577] sm:$0x3]
      %v579 = vunpack.c.l.b16 %v478
      %v580 = vunpack.c.l.b16 %v492
      %v581 = vunpack.c.l.b16 %v506
      %v582 = vunpack.c.l.b16 %v520
      %v583 = vunpack.c.l.b16 %v534
      %v584 = vunpack.c.l.b16 %v548
      %v585 = vunpack.c.l.b16 %v562
      %v586 = vunpack.c.l.b16 %v576
      %v587 = vpack.c.b16 %v580, %v579
      %v588 = vpack.c.b16 %v582, %v581
      %v589 = vpack.c.b16 %v584, %v583
      %v590 = vpack.c.b16 %v586, %v585
      %v592 = vsel %vm264, %v587, 0
      %v595 = vsel %vm264, %v588, 0
      %v598 = vsel %vm264, %v589, 0
      %v601 = vsel %vm264, %v590, 0
      %v604 = vsel %vm277, %v578, 0
      %606 = vmatprep.subr.bf16.mxu0 0
      %607 = vmatpush1.bf16.msra.mxu0 0
      %608 = vmatprep.subr.bf16.mxu0 0
      %609 = vmatpush1.bf16.msra.mxu0 0
      %610 = vmatprep.subr.bf16.mxu0 0
      %611 = vmatpush1.bf16.msra.mxu0 0
      %612 = vmatprep.subr.bf16.mxu0 0
      %613 = vmatpush1.bf16.msra.mxu0 0
      %614 = vmatprep.subr.bf16.mxu0 0
      %615 = vmatpush1.bf16.msra.mxu0 0
      %616 = vmatprep.subr.bf16.mxu0 0
      %617 = vmatpush1.bf16.msra.mxu0 0
      %618 = vmatprep.subr.bf16.mxu0 0
      %619 = vmatpush1.bf16.msra.mxu0 0
      %620 = vmatprep.subr.bf16.mxu0 0
      %621 = vmatpush1.bf16.msra.mxu0 %v604
      %622 = vmatprep.subr.bf16.mxu0 0
      %623 = vmatpush2.bf16.msra.mxu0 0
      %624 = vmatprep.subr.bf16.mxu0 0
      %625 = vmatpush2.bf16.msra.mxu0 0
      %626 = vmatprep.subr.bf16.mxu0 0
      %627 = vmatpush2.bf16.msra.mxu0 0
      %628 = vmatprep.subr.bf16.mxu0 0
      %629 = vmatpush2.bf16.msra.mxu0 0
      %630 = vmatprep.subr.bf16.mxu0 0
      %631 = vmatpush2.bf16.msra.mxu0 0
      %632 = vmatprep.subr.bf16.mxu0 0
      %633 = vmatpush2.bf16.msra.mxu0 0
      %634 = vmatprep.subr.bf16.mxu0 0
      %635 = vmatpush2.bf16.msra.mxu0 0
      %636 = vmatprep.subr.bf16.mxu0 0
      %637 = vmatpush2.bf16.msra.mxu0 0
      %638 = vmatprep.mubr.bf16.mxu0 0
      %639 = vmatmul.mubr.bf16.gmra.mxu0 %v592
      %v640 = vpop.f32.mrf.mxu0
      %v641 = vadd.f32 0.0, %v640
      %v642 = vpop.f32.mrf.mxu0
      %v643 = vpop.f32.mrf.mxu0
      %v644 = vadd.f32 0.0, %v643
      %v645 = vpop.f32.mrf.mxu0
      %646 = vmatprep.mubr.bf16.mxu0 0
      %647 = vmatmul.mubr.bf16.gmra.mxu0 %v595
      %v648 = vpop.f32.mrf.mxu0
      %v649 = vadd.f32 0.0, %v648
      %v650 = vpop.f32.mrf.mxu0
      %v651 = vpop.f32.mrf.mxu0
      %v652 = vadd.f32 0.0, %v651
      %v653 = vpop.f32.mrf.mxu0
      %654 = vmatprep.mubr.bf16.mxu0 0
      %655 = vmatmul.mubr.bf16.gmra.mxu0 %v598
      %v656 = vpop.f32.mrf.mxu0
      %v657 = vadd.f32 0.0, %v656
      %v658 = vpop.f32.mrf.mxu0
      %v659 = vpop.f32.mrf.mxu0
      %v660 = vadd.f32 0.0, %v659
      %v661 = vpop.f32.mrf.mxu0
      %662 = vmatprep.mubr.bf16.mxu0 0
      %663 = vmatmul.mubr.bf16.gmra.mxu0 %v601
      %v664 = vpop.f32.mrf.mxu0
      %v665 = vadd.f32 0.0, %v664
      %v666 = vpop.f32.mrf.mxu0
      %v667 = vpop.f32.mrf.mxu0
      %v668 = vadd.f32 0.0, %v667
      %v669 = vpop.f32.mrf.mxu0
      %670 = vdwg.mxu0
      %v671 = vadd.f32 %v416, %v641
      %v672 = vadd.f32 %v419, %v644
      %v673 = vadd.f32 %v424, %v649
      %v674 = vadd.f32 %v427, %v652
      %v675 = vadd.f32 %v432, %v657
      %v676 = vadd.f32 %v435, %v660
      %v677 = vadd.f32 %v440, %v665
      %v678 = vadd.f32 %v443, %v668
      %s679 = sadd.s32 %s219, 36
      %s680 = smul.addr %s679, 4
      %s681 = scalar_lea.vmem %s199, %s680
      %v682 = vld [vmem:[%s681] sm:$0xf]
      %v683 = vld [vmem:[%s681 + $0x8] sm:$0xf]
      %v684 = vld [vmem:[%s681 + $0x10] sm:$0xf]
      %v685 = vld [vmem:[%s681 + $0x18] sm:$0xf]
      %v686 = vld [vmem:[%s681 + $0x20] sm:$0xf]
      %v687 = vld [vmem:[%s681 + $0x28] sm:$0xf]
      %v688 = vld [vmem:[%s681 + $0x30] sm:$0xf]
      %v689 = vld [vmem:[%s681 + $0x38] sm:$0xf]
      %s690 = scalar_lea.vmem %s1, 6
      %v691 = vld [vmem:[%s690] sm:$0x3]
      %v700 = vunpack.c.l.b16 %v682
      %v701 = vunpack.c.l.b16 %v683
      %v702 = vunpack.c.l.b16 %v684
      %v703 = vunpack.c.l.b16 %v685
      %v704 = vunpack.c.l.b16 %v686
      %v705 = vunpack.c.l.b16 %v687
      %v706 = vunpack.c.l.b16 %v688
      %v707 = vunpack.c.l.b16 %v689
      %v708 = vpack.c.b16 %v701, %v700
      %v709 = vpack.c.b16 %v703, %v702
      %v710 = vpack.c.b16 %v705, %v704
      %v711 = vpack.c.b16 %v707, %v706
      %v713 = vsel %vm264, %v708, 0
      %v716 = vsel %vm264, %v709, 0
      %v719 = vsel %vm264, %v710, 0
      %v722 = vsel %vm264, %v711, 0
      %v725 = vsel %vm277, %v691, 0
      %727 = vmatprep.subr.bf16.mxu0 0
      %728 = vmatpush1.bf16.msra.mxu0 0
      %729 = vmatprep.subr.bf16.mxu0 0
      %730 = vmatpush1.bf16.msra.mxu0 0
      %731 = vmatprep.subr.bf16.mxu0 0
      %732 = vmatpush1.bf16.msra.mxu0 0
      %733 = vmatprep.subr.bf16.mxu0 0
      %734 = vmatpush1.bf16.msra.mxu0 0
      %735 = vmatprep.subr.bf16.mxu0 0
      %736 = vmatpush1.bf16.msra.mxu0 0
      %737 = vmatprep.subr.bf16.mxu0 0
      %738 = vmatpush1.bf16.msra.mxu0 0
      %739 = vmatprep.subr.bf16.mxu0 0
      %740 = vmatpush1.bf16.msra.mxu0 0
      %741 = vmatprep.subr.bf16.mxu0 0
      %742 = vmatpush1.bf16.msra.mxu0 %v725
      %743 = vmatprep.subr.bf16.mxu0 0
      %744 = vmatpush2.bf16.msra.mxu0 0
      %745 = vmatprep.subr.bf16.mxu0 0
      %746 = vmatpush2.bf16.msra.mxu0 0
      %747 = vmatprep.subr.bf16.mxu0 0
      %748 = vmatpush2.bf16.msra.mxu0 0
      %749 = vmatprep.subr.bf16.mxu0 0
      %750 = vmatpush2.bf16.msra.mxu0 0
      %751 = vmatprep.subr.bf16.mxu0 0
      %752 = vmatpush2.bf16.msra.mxu0 0
      %753 = vmatprep.subr.bf16.mxu0 0
      %754 = vmatpush2.bf16.msra.mxu0 0
      %755 = vmatprep.subr.bf16.mxu0 0
      %756 = vmatpush2.bf16.msra.mxu0 0
      %757 = vmatprep.subr.bf16.mxu0 0
      %758 = vmatpush2.bf16.msra.mxu0 0
      %759 = vmatprep.mubr.bf16.mxu0 0
      %760 = vmatmul.mubr.bf16.gmra.mxu0 %v713
      %v761 = vpop.f32.mrf.mxu0
      %v762 = vadd.f32 0.0, %v761
      %v763 = vpop.f32.mrf.mxu0
      %v764 = vpop.f32.mrf.mxu0
      %v765 = vadd.f32 0.0, %v764
      %v766 = vpop.f32.mrf.mxu0
      %767 = vmatprep.mubr.bf16.mxu0 0
      %768 = vmatmul.mubr.bf16.gmra.mxu0 %v716
      %v769 = vpop.f32.mrf.mxu0
      %v770 = vadd.f32 0.0, %v769
      %v771 = vpop.f32.mrf.mxu0
      %v772 = vpop.f32.mrf.mxu0
      %v773 = vadd.f32 0.0, %v772
      %v774 = vpop.f32.mrf.mxu0
      %775 = vmatprep.mubr.bf16.mxu0 0
      %776 = vmatmul.mubr.bf16.gmra.mxu0 %v719
      %v777 = vpop.f32.mrf.mxu0
      %v778 = vadd.f32 0.0, %v777
      %v779 = vpop.f32.mrf.mxu0
      %v780 = vpop.f32.mrf.mxu0
      %v781 = vadd.f32 0.0, %v780
      %v782 = vpop.f32.mrf.mxu0
      %783 = vmatprep.mubr.bf16.mxu0 0
      %784 = vmatmul.mubr.bf16.gmra.mxu0 %v722
      %v785 = vpop.f32.mrf.mxu0
      %v786 = vadd.f32 0.0, %v785
      %v787 = vpop.f32.mrf.mxu0
      %v788 = vpop.f32.mrf.mxu0
      %v789 = vadd.f32 0.0, %v788
      %v790 = vpop.f32.mrf.mxu0
      %791 = vdwg.mxu0
      %v792 = vadd.f32 %v671, %v762
      %v793 = vadd.f32 %v672, %v765
      %v794 = vadd.f32 %v673, %v770
      %v795 = vadd.f32 %v674, %v773
      %v796 = vadd.f32 %v675, %v778
      %v797 = vadd.f32 %v676, %v781
      %v798 = vadd.f32 %v677, %v786
      %v799 = vadd.f32 %v678, %v789
      %s800 = sadd.s32 %s219, 54
      %s801 = smul.addr %s800, 4
      %s802 = scalar_lea.vmem %s199, %s801
      %v803 = vld [vmem:[%s802] sm:$0xf]
      %v804 = vld [vmem:[%s802 + $0x8] sm:$0xf]
      %v805 = vld [vmem:[%s802 + $0x10] sm:$0xf]
      %v806 = vld [vmem:[%s802 + $0x18] sm:$0xf]
      %v807 = vld [vmem:[%s802 + $0x20] sm:$0xf]
      %v808 = vld [vmem:[%s802 + $0x28] sm:$0xf]
      %v809 = vld [vmem:[%s802 + $0x30] sm:$0xf]
      %v810 = vld [vmem:[%s802 + $0x38] sm:$0xf]
      %s811 = scalar_lea.vmem %s1, 8
      %v812 = vld [vmem:[%s811] sm:$0x3]
      %v821 = vunpack.c.l.b16 %v803
      %v822 = vunpack.c.l.b16 %v804
      %v823 = vunpack.c.l.b16 %v805
      %v824 = vunpack.c.l.b16 %v806
      %v825 = vunpack.c.l.b16 %v807
      %v826 = vunpack.c.l.b16 %v808
      %v827 = vunpack.c.l.b16 %v809
      %v828 = vunpack.c.l.b16 %v810
      %v829 = vpack.c.b16 %v822, %v821
      %v830 = vpack.c.b16 %v824, %v823
      %v831 = vpack.c.b16 %v826, %v825
      %v832 = vpack.c.b16 %v828, %v827
      %v834 = vsel %vm264, %v829, 0
      %v837 = vsel %vm264, %v830, 0
      %v840 = vsel %vm264, %v831, 0
      %v843 = vsel %vm264, %v832, 0
      %v846 = vsel %vm277, %v812, 0
      %848 = vmatprep.subr.bf16.mxu0 0
      %849 = vmatpush1.bf16.msra.mxu0 0
      %850 = vmatprep.subr.bf16.mxu0 0
      %851 = vmatpush1.bf16.msra.mxu0 0
      %852 = vmatprep.subr.bf16.mxu0 0
      %853 = vmatpush1.bf16.msra.mxu0 0
      %854 = vmatprep.subr.bf16.mxu0 0
      %855 = vmatpush1.bf16.msra.mxu0 0
      %856 = vmatprep.subr.bf16.mxu0 0
      %857 = vmatpush1.bf16.msra.mxu0 0
      %858 = vmatprep.subr.bf16.mxu0 0
      %859 = vmatpush1.bf16.msra.mxu0 0
      %860 = vmatprep.subr.bf16.mxu0 0
      %861 = vmatpush1.bf16.msra.mxu0 0
      %862 = vmatprep.subr.bf16.mxu0 0
      %863 = vmatpush1.bf16.msra.mxu0 %v846
      %864 = vmatprep.subr.bf16.mxu0 0
      %865 = vmatpush2.bf16.msra.mxu0 0
      %866 = vmatprep.subr.bf16.mxu0 0
      %867 = vmatpush2.bf16.msra.mxu0 0
      %868 = vmatprep.subr.bf16.mxu0 0
      %869 = vmatpush2.bf16.msra.mxu0 0
      %870 = vmatprep.subr.bf16.mxu0 0
      %871 = vmatpush2.bf16.msra.mxu0 0
      %872 = vmatprep.subr.bf16.mxu0 0
      %873 = vmatpush2.bf16.msra.mxu0 0
      %874 = vmatprep.subr.bf16.mxu0 0
      %875 = vmatpush2.bf16.msra.mxu0 0
      %876 = vmatprep.subr.bf16.mxu0 0
      %877 = vmatpush2.bf16.msra.mxu0 0
      %878 = vmatprep.subr.bf16.mxu0 0
      %879 = vmatpush2.bf16.msra.mxu0 0
      %880 = vmatprep.mubr.bf16.mxu0 0
      %881 = vmatmul.mubr.bf16.gmra.mxu0 %v834
      %v882 = vpop.f32.mrf.mxu0
      %v883 = vadd.f32 0.0, %v882
      %v884 = vpop.f32.mrf.mxu0
      %v885 = vpop.f32.mrf.mxu0
      %v886 = vadd.f32 0.0, %v885
      %v887 = vpop.f32.mrf.mxu0
      %888 = vmatprep.mubr.bf16.mxu0 0
      %889 = vmatmul.mubr.bf16.gmra.mxu0 %v837
      %v890 = vpop.f32.mrf.mxu0
      %v891 = vadd.f32 0.0, %v890
      %v892 = vpop.f32.mrf.mxu0
      %v893 = vpop.f32.mrf.mxu0
      %v894 = vadd.f32 0.0, %v893
      %v895 = vpop.f32.mrf.mxu0
      %896 = vmatprep.mubr.bf16.mxu0 0
      %897 = vmatmul.mubr.bf16.gmra.mxu0 %v840
      %v898 = vpop.f32.mrf.mxu0
      %v899 = vadd.f32 0.0, %v898
      %v900 = vpop.f32.mrf.mxu0
      %v901 = vpop.f32.mrf.mxu0
      %v902 = vadd.f32 0.0, %v901
      %v903 = vpop.f32.mrf.mxu0
      %904 = vmatprep.mubr.bf16.mxu0 0
      %905 = vmatmul.mubr.bf16.gmra.mxu0 %v843
      %v906 = vpop.f32.mrf.mxu0
      %v907 = vadd.f32 0.0, %v906
      %v908 = vpop.f32.mrf.mxu0
      %v909 = vpop.f32.mrf.mxu0
      %v910 = vadd.f32 0.0, %v909
      %v911 = vpop.f32.mrf.mxu0
      %912 = vdwg.mxu0
      %v913 = vadd.f32 %v792, %v883
      %v914 = vadd.f32 %v793, %v886
      %v915 = vadd.f32 %v794, %v891
      %v916 = vadd.f32 %v795, %v894
      %v917 = vadd.f32 %v796, %v899
      %v918 = vadd.f32 %v797, %v902
      %v919 = vadd.f32 %v798, %v907
      %v920 = vadd.f32 %v799, %v910
      %v921 = vld [vmem:[%s681] sm:$0xf]
      %v922 = vld [vmem:[%s681 + $0x4] sm:$0x1]
      %v923 = vld [vmem:[%s681 + $0x8] sm:$0xf]
      %v924 = vld [vmem:[%s681 + $0xc] sm:$0x1]
      %v925 = vld [vmem:[%s681 + $0x10] sm:$0xf]
      %v926 = vld [vmem:[%s681 + $0x14] sm:$0x1]
      %v927 = vld [vmem:[%s681 + $0x18] sm:$0xf]
      %v928 = vld [vmem:[%s681 + $0x1c] sm:$0x1]
      %v929 = vld [vmem:[%s681 + $0x20] sm:$0xf]
      %v930 = vld [vmem:[%s681 + $0x24] sm:$0x1]
      %v931 = vld [vmem:[%s681 + $0x28] sm:$0xf]
      %v932 = vld [vmem:[%s681 + $0x2c] sm:$0x1]
      %v933 = vld [vmem:[%s681 + $0x30] sm:$0xf]
      %v934 = vld [vmem:[%s681 + $0x34] sm:$0x1]
      %v935 = vld [vmem:[%s681 + $0x38] sm:$0xf]
      %v936 = vld [vmem:[%s681 + $0x3c] sm:$0x1]
      %v938 = vshrl.u32 %v921, 16
      %v940 = vrot.slane %v938, 4
      %v941 = vshll.u32 %v921, 16
      %v943 = vrot.slane %v941, 5
      %v944 = vor.u32 %v940, %v943
      %v945 = vrot.slane %v944, 4
      %v947 = vshll.u32 %v922, 16
      %v949 = vrot.slane %v947, 5
      %v950 = vsel %vm464, %v945, %v949
      %v952 = vshrl.u32 %v923, 16
      %v954 = vrot.slane %v952, 4
      %v955 = vshll.u32 %v923, 16
      %v957 = vrot.slane %v955, 5
      %v958 = vor.u32 %v954, %v957
      %v959 = vrot.slane %v958, 4
      %v961 = vshll.u32 %v924, 16
      %v963 = vrot.slane %v961, 5
      %v964 = vsel %vm464, %v959, %v963
      %v966 = vshrl.u32 %v925, 16
      %v968 = vrot.slane %v966, 4
      %v969 = vshll.u32 %v925, 16
      %v971 = vrot.slane %v969, 5
      %v972 = vor.u32 %v968, %v971
      %v973 = vrot.slane %v972, 4
      %v975 = vshll.u32 %v926, 16
      %v977 = vrot.slane %v975, 5
      %v978 = vsel %vm464, %v973, %v977
      %v980 = vshrl.u32 %v927, 16
      %v982 = vrot.slane %v980, 4
      %v983 = vshll.u32 %v927, 16
      %v985 = vrot.slane %v983, 5
      %v986 = vor.u32 %v982, %v985
      %v987 = vrot.slane %v986, 4
      %v989 = vshll.u32 %v928, 16
      %v991 = vrot.slane %v989, 5
      %v992 = vsel %vm464, %v987, %v991
      %v994 = vshrl.u32 %v929, 16
      %v996 = vrot.slane %v994, 4
      %v997 = vshll.u32 %v929, 16
      %v999 = vrot.slane %v997, 5
      %v1000 = vor.u32 %v996, %v999
      %v1001 = vrot.slane %v1000, 4
      %v1003 = vshll.u32 %v930, 16
      %v1005 = vrot.slane %v1003, 5
      %v1006 = vsel %vm464, %v1001, %v1005
      %v1008 = vshrl.u32 %v931, 16
      %v1010 = vrot.slane %v1008, 4
      %v1011 = vshll.u32 %v931, 16
      %v1013 = vrot.slane %v1011, 5
      %v1014 = vor.u32 %v1010, %v1013
      %v1015 = vrot.slane %v1014, 4
      %v1017 = vshll.u32 %v932, 16
      %v1019 = vrot.slane %v1017, 5
      %v1020 = vsel %vm464, %v1015, %v1019
      %v1022 = vshrl.u32 %v933, 16
      %v1024 = vrot.slane %v1022, 4
      %v1025 = vshll.u32 %v933, 16
      %v1027 = vrot.slane %v1025, 5
      %v1028 = vor.u32 %v1024, %v1027
      %v1029 = vrot.slane %v1028, 4
      %v1031 = vshll.u32 %v934, 16
      %v1033 = vrot.slane %v1031, 5
      %v1034 = vsel %vm464, %v1029, %v1033
      %v1036 = vshrl.u32 %v935, 16
      %v1038 = vrot.slane %v1036, 4
      %v1039 = vshll.u32 %v935, 16
      %v1041 = vrot.slane %v1039, 5
      %v1042 = vor.u32 %v1038, %v1041
      %v1043 = vrot.slane %v1042, 4
      %v1045 = vshll.u32 %v936, 16
      %v1047 = vrot.slane %v1045, 5
      %v1048 = vsel %vm464, %v1043, %v1047
      %s1049 = scalar_lea.vmem %s1, 10
      %v1050 = vld [vmem:[%s1049] sm:$0x3]
      %v1051 = vunpack.c.l.b16 %v950
      %v1052 = vunpack.c.l.b16 %v964
      %v1053 = vunpack.c.l.b16 %v978
      %v1054 = vunpack.c.l.b16 %v992
      %v1055 = vunpack.c.l.b16 %v1006
      %v1056 = vunpack.c.l.b16 %v1020
      %v1057 = vunpack.c.l.b16 %v1034
      %v1058 = vunpack.c.l.b16 %v1048
      %v1059 = vpack.c.b16 %v1052, %v1051
      %v1060 = vpack.c.b16 %v1054, %v1053
      %v1061 = vpack.c.b16 %v1056, %v1055
      %v1062 = vpack.c.b16 %v1058, %v1057
      %v1064 = vsel %vm264, %v1059, 0
      %v1067 = vsel %vm264, %v1060, 0
      %v1070 = vsel %vm264, %v1061, 0
      %v1073 = vsel %vm264, %v1062, 0
      %v1076 = vsel %vm277, %v1050, 0
      %1078 = vmatprep.subr.bf16.mxu0 0
      %1079 = vmatpush1.bf16.msra.mxu0 0
      %1080 = vmatprep.subr.bf16.mxu0 0
      %1081 = vmatpush1.bf16.msra.mxu0 0
      %1082 = vmatprep.subr.bf16.mxu0 0
      %1083 = vmatpush1.bf16.msra.mxu0 0
      %1084 = vmatprep.subr.bf16.mxu0 0
      %1085 = vmatpush1.bf16.msra.mxu0 0
      %1086 = vmatprep.subr.bf16.mxu0 0
      %1087 = vmatpush1.bf16.msra.mxu0 0
      %1088 = vmatprep.subr.bf16.mxu0 0
      %1089 = vmatpush1.bf16.msra.mxu0 0
      %1090 = vmatprep.subr.bf16.mxu0 0
      %1091 = vmatpush1.bf16.msra.mxu0 0
      %1092 = vmatprep.subr.bf16.mxu0 0
      %1093 = vmatpush1.bf16.msra.mxu0 %v1076
      %1094 = vmatprep.subr.bf16.mxu0 0
      %1095 = vmatpush2.bf16.msra.mxu0 0
      %1096 = vmatprep.subr.bf16.mxu0 0
      %1097 = vmatpush2.bf16.msra.mxu0 0
      %1098 = vmatprep.subr.bf16.mxu0 0
      %1099 = vmatpush2.bf16.msra.mxu0 0
      %1100 = vmatprep.subr.bf16.mxu0 0
      %1101 = vmatpush2.bf16.msra.mxu0 0
      %1102 = vmatprep.subr.bf16.mxu0 0
      %1103 = vmatpush2.bf16.msra.mxu0 0
      %1104 = vmatprep.subr.bf16.mxu0 0
      %1105 = vmatpush2.bf16.msra.mxu0 0
      %1106 = vmatprep.subr.bf16.mxu0 0
      %1107 = vmatpush2.bf16.msra.mxu0 0
      %1108 = vmatprep.subr.bf16.mxu0 0
      %1109 = vmatpush2.bf16.msra.mxu0 0
      %1110 = vmatprep.mubr.bf16.mxu0 0
      %1111 = vmatmul.mubr.bf16.gmra.mxu0 %v1064
      %v1112 = vpop.f32.mrf.mxu0
      %v1113 = vadd.f32 0.0, %v1112
      %v1114 = vpop.f32.mrf.mxu0
      %v1115 = vpop.f32.mrf.mxu0
      %v1116 = vadd.f32 0.0, %v1115
      %v1117 = vpop.f32.mrf.mxu0
      %1118 = vmatprep.mubr.bf16.mxu0 0
      %1119 = vmatmul.mubr.bf16.gmra.mxu0 %v1067
      %v1120 = vpop.f32.mrf.mxu0
      %v1121 = vadd.f32 0.0, %v1120
      %v1122 = vpop.f32.mrf.mxu0
      %v1123 = vpop.f32.mrf.mxu0
      %v1124 = vadd.f32 0.0, %v1123
      %v1125 = vpop.f32.mrf.mxu0
      %1126 = vmatprep.mubr.bf16.mxu0 0
      %1127 = vmatmul.mubr.bf16.gmra.mxu0 %v1070
      %v1128 = vpop.f32.mrf.mxu0
      %v1129 = vadd.f32 0.0, %v1128
      %v1130 = vpop.f32.mrf.mxu0
      %v1131 = vpop.f32.mrf.mxu0
      %v1132 = vadd.f32 0.0, %v1131
      %v1133 = vpop.f32.mrf.mxu0
      %1134 = vmatprep.mubr.bf16.mxu0 0
      %1135 = vmatmul.mubr.bf16.gmra.mxu0 %v1073
      %v1136 = vpop.f32.mrf.mxu0
      %v1137 = vadd.f32 0.0, %v1136
      %v1138 = vpop.f32.mrf.mxu0
      %v1139 = vpop.f32.mrf.mxu0
      %v1140 = vadd.f32 0.0, %v1139
      %v1141 = vpop.f32.mrf.mxu0
      %1142 = vdwg.mxu0
      %v1143 = vadd.f32 %v913, %v1113
      %v1144 = vadd.f32 %v914, %v1116
      %v1145 = vadd.f32 %v915, %v1121
      %v1146 = vadd.f32 %v916, %v1124
      %v1147 = vadd.f32 %v917, %v1129
      %v1148 = vadd.f32 %v918, %v1132
      %v1149 = vadd.f32 %v919, %v1137
      %v1150 = vadd.f32 %v920, %v1140
      %s1151 = sadd.s32 %s218, 1
      %s1152 = smul.u32 %s1151, 2
      %s1153 = smul.addr %s1152, 4
      %s1154 = scalar_lea.vmem %s199, %s1153
      %v1155 = vld [vmem:[%s1154] sm:$0xf]
      %v1156 = vld [vmem:[%s1154 + $0x8] sm:$0xf]
      %v1157 = vld [vmem:[%s1154 + $0x10] sm:$0xf]
      %v1158 = vld [vmem:[%s1154 + $0x18] sm:$0xf]
      %v1159 = vld [vmem:[%s1154 + $0x20] sm:$0xf]
      %v1160 = vld [vmem:[%s1154 + $0x28] sm:$0xf]
      %v1161 = vld [vmem:[%s1154 + $0x30] sm:$0xf]
      %v1162 = vld [vmem:[%s1154 + $0x38] sm:$0xf]
      %s1163 = scalar_lea.vmem %s1, 12
      %v1164 = vld [vmem:[%s1163] sm:$0x3]
      %v1173 = vunpack.c.l.b16 %v1155
      %v1174 = vunpack.c.l.b16 %v1156
      %v1175 = vunpack.c.l.b16 %v1157
      %v1176 = vunpack.c.l.b16 %v1158
      %v1177 = vunpack.c.l.b16 %v1159
      %v1178 = vunpack.c.l.b16 %v1160
      %v1179 = vunpack.c.l.b16 %v1161
      %v1180 = vunpack.c.l.b16 %v1162
      %v1181 = vpack.c.b16 %v1174, %v1173
      %v1182 = vpack.c.b16 %v1176, %v1175
      %v1183 = vpack.c.b16 %v1178, %v1177
      %v1184 = vpack.c.b16 %v1180, %v1179
      %v1186 = vsel %vm264, %v1181, 0
      %v1189 = vsel %vm264, %v1182, 0
      %v1192 = vsel %vm264, %v1183, 0
      %v1195 = vsel %vm264, %v1184, 0
      %v1198 = vsel %vm277, %v1164, 0
      %1200 = vmatprep.subr.bf16.mxu0 0
      %1201 = vmatpush1.bf16.msra.mxu0 0
      %1202 = vmatprep.subr.bf16.mxu0 0
      %1203 = vmatpush1.bf16.msra.mxu0 0
      %1204 = vmatprep.subr.bf16.mxu0 0
      %1205 = vmatpush1.bf16.msra.mxu0 0
      %1206 = vmatprep.subr.bf16.mxu0 0
      %1207 = vmatpush1.bf16.msra.mxu0 0
      %1208 = vmatprep.subr.bf16.mxu0 0
      %1209 = vmatpush1.bf16.msra.mxu0 0
      %1210 = vmatprep.subr.bf16.mxu0 0
      %1211 = vmatpush1.bf16.msra.mxu0 0
      %1212 = vmatprep.subr.bf16.mxu0 0
      %1213 = vmatpush1.bf16.msra.mxu0 0
      %1214 = vmatprep.subr.bf16.mxu0 0
      %1215 = vmatpush1.bf16.msra.mxu0 %v1198
      %1216 = vmatprep.subr.bf16.mxu0 0
      %1217 = vmatpush2.bf16.msra.mxu0 0
      %1218 = vmatprep.subr.bf16.mxu0 0
      %1219 = vmatpush2.bf16.msra.mxu0 0
      %1220 = vmatprep.subr.bf16.mxu0 0
      %1221 = vmatpush2.bf16.msra.mxu0 0
      %1222 = vmatprep.subr.bf16.mxu0 0
      %1223 = vmatpush2.bf16.msra.mxu0 0
      %1224 = vmatprep.subr.bf16.mxu0 0
      %1225 = vmatpush2.bf16.msra.mxu0 0
      %1226 = vmatprep.subr.bf16.mxu0 0
      %1227 = vmatpush2.bf16.msra.mxu0 0
      %1228 = vmatprep.subr.bf16.mxu0 0
      %1229 = vmatpush2.bf16.msra.mxu0 0
      %1230 = vmatprep.subr.bf16.mxu0 0
      %1231 = vmatpush2.bf16.msra.mxu0 0
      %1232 = vmatprep.mubr.bf16.mxu0 0
      %1233 = vmatmul.mubr.bf16.gmra.mxu0 %v1186
      %v1234 = vpop.f32.mrf.mxu0
      %v1235 = vadd.f32 0.0, %v1234
      %v1236 = vpop.f32.mrf.mxu0
      %v1237 = vpop.f32.mrf.mxu0
      %v1238 = vadd.f32 0.0, %v1237
      %v1239 = vpop.f32.mrf.mxu0
      %1240 = vmatprep.mubr.bf16.mxu0 0
      %1241 = vmatmul.mubr.bf16.gmra.mxu0 %v1189
      %v1242 = vpop.f32.mrf.mxu0
      %v1243 = vadd.f32 0.0, %v1242
      %v1244 = vpop.f32.mrf.mxu0
      %v1245 = vpop.f32.mrf.mxu0
      %v1246 = vadd.f32 0.0, %v1245
      %v1247 = vpop.f32.mrf.mxu0
      %1248 = vmatprep.mubr.bf16.mxu0 0
      %1249 = vmatmul.mubr.bf16.gmra.mxu0 %v1192
      %v1250 = vpop.f32.mrf.mxu0
      %v1251 = vadd.f32 0.0, %v1250
      %v1252 = vpop.f32.mrf.mxu0
      %v1253 = vpop.f32.mrf.mxu0
      %v1254 = vadd.f32 0.0, %v1253
      %v1255 = vpop.f32.mrf.mxu0
      %1256 = vmatprep.mubr.bf16.mxu0 0
      %1257 = vmatmul.mubr.bf16.gmra.mxu0 %v1195
      %v1258 = vpop.f32.mrf.mxu0
      %v1259 = vadd.f32 0.0, %v1258
      %v1260 = vpop.f32.mrf.mxu0
      %v1261 = vpop.f32.mrf.mxu0
      %v1262 = vadd.f32 0.0, %v1261
      %v1263 = vpop.f32.mrf.mxu0
      %1264 = vdwg.mxu0
      %v1265 = vadd.f32 %v1143, %v1235
      %v1266 = vadd.f32 %v1144, %v1238
      %v1267 = vadd.f32 %v1145, %v1243
      %v1268 = vadd.f32 %v1146, %v1246
      %v1269 = vadd.f32 %v1147, %v1251
      %v1270 = vadd.f32 %v1148, %v1254
      %v1271 = vadd.f32 %v1149, %v1259
      %v1272 = vadd.f32 %v1150, %v1262
      %s1273 = sadd.s32 %s1152, 18
      %s1274 = smul.addr %s1273, 4
      %s1275 = scalar_lea.vmem %s199, %s1274
      %v1276 = vld [vmem:[%s1275] sm:$0xf]
      %v1277 = vld [vmem:[%s1275 + $0x8] sm:$0xf]
      %v1278 = vld [vmem:[%s1275 + $0x10] sm:$0xf]
      %v1279 = vld [vmem:[%s1275 + $0x18] sm:$0xf]
      %v1280 = vld [vmem:[%s1275 + $0x20] sm:$0xf]
      %v1281 = vld [vmem:[%s1275 + $0x28] sm:$0xf]
      %v1282 = vld [vmem:[%s1275 + $0x30] sm:$0xf]
      %v1283 = vld [vmem:[%s1275 + $0x38] sm:$0xf]
      %s1284 = scalar_lea.vmem %s1, 14
      %v1285 = vld [vmem:[%s1284] sm:$0x3]
      %v1294 = vunpack.c.l.b16 %v1276
      %v1295 = vunpack.c.l.b16 %v1277
      %v1296 = vunpack.c.l.b16 %v1278
      %v1297 = vunpack.c.l.b16 %v1279
      %v1298 = vunpack.c.l.b16 %v1280
      %v1299 = vunpack.c.l.b16 %v1281
      %v1300 = vunpack.c.l.b16 %v1282
      %v1301 = vunpack.c.l.b16 %v1283
      %v1302 = vpack.c.b16 %v1295, %v1294
      %v1303 = vpack.c.b16 %v1297, %v1296
      %v1304 = vpack.c.b16 %v1299, %v1298
      %v1305 = vpack.c.b16 %v1301, %v1300
      %v1307 = vsel %vm264, %v1302, 0
      %v1310 = vsel %vm264, %v1303, 0
      %v1313 = vsel %vm264, %v1304, 0
      %v1316 = vsel %vm264, %v1305, 0
      %v1319 = vsel %vm277, %v1285, 0
      %1321 = vmatprep.subr.bf16.mxu0 0
      %1322 = vmatpush1.bf16.msra.mxu0 0
      %1323 = vmatprep.subr.bf16.mxu0 0
      %1324 = vmatpush1.bf16.msra.mxu0 0
      %1325 = vmatprep.subr.bf16.mxu0 0
      %1326 = vmatpush1.bf16.msra.mxu0 0
      %1327 = vmatprep.subr.bf16.mxu0 0
      %1328 = vmatpush1.bf16.msra.mxu0 0
      %1329 = vmatprep.subr.bf16.mxu0 0
      %1330 = vmatpush1.bf16.msra.mxu0 0
      %1331 = vmatprep.subr.bf16.mxu0 0
      %1332 = vmatpush1.bf16.msra.mxu0 0
      %1333 = vmatprep.subr.bf16.mxu0 0
      %1334 = vmatpush1.bf16.msra.mxu0 0
      %1335 = vmatprep.subr.bf16.mxu0 0
      %1336 = vmatpush1.bf16.msra.mxu0 %v1319
      %1337 = vmatprep.subr.bf16.mxu0 0
      %1338 = vmatpush2.bf16.msra.mxu0 0
      %1339 = vmatprep.subr.bf16.mxu0 0
      %1340 = vmatpush2.bf16.msra.mxu0 0
      %1341 = vmatprep.subr.bf16.mxu0 0
      %1342 = vmatpush2.bf16.msra.mxu0 0
      %1343 = vmatprep.subr.bf16.mxu0 0
      %1344 = vmatpush2.bf16.msra.mxu0 0
      %1345 = vmatprep.subr.bf16.mxu0 0
      %1346 = vmatpush2.bf16.msra.mxu0 0
      %1347 = vmatprep.subr.bf16.mxu0 0
      %1348 = vmatpush2.bf16.msra.mxu0 0
      %1349 = vmatprep.subr.bf16.mxu0 0
      %1350 = vmatpush2.bf16.msra.mxu0 0
      %1351 = vmatprep.subr.bf16.mxu0 0
      %1352 = vmatpush2.bf16.msra.mxu0 0
      %1353 = vmatprep.mubr.bf16.mxu0 0
      %1354 = vmatmul.mubr.bf16.gmra.mxu0 %v1307
      %v1355 = vpop.f32.mrf.mxu0
      %v1356 = vadd.f32 0.0, %v1355
      %v1357 = vpop.f32.mrf.mxu0
      %v1358 = vpop.f32.mrf.mxu0
      %v1359 = vadd.f32 0.0, %v1358
      %v1360 = vpop.f32.mrf.mxu0
      %1361 = vmatprep.mubr.bf16.mxu0 0
      %1362 = vmatmul.mubr.bf16.gmra.mxu0 %v1310
      %v1363 = vpop.f32.mrf.mxu0
      %v1364 = vadd.f32 0.0, %v1363
      %v1365 = vpop.f32.mrf.mxu0
      %v1366 = vpop.f32.mrf.mxu0
      %v1367 = vadd.f32 0.0, %v1366
      %v1368 = vpop.f32.mrf.mxu0
      %1369 = vmatprep.mubr.bf16.mxu0 0
      %1370 = vmatmul.mubr.bf16.gmra.mxu0 %v1313
      %v1371 = vpop.f32.mrf.mxu0
      %v1372 = vadd.f32 0.0, %v1371
      %v1373 = vpop.f32.mrf.mxu0
      %v1374 = vpop.f32.mrf.mxu0
      %v1375 = vadd.f32 0.0, %v1374
      %v1376 = vpop.f32.mrf.mxu0
      %1377 = vmatprep.mubr.bf16.mxu0 0
      %1378 = vmatmul.mubr.bf16.gmra.mxu0 %v1316
      %v1379 = vpop.f32.mrf.mxu0
      %v1380 = vadd.f32 0.0, %v1379
      %v1381 = vpop.f32.mrf.mxu0
      %v1382 = vpop.f32.mrf.mxu0
      %v1383 = vadd.f32 0.0, %v1382
      %v1384 = vpop.f32.mrf.mxu0
      %1385 = vdwg.mxu0
      %v1386 = vadd.f32 %v1265, %v1356
      %v1387 = vadd.f32 %v1266, %v1359
      %v1388 = vadd.f32 %v1267, %v1364
      %v1389 = vadd.f32 %v1268, %v1367
      %v1390 = vadd.f32 %v1269, %v1372
      %v1391 = vadd.f32 %v1270, %v1375
      %v1392 = vadd.f32 %v1271, %v1380
      %v1393 = vadd.f32 %v1272, %v1383
      %v1394 = vld [vmem:[%s1154] sm:$0xf]
      %v1395 = vld [vmem:[%s1154 + $0x4] sm:$0x1]
      %v1396 = vld [vmem:[%s1154 + $0x8] sm:$0xf]
      %v1397 = vld [vmem:[%s1154 + $0xc] sm:$0x1]
      %v1398 = vld [vmem:[%s1154 + $0x10] sm:$0xf]
      %v1399 = vld [vmem:[%s1154 + $0x14] sm:$0x1]
      %v1400 = vld [vmem:[%s1154 + $0x18] sm:$0xf]
      %v1401 = vld [vmem:[%s1154 + $0x1c] sm:$0x1]
      %v1402 = vld [vmem:[%s1154 + $0x20] sm:$0xf]
      %v1403 = vld [vmem:[%s1154 + $0x24] sm:$0x1]
      %v1404 = vld [vmem:[%s1154 + $0x28] sm:$0xf]
      %v1405 = vld [vmem:[%s1154 + $0x2c] sm:$0x1]
      %v1406 = vld [vmem:[%s1154 + $0x30] sm:$0xf]
      %v1407 = vld [vmem:[%s1154 + $0x34] sm:$0x1]
      %v1408 = vld [vmem:[%s1154 + $0x38] sm:$0xf]
      %v1409 = vld [vmem:[%s1154 + $0x3c] sm:$0x1]
      %v1411 = vshrl.u32 %v1394, 16
      %v1413 = vrot.slane %v1411, 4
      %v1414 = vshll.u32 %v1394, 16
      %v1416 = vrot.slane %v1414, 5
      %v1417 = vor.u32 %v1413, %v1416
      %v1418 = vrot.slane %v1417, 4
      %v1420 = vshll.u32 %v1395, 16
      %v1422 = vrot.slane %v1420, 5
      %v1423 = vsel %vm464, %v1418, %v1422
      %v1425 = vshrl.u32 %v1396, 16
      %v1427 = vrot.slane %v1425, 4
      %v1428 = vshll.u32 %v1396, 16
      %v1430 = vrot.slane %v1428, 5
      %v1431 = vor.u32 %v1427, %v1430
      %v1432 = vrot.slane %v1431, 4
      %v1434 = vshll.u32 %v1397, 16
      %v1436 = vrot.slane %v1434, 5
      %v1437 = vsel %vm464, %v1432, %v1436
      %v1439 = vshrl.u32 %v1398, 16
      %v1441 = vrot.slane %v1439, 4
      %v1442 = vshll.u32 %v1398, 16
      %v1444 = vrot.slane %v1442, 5
      %v1445 = vor.u32 %v1441, %v1444
      %v1446 = vrot.slane %v1445, 4
      %v1448 = vshll.u32 %v1399, 16
      %v1450 = vrot.slane %v1448, 5
      %v1451 = vsel %vm464, %v1446, %v1450
      %v1453 = vshrl.u32 %v1400, 16
      %v1455 = vrot.slane %v1453, 4
      %v1456 = vshll.u32 %v1400, 16
      %v1458 = vrot.slane %v1456, 5
      %v1459 = vor.u32 %v1455, %v1458
      %v1460 = vrot.slane %v1459, 4
      %v1462 = vshll.u32 %v1401, 16
      %v1464 = vrot.slane %v1462, 5
      %v1465 = vsel %vm464, %v1460, %v1464
      %v1467 = vshrl.u32 %v1402, 16
      %v1469 = vrot.slane %v1467, 4
      %v1470 = vshll.u32 %v1402, 16
      %v1472 = vrot.slane %v1470, 5
      %v1473 = vor.u32 %v1469, %v1472
      %v1474 = vrot.slane %v1473, 4
      %v1476 = vshll.u32 %v1403, 16
      %v1478 = vrot.slane %v1476, 5
      %v1479 = vsel %vm464, %v1474, %v1478
      %v1481 = vshrl.u32 %v1404, 16
      %v1483 = vrot.slane %v1481, 4
      %v1484 = vshll.u32 %v1404, 16
      %v1486 = vrot.slane %v1484, 5
      %v1487 = vor.u32 %v1483, %v1486
      %v1488 = vrot.slane %v1487, 4
      %v1490 = vshll.u32 %v1405, 16
      %v1492 = vrot.slane %v1490, 5
      %v1493 = vsel %vm464, %v1488, %v1492
      %v1495 = vshrl.u32 %v1406, 16
      %v1497 = vrot.slane %v1495, 4
      %v1498 = vshll.u32 %v1406, 16
      %v1500 = vrot.slane %v1498, 5
      %v1501 = vor.u32 %v1497, %v1500
      %v1502 = vrot.slane %v1501, 4
      %v1504 = vshll.u32 %v1407, 16
      %v1506 = vrot.slane %v1504, 5
      %v1507 = vsel %vm464, %v1502, %v1506
      %v1509 = vshrl.u32 %v1408, 16
      %v1511 = vrot.slane %v1509, 4
      %v1512 = vshll.u32 %v1408, 16
      %v1514 = vrot.slane %v1512, 5
      %v1515 = vor.u32 %v1511, %v1514
      %v1516 = vrot.slane %v1515, 4
      %v1518 = vshll.u32 %v1409, 16
      %v1520 = vrot.slane %v1518, 5
      %v1521 = vsel %vm464, %v1516, %v1520
      %s1522 = scalar_lea.vmem %s1, 16
      %v1523 = vld [vmem:[%s1522] sm:$0x3]
      %v1524 = vunpack.c.l.b16 %v1423
      %v1525 = vunpack.c.l.b16 %v1437
      %v1526 = vunpack.c.l.b16 %v1451
      %v1527 = vunpack.c.l.b16 %v1465
      %v1528 = vunpack.c.l.b16 %v1479
      %v1529 = vunpack.c.l.b16 %v1493
      %v1530 = vunpack.c.l.b16 %v1507
      %v1531 = vunpack.c.l.b16 %v1521
      %v1532 = vpack.c.b16 %v1525, %v1524
      %v1533 = vpack.c.b16 %v1527, %v1526
      %v1534 = vpack.c.b16 %v1529, %v1528
      %v1535 = vpack.c.b16 %v1531, %v1530
      %v1537 = vsel %vm264, %v1532, 0
      %v1540 = vsel %vm264, %v1533, 0
      %v1543 = vsel %vm264, %v1534, 0
      %v1546 = vsel %vm264, %v1535, 0
      %v1549 = vsel %vm277, %v1523, 0
      %1551 = vmatprep.subr.bf16.mxu0 0
      %1552 = vmatpush1.bf16.msra.mxu0 0
      %1553 = vmatprep.subr.bf16.mxu0 0
      %1554 = vmatpush1.bf16.msra.mxu0 0
      %1555 = vmatprep.subr.bf16.mxu0 0
      %1556 = vmatpush1.bf16.msra.mxu0 0
      %1557 = vmatprep.subr.bf16.mxu0 0
      %1558 = vmatpush1.bf16.msra.mxu0 0
      %1559 = vmatprep.subr.bf16.mxu0 0
      %1560 = vmatpush1.bf16.msra.mxu0 0
      %1561 = vmatprep.subr.bf16.mxu0 0
      %1562 = vmatpush1.bf16.msra.mxu0 0
      %1563 = vmatprep.subr.bf16.mxu0 0
      %1564 = vmatpush1.bf16.msra.mxu0 0
      %1565 = vmatprep.subr.bf16.mxu0 0
      %1566 = vmatpush1.bf16.msra.mxu0 %v1549
      %1567 = vmatprep.subr.bf16.mxu0 0
      %1568 = vmatpush2.bf16.msra.mxu0 0
      %1569 = vmatprep.subr.bf16.mxu0 0
      %1570 = vmatpush2.bf16.msra.mxu0 0
      %1571 = vmatprep.subr.bf16.mxu0 0
      %1572 = vmatpush2.bf16.msra.mxu0 0
      %1573 = vmatprep.subr.bf16.mxu0 0
      %1574 = vmatpush2.bf16.msra.mxu0 0
      %1575 = vmatprep.subr.bf16.mxu0 0
      %1576 = vmatpush2.bf16.msra.mxu0 0
      %1577 = vmatprep.subr.bf16.mxu0 0
      %1578 = vmatpush2.bf16.msra.mxu0 0
      %1579 = vmatprep.subr.bf16.mxu0 0
      %1580 = vmatpush2.bf16.msra.mxu0 0
      %1581 = vmatprep.subr.bf16.mxu0 0
      %1582 = vmatpush2.bf16.msra.mxu0 0
      %1583 = vmatprep.mubr.bf16.mxu0 0
      %1584 = vmatmul.mubr.bf16.gmra.mxu0 %v1537
      %v1585 = vpop.f32.mrf.mxu0
      %v1586 = vadd.f32 0.0, %v1585
      %v1587 = vpop.f32.mrf.mxu0
      %v1588 = vpop.f32.mrf.mxu0
      %v1589 = vadd.f32 0.0, %v1588
      %v1590 = vpop.f32.mrf.mxu0
      %1591 = vmatprep.mubr.bf16.mxu0 0
      %1592 = vmatmul.mubr.bf16.gmra.mxu0 %v1540
      %v1593 = vpop.f32.mrf.mxu0
      %v1594 = vadd.f32 0.0, %v1593
      %v1595 = vpop.f32.mrf.mxu0
      %v1596 = vpop.f32.mrf.mxu0
      %v1597 = vadd.f32 0.0, %v1596
      %v1598 = vpop.f32.mrf.mxu0
      %1599 = vmatprep.mubr.bf16.mxu0 0
      %1600 = vmatmul.mubr.bf16.gmra.mxu0 %v1543
      %v1601 = vpop.f32.mrf.mxu0
      %v1602 = vadd.f32 0.0, %v1601
      %v1603 = vpop.f32.mrf.mxu0
      %v1604 = vpop.f32.mrf.mxu0
      %v1605 = vadd.f32 0.0, %v1604
      %v1606 = vpop.f32.mrf.mxu0
      %1607 = vmatprep.mubr.bf16.mxu0 0
      %1608 = vmatmul.mubr.bf16.gmra.mxu0 %v1546
      %v1609 = vpop.f32.mrf.mxu0
      %v1610 = vadd.f32 0.0, %v1609
      %v1611 = vpop.f32.mrf.mxu0
      %v1612 = vpop.f32.mrf.mxu0
      %v1613 = vadd.f32 0.0, %v1612
      %v1614 = vpop.f32.mrf.mxu0
      %1615 = vdwg.mxu0
      %v1616 = vadd.f32 %v1386, %v1586
      %v1617 = vadd.f32 %v1387, %v1589
      %v1618 = vadd.f32 %v1388, %v1594
      %v1619 = vadd.f32 %v1389, %v1597
      %v1620 = vadd.f32 %v1390, %v1602
      %v1621 = vadd.f32 %v1391, %v1605
      %v1622 = vadd.f32 %v1392, %v1610
      %v1623 = vadd.f32 %v1393, %v1613
      %1624 = vst [vmem:[%s209] sm:$0xff] %v1616
      %1625 = vst [vmem:[%s209 + $0x8] sm:$0xff] %v1617
      %1626 = vst [vmem:[%s209 + $0x10] sm:$0xff] %v1618
      %1627 = vst [vmem:[%s209 + $0x18] sm:$0xff] %v1619
      %1628 = vst [vmem:[%s209 + $0x20] sm:$0xff] %v1620
      %1629 = vst [vmem:[%s209 + $0x28] sm:$0xff] %v1621
      %1630 = vst [vmem:[%s209 + $0x30] sm:$0xff] %v1622
      %1631 = vst [vmem:[%s209 + $0x38] sm:$0xff] %v1623
      %v1632 = vadd.f32 %v1616, %v1617
      %v1633 = vadd.f32 %v1632, %v1618
      %v1634 = vadd.f32 %v1633, %v1619
      %v1635 = vadd.f32 %v1634, %v1620
      %v1636 = vadd.f32 %v1635, %v1621
      %v1637 = vadd.f32 %v1636, %v1622
      %v1638 = vadd.f32 %v1637, %v1623
      %v1639 = vrot.slane %v1638, 4
      %v1640 = vadd.f32 %v1638, %v1639
      %v1641 = vrot.slane %v1640, 2
      %v1642 = vadd.f32 %v1640, %v1641
      %v1643 = vrot.slane %v1642, 1
      %v1644 = vadd.f32 %v1642, %v1643
      %1645 = vst [vmem:[%s216] sm:$0x1] %v1644
      %v1646 = vmul.f32 %v1616, %v1616
      %v1647 = vmul.f32 %v1617, %v1617
      %v1648 = vmul.f32 %v1618, %v1618
      %v1649 = vmul.f32 %v1619, %v1619
      %v1650 = vmul.f32 %v1620, %v1620
      %v1651 = vmul.f32 %v1621, %v1621
      %v1652 = vmul.f32 %v1622, %v1622
      %v1653 = vmul.f32 %v1623, %v1623
      %v1654 = vadd.f32 %v1646, %v1647
      %v1655 = vadd.f32 %v1654, %v1648
      %v1656 = vadd.f32 %v1655, %v1649
      %v1657 = vadd.f32 %v1656, %v1650
      %v1658 = vadd.f32 %v1657, %v1651
      %v1659 = vadd.f32 %v1658, %v1652
      %v1660 = vadd.f32 %v1659, %v1653
      %v1661 = vrot.slane %v1660, 4
      %v1662 = vadd.f32 %v1660, %v1661
      %v1663 = vrot.slane %v1662, 2
      %v1664 = vadd.f32 %v1662, %v1663
      %v1665 = vrot.slane %v1664, 1
      %v1666 = vadd.f32 %v1664, %v1665
      %1667 = vst [vmem:[%s216 + $0x1] sm:$0x1] %v1666
      %p1668 = scmp.lt.s32.totalorder %s19, 1
      %s1669 = scalar_select %p1668, %s19, 1
      %p1670 = scmp.lt.s32.totalorder %s20, 0
      %s1671 = scalar_select %p1670, %s20, 0
      %s1672 = smul.addr %s1671, 8
      %s1673 = smul.addr %s1669, 8
      %s1674 = sadd.s32 %s1672, %s1673
      %s1675 = smul.addr %s1674, 8
      %s1676 = scalar_lea.vmem %s2, %s1675
      %p1677 = scmp.lt.s32.totalorder %s19, 1
      %s1678 = scalar_select %p1677, %s19, 1
      %p1679 = scmp.lt.s32.totalorder %s20, 0
      %s1680 = scalar_select %p1679, %s20, 0
      %s1681 = sadd.s32 %s1680, %s1678
      %s1682 = smul.addr %s1681, 2
      %s1683 = scalar_lea.vmem %s3, %s1682
      // Predicated region
      $region29: #{basic_block_forward.6} parent=27 // pred_check
        %p1684 = pneg %p94
      $region30: #{basic_block_forward.6} parent=27 // pred_check_branch
        %1686 = sbr.rel (%p1684) target = $region32
      $region31: #{basic_block_forward.6} parent=27 // pred_region
        _
      $region32: #{basic_block_forward.6} parent=27 // pred_fallthru
        _
      // Predicated region
      $region33: #{basic_block_forward.6} parent=27 // pred_check
        %p1687 = pneg %p122
      $region34: #{basic_block_forward.6} parent=27 // pred_check_branch
        %1689 = sbr.rel (%p1687) target = $region36
      $region35: #{basic_block_forward.6} parent=27 // pred_region
        _
      $region36: #{basic_block_forward.6} parent=27 // pred_fallthru
        _
    $region28: #{basic_block_forward.6} parent=5 // pred_fallthru
      _
    %p1690 = scmp.le.s32.totalorder 2, %s10
    // Predicated region
    $region37: #{basic_block_forward.6} parent=5 // pred_check
      %p1691 = pneg %p1690
    $region38: #{basic_block_forward.6} parent=5 // pred_check_branch
      %1693 = sbr.rel (%p1691) target = $region40
    $region39: #{basic_block_forward.6} parent=5 // pred_region
      %s1694 = ssub.s32 %s10, 2
      // Predicated region
      $region41: #{basic_block_forward.6} parent=39 // pred_check
        %p1695 = pneg %p100
      $region42: #{basic_block_forward.6} parent=39 // pred_check_branch
        %1697 = sbr.rel (%p1695) target = $region44
      $region43: #{basic_block_forward.6} parent=39 // pred_region
        %p1698 = scmp.lt.s32.totalorder %s21, 1
        %s1699 = scalar_select %p1698, %s21, 1
        %p1700 = scmp.lt.s32.totalorder %s22, 0
        %s1701 = scalar_select %p1700, %s22, 0
        %s1702 = smul.addr %s1701, 8
        %s1703 = smul.addr %s1699, 8
        %s1704 = sadd.s32 %s1702, %s1703
        %s1705 = smul.addr %s1704, 8
        %s1706 = scalar_lea.vmem %s2, %s1705
      $region44: #{basic_block_forward.6} parent=39 // pred_fallthru
        _
      // Predicated region
      $region45: #{basic_block_forward.6} parent=39 // pred_check
        %p1707 = pneg %p128
      $region46: #{basic_block_forward.6} parent=39 // pred_check_branch
        %1709 = sbr.rel (%p1707) target = $region48
      $region47: #{basic_block_forward.6} parent=39 // pred_region
        %p1710 = scmp.lt.s32.totalorder %s21, 1
        %s1711 = scalar_select %p1710, %s21, 1
        %p1712 = scmp.lt.s32.totalorder %s22, 0
        %s1713 = scalar_select %p1712, %s22, 0
        %s1714 = sadd.s32 %s1713, %s1711
        %s1715 = smul.addr %s1714, 2
        %s1716 = scalar_lea.vmem %s3, %s1715
      $region48: #{basic_block_forward.6} parent=39 // pred_fallthru
        _
    $region40: #{basic_block_forward.6} parent=5 // pred_fallthru
      _
  $region6: #{basic_block_forward.6} parent=0 // loop_footer
    %s14 = sadd.s32 1, %s10
  $region7: #{basic_block_forward.6} parent=0 // loop_footer_branch
    %9 = sbr.rel target = $region3
  $region8: #{basic_block_forward.6} parent=0 // loop_exit
    _

// kernel: basic_block_forward.8
$region0: #{basic_block_forward.8}
  #allocation0 [shape = 'u32[]', space=smem, size = 0x4, offset = 0x4, fixed_abs, tag = 'smem constant byte address 0x4 - core index']
  #allocation1 [shape = 'u32[144,128]{1,0:T(1,128)}', space=vmem, size = 0x12000, scoped, tag = 'internal scratch']
  %s0 = inlined_call_operand.vmem [shape: bf16[2,10,10,128], index: 0, kind: input, shape index: {}]
  %s1 = inlined_call_operand.vmem [shape: bf16[9,128,128], index: 1, kind: input, shape index: {}]
  %s2 = inlined_call_operand.vmem [shape: f32[2,1,64,128], index: 2, kind: output, shape index: {0}]
  %s3 = inlined_call_operand.vmem [shape: f32[2,1,2,128], index: 3, kind: output, shape index: {1}]
  %4 = xla_tuple %s2, %s3
  %s5 = sld [smem:[#allocation0]]
  $region49: #{basic_block_forward.8} parent=0
    _
  %s7 = ssub.s32 1, %s5
  %s8 = scalar_select 0, %s7, %s5
  loop: start=0, step=1, limit=4
  $region2: #{basic_block_forward.8} parent=0 // loop_pre_header
    _
  $region3: #{basic_block_forward.8} parent=0 // loop_header
    %s10 = sphi 0, %s14
    %p11 = scmp.ge.s32.totalorder %s10, 4
    %s17 = sphi 0, %s29
    %s18 = sphi 0, %s25
    %s19 = sphi 0, %s17
    %s20 = sphi 0, %s18
    %s21 = sphi 0, %s19
    %s22 = sphi 0, %s20
    %s32 = sphi 0, %s34
    %s35 = sphi 0, %s32
    %s36 = sphi 0, %s35
    %s52 = sphi 0, %s36
    %s56 = sphi 0, %s56
    %s58 = sphi 0, %s56
    %s59 = sphi 0, %s58
    %s73 = sphi 0, %s59
    %s81 = sphi 0, %s83
    %s84 = sphi 0, %s81
    %s85 = sphi 0, %s84
    %s101 = sphi 0, %s85
    %s109 = sphi 0, %s111
    %s112 = sphi 0, %s109
    %s113 = sphi 0, %s112
    %s129 = sphi 0, %s113
  $region4: #{basic_block_forward.8} parent=0 // loop_header_branch
    %13 = sbr.rel (%p11) target = $region8
  $region5: #{basic_block_forward.8} parent=0 // loop_body
    %s15 = ssub.s32 %s10, 1
    %s16 = ssub.s32 %s10, 2
    %s23 = sadd.s32 1, %s18
    %p24 = scmp.ge.s32.totalorder %s23, 1
    %s25 = scalar_select %p24, 0, %s23
    %s26 = sadd.s32 1, %s17
    %s27 = scalar_select %p24, %s26, %s17
    %p28 = scmp.ge.s32.totalorder %s27, 2
    %s29 = scalar_select %p28, 0, %s27
    %s30 = ssub.s32 %s17, %s29
    %p31 = scmp.eq.s32.totalorder %s30, 0
    %s33 = sadd.s32 %s32, 1
    %s34 = scalar_select %p31, %s32, %s33
    %p37 = pneg %p31
    %p38 = scmp.eq.s32.totalorder %s10, 1
    %p39 = por %p37, %p38
    %p40 = scmp.ne.s32.totalorder %s32, %s35
    %p41 = scmp.eq.s32.totalorder %s10, 0
    %p42 = por %p40, %p41
    %p43 = scmp.ne.s32.totalorder %s32, %s35
    %p44 = scmp.eq.s32.totalorder %s15, 1
    %p45 = por %p43, %p44
    %p46 = scmp.ne.s32.totalorder %s35, %s36
    %p47 = scmp.eq.s32.totalorder %s15, 0
    %p48 = por %p46, %p47
    %p49 = scmp.ne.s32.totalorder %s35, %s36
    %p50 = scmp.eq.s32.totalorder %s16, 1
    %p51 = por %p49, %p50
    %p53 = scmp.ne.s32.totalorder %s36, %s52
    %p54 = scmp.eq.s32.totalorder %s16, 0
    %p55 = por %p53, %p54
    %s57 = sadd.s32 %s56, 1
    %p60 = scmp.eq.s32.totalorder %s10, 1
    %p61 = scmp.ne.s32.totalorder %s56, %s58
    %p62 = scmp.eq.s32.totalorder %s10, 0
    %p63 = por %p61, %p62
    %p64 = scmp.ne.s32.totalorder %s56, %s58
    %p65 = scmp.eq.s32.totalorder %s15, 1
    %p66 = por %p64, %p65
    %p67 = scmp.ne.s32.totalorder %s58, %s59
    %p68 = scmp.eq.s32.totalorder %s15, 0
    %p69 = por %p67, %p68
    %p70 = scmp.ne.s32.totalorder %s58, %s59
    %p71 = scmp.eq.s32.totalorder %s16, 1
    %p72 = por %p70, %p71
    %p74 = scmp.ne.s32.totalorder %s59, %s73
    %p75 = scmp.eq.s32.totalorder %s16, 0
    %p76 = por %p74, %p75
    %s77 = ssub.s32 %s17, %s29
    %s78 = ssub.s32 %s18, %s25
    %s79 = sor.u32 %s77, %s78
    %p80 = scmp.eq.s32.totalorder %s79, 0
    %s82 = sadd.s32 %s81, 1
    %s83 = scalar_select %p80, %s81, %s82
    %p86 = pneg %p80
    %p87 = scmp.eq.s32.totalorder %s10, 1
    %p88 = por %p86, %p87
    %p89 = scmp.ne.s32.totalorder %s81, %s84
    %p90 = scmp.eq.s32.totalorder %s10, 0
    %p91 = por %p89, %p90
    %p92 = scmp.ne.s32.totalorder %s81, %s84
    %p93 = scmp.eq.s32.totalorder %s15, 1
    %p94 = por %p92, %p93
    %p95 = scmp.ne.s32.totalorder %s84, %s85
    %p96 = scmp.eq.s32.totalorder %s15, 0
    %p97 = por %p95, %p96
    %p98 = scmp.ne.s32.totalorder %s84, %s85
    %p99 = scmp.eq.s32.totalorder %s16, 1
    %p100 = por %p98, %p99
    %p102 = scmp.ne.s32.totalorder %s85, %s101
    %p103 = scmp.eq.s32.totalorder %s16, 0
    %p104 = por %p102, %p103
    %s105 = ssub.s32 %s17, %s29
    %s106 = ssub.s32 %s18, %s25
    %s107 = sor.u32 %s105, %s106
    %p108 = scmp.eq.s32.totalorder %s107, 0
    %s110 = sadd.s32 %s109, 1
    %s111 = scalar_select %p108, %s109, %s110
    %p114 = pneg %p108
    %p115 = scmp.eq.s32.totalorder %s10, 1
    %p116 = por %p114, %p115
    %p117 = scmp.ne.s32.totalorder %s109, %s112
    %p118 = scmp.eq.s32.totalorder %s10, 0
    %p119 = por %p117, %p118
    %p120 = scmp.ne.s32.totalorder %s109, %s112
    %p121 = scmp.eq.s32.totalorder %s15, 1
    %p122 = por %p120, %p121
    %p123 = scmp.ne.s32.totalorder %s112, %s113
    %p124 = scmp.eq.s32.totalorder %s15, 0
    %p125 = por %p123, %p124
    %p126 = scmp.ne.s32.totalorder %s112, %s113
    %p127 = scmp.eq.s32.totalorder %s16, 1
    %p128 = por %p126, %p127
    %p130 = scmp.ne.s32.totalorder %s113, %s129
    %p131 = scmp.eq.s32.totalorder %s16, 0
    %p132 = por %p130, %p131
    %p133 = scmp.le.s32.totalorder 1, %s10
    %p134 = scmp.lt.s32.totalorder %s10, 3
    %p135 = pnand %p133, %p134
    %p136 = pneg %p135
    // Predicated region
    $region9: #{basic_block_forward.8} parent=5 // pred_check
      _
    $region10: #{basic_block_forward.8} parent=5 // pred_check_branch
      %138 = sbr.rel (%p135) target = $region12
    $region11: #{basic_block_forward.8} parent=5 // pred_region
      %s139 = ssub.s32 %s10, 1
      // Predicated region
      $region13: #{basic_block_forward.8} parent=11 // pred_check
        %p140 = pneg %p69
      $region14: #{basic_block_forward.8} parent=11 // pred_check_branch
        %142 = sbr.rel (%p140) target = $region16
      $region15: #{basic_block_forward.8} parent=11 // pred_region
        _
      $region16: #{basic_block_forward.8} parent=11 // pred_fallthru
        _
    $region12: #{basic_block_forward.8} parent=5 // pred_fallthru
      _
    %p143 = scmp.lt.s32.totalorder %s10, 2
    // Predicated region
    $region17: #{basic_block_forward.8} parent=5 // pred_check
      %p144 = pneg %p143
    $region18: #{basic_block_forward.8} parent=5 // pred_check_branch
      %146 = sbr.rel (%p144) target = $region20
    $region19: #{basic_block_forward.8} parent=5 // pred_region
      // Predicated region
      $region21: #{basic_block_forward.8} parent=19 // pred_check
        %p147 = pneg %p42
      $region22: #{basic_block_forward.8} parent=19 // pred_check_branch
        %149 = sbr.rel (%p147) target = $region24
      $region23: #{basic_block_forward.8} parent=19 // pred_region
        %p150 = scmp.lt.s32.totalorder %s17, 1
        %s151 = scalar_select %p150, %s17, 1
        %s152 = smul.addr %s151, 20
        %s153 = smul.addr %s152, 4
        %s154 = scalar_lea.vmem %s0, %s153
      $region24: #{basic_block_forward.8} parent=19 // pred_fallthru
        _
    $region20: #{basic_block_forward.8} parent=5 // pred_fallthru
      _
    %p155 = scmp.le.s32.totalorder 1, %s10
    %p156 = scmp.lt.s32.totalorder %s10, 3
    %p157 = pnand %p155, %p156
    %p158 = pneg %p157
    // Predicated region
    $region25: #{basic_block_forward.8} parent=5 // pred_check
      _
    $region26: #{basic_block_forward.8} parent=5 // pred_check_branch
      %160 = sbr.rel (%p157) target = $region28
    $region27: #{basic_block_forward.8} parent=5 // pred_region
      %s161 = ssub.s32 %s10, 1
      %p162 = scmp.lt.s32.totalorder %s19, 1
      %s163 = scalar_select %p162, %s19, 1
      %s164 = smul.addr %s163, 20
      %s165 = smul.addr %s164, 4
      %s166 = scalar_lea.vmem %s0, %s165
      %p167 = pneg %p48
      %p168 = pneg %p45
      %p169 = pneg %p69
      %p170 = pneg %p66
      %p171 = pneg %p97
      %p172 = pneg %p94
      %p173 = scmp.lt.s32.totalorder %s19, 1
      %s174 = scalar_select %p173, %s19, 1
      %p175 = scmp.lt.s32.totalorder %s20, 0
      %s176 = scalar_select %p175, %s20, 0
      %s177 = smul.addr %s176, 8
      %s178 = smul.addr %s174, 8
      %s179 = sadd.s32 %s177, %s178
      %s180 = smul.addr %s179, 8
      %s181 = scalar_lea.vmem %s2, %s180
      %p182 = pneg %p125
      %p183 = pneg %p122
      %p184 = scmp.lt.s32.totalorder %s19, 1
      %s185 = scalar_select %p184, %s19, 1
      %p186 = scmp.lt.s32.totalorder %s20, 0
      %s187 = scalar_select %p186, %s20, 0
      %s188 = sadd.s32 %s187, %s185
      %s189 = smul.addr %s188, 2
      %s190 = scalar_lea.vmem %s3, %s189
      %p191 = scmp.lt.s32.totalorder %s19, 1
      %s192 = scalar_select %p191, %s19, 1
      %s193 = smul.addr %s192, 20
      %s194 = smul.addr %s193, 4
      %s195 = scalar_lea.vmem %s0, %s194
      %p196 = scmp.lt.s32.totalorder %s19, 1
      %s197 = scalar_select %p196, %s19, 1
      %p198 = scmp.lt.s32.totalorder %s20, 0
      %s199 = scalar_select %p198, %s20, 0
      %s200 = smul.addr %s199, 8
      %s201 = smul.addr %s197, 8
      %s202 = sadd.s32 %s200, %s201
      %s203 = smul.addr %s202, 8
      %s204 = scalar_lea.vmem %s2, %s203
      %p205 = scmp.lt.s32.totalorder %s19, 1
      %s206 = scalar_select %p205, %s19, 1
      %p207 = scmp.lt.s32.totalorder %s20, 0
      %s208 = scalar_select %p207, %s20, 0
      %s209 = sadd.s32 %s208, %s206
      %s210 = smul.addr %s209, 2
      %s211 = scalar_lea.vmem %s3, %s210
      %s213 = smul.u32 %s20, 8
      %s214 = smul.u32 %s213, 2
      %s215 = smul.addr %s214, 4
      %s216 = scalar_lea.vmem %s195, %s215
      %v217 = vld [vmem:[%s216] sm:$0xf]
      %v218 = vld [vmem:[%s216 + $0x8] sm:$0xf]
      %v219 = vld [vmem:[%s216 + $0x10] sm:$0xf]
      %v220 = vld [vmem:[%s216 + $0x18] sm:$0xf]
      %v221 = vld [vmem:[%s216 + $0x20] sm:$0xf]
      %v222 = vld [vmem:[%s216 + $0x28] sm:$0xf]
      %v223 = vld [vmem:[%s216 + $0x30] sm:$0xf]
      %v224 = vld [vmem:[%s216 + $0x38] sm:$0xf]
      %v225 = vld [vmem:[%s1] sm:$0xf]
      %v226 = vld [vmem:[%s1 + $0x4] sm:$0xf]
      %v227 = vld [vmem:[%s1 + $0x8] sm:$0xf]
      %v228 = vld [vmem:[%s1 + $0xc] sm:$0xf]
      %v229 = vld [vmem:[%s1 + $0x10] sm:$0xf]
      %v230 = vld [vmem:[%s1 + $0x14] sm:$0xf]
      %v231 = vld [vmem:[%s1 + $0x18] sm:$0xf]
      %v232 = vld [vmem:[%s1 + $0x1c] sm:$0xf]
      %v233 = vld [vmem:[%s1 + $0x20] sm:$0xf]
      %v234 = vld [vmem:[%s1 + $0x24] sm:$0xf]
      %v235 = vld [vmem:[%s1 + $0x28] sm:$0xf]
      %v236 = vld [vmem:[%s1 + $0x2c] sm:$0xf]
      %v237 = vld [vmem:[%s1 + $0x30] sm:$0xf]
      %v238 = vld [vmem:[%s1 + $0x34] sm:$0xf]
      %v239 = vld [vmem:[%s1 + $0x38] sm:$0xf]
      %v240 = vld [vmem:[%s1 + $0x3c] sm:$0xf]
      %v241 = vld [vmem:[%s216 + $0x4] sm:$0x1]
      %v242 = vld [vmem:[%s216 + $0xc] sm:$0x1]
      %v243 = vld [vmem:[%s216 + $0x14] sm:$0x1]
      %v244 = vld [vmem:[%s216 + $0x1c] sm:$0x1]
      %v245 = vld [vmem:[%s216 + $0x24] sm:$0x1]
      %v246 = vld [vmem:[%s216 + $0x2c] sm:$0x1]
      %v247 = vld [vmem:[%s216 + $0x34] sm:$0x1]
      %v248 = vld [vmem:[%s216 + $0x3c] sm:$0x1]
      %vm249 = vsmask.f32 3328
      %vm250 = vsmask.f32 7440
      %vm251 = vmor %vm249, %vm250
      %v253 = vshrl.u32 %v217, 16
      %v255 = vrot.slane %v253, 4
      %v256 = vshll.u32 %v217, 16
      %v258 = vrot.slane %v256, 5
      %v259 = vor.u32 %v255, %v258
      %v260 = vrot.slane %v259, 4
      %v262 = vshll.u32 %v241, 16
      %v264 = vrot.slane %v262, 5
      %v265 = vsel %vm251, %v260, %v264
      %v267 = vshrl.u32 %v218, 16
      %v269 = vrot.slane %v267, 4
      %v270 = vshll.u32 %v218, 16
      %v272 = vrot.slane %v270, 5
      %v273 = vor.u32 %v269, %v272
      %v274 = vrot.slane %v273, 4
      %v276 = vshll.u32 %v242, 16
      %v278 = vrot.slane %v276, 5
      %v279 = vsel %vm251, %v274, %v278
      %v281 = vshrl.u32 %v219, 16
      %v283 = vrot.slane %v281, 4
      %v284 = vshll.u32 %v219, 16
      %v286 = vrot.slane %v284, 5
      %v287 = vor.u32 %v283, %v286
      %v288 = vrot.slane %v287, 4
      %v290 = vshll.u32 %v243, 16
      %v292 = vrot.slane %v290, 5
      %v293 = vsel %vm251, %v288, %v292
      %v295 = vshrl.u32 %v220, 16
      %v297 = vrot.slane %v295, 4
      %v298 = vshll.u32 %v220, 16
      %v300 = vrot.slane %v298, 5
      %v301 = vor.u32 %v297, %v300
      %v302 = vrot.slane %v301, 4
      %v304 = vshll.u32 %v244, 16
      %v306 = vrot.slane %v304, 5
      %v307 = vsel %vm251, %v302, %v306
      %v309 = vshrl.u32 %v221, 16
      %v311 = vrot.slane %v309, 4
      %v312 = vshll.u32 %v221, 16
      %v314 = vrot.slane %v312, 5
      %v315 = vor.u32 %v311, %v314
      %v316 = vrot.slane %v315, 4
      %v318 = vshll.u32 %v245, 16
      %v320 = vrot.slane %v318, 5
      %v321 = vsel %vm251, %v316, %v320
      %v323 = vshrl.u32 %v222, 16
      %v325 = vrot.slane %v323, 4
      %v326 = vshll.u32 %v222, 16
      %v328 = vrot.slane %v326, 5
      %v329 = vor.u32 %v325, %v328
      %v330 = vrot.slane %v329, 4
      %v332 = vshll.u32 %v246, 16
      %v334 = vrot.slane %v332, 5
      %v335 = vsel %vm251, %v330, %v334
      %v337 = vshrl.u32 %v223, 16
      %v339 = vrot.slane %v337, 4
      %v340 = vshll.u32 %v223, 16
      %v342 = vrot.slane %v340, 5
      %v343 = vor.u32 %v339, %v342
      %v344 = vrot.slane %v343, 4
      %v346 = vshll.u32 %v247, 16
      %v348 = vrot.slane %v346, 5
      %v349 = vsel %vm251, %v344, %v348
      %v351 = vshrl.u32 %v224, 16
      %v353 = vrot.slane %v351, 4
      %v354 = vshll.u32 %v224, 16
      %v356 = vrot.slane %v354, 5
      %v357 = vor.u32 %v353, %v356
      %v358 = vrot.slane %v357, 4
      %v360 = vshll.u32 %v248, 16
      %v362 = vrot.slane %v360, 5
      %v363 = vsel %vm251, %v358, %v362
      %s364 = scalar_lea.vmem %s1, 64
      %v365 = vld [vmem:[%s364] sm:$0xf]
      %v366 = vld [vmem:[%s364 + $0x4] sm:$0xf]
      %v367 = vld [vmem:[%s364 + $0x8] sm:$0xf]
      %v368 = vld [vmem:[%s364 + $0xc] sm:$0xf]
      %v369 = vld [vmem:[%s364 + $0x10] sm:$0xf]
      %v370 = vld [vmem:[%s364 + $0x14] sm:$0xf]
      %v371 = vld [vmem:[%s364 + $0x18] sm:$0xf]
      %v372 = vld [vmem:[%s364 + $0x1c] sm:$0xf]
      %v373 = vld [vmem:[%s364 + $0x20] sm:$0xf]
      %v374 = vld [vmem:[%s364 + $0x24] sm:$0xf]
      %v375 = vld [vmem:[%s364 + $0x28] sm:$0xf]
      %v376 = vld [vmem:[%s364 + $0x2c] sm:$0xf]
      %v377 = vld [vmem:[%s364 + $0x30] sm:$0xf]
      %v378 = vld [vmem:[%s364 + $0x34] sm:$0xf]
      %v379 = vld [vmem:[%s364 + $0x38] sm:$0xf]
      %v380 = vld [vmem:[%s364 + $0x3c] sm:$0xf]
      %v381 = vunpack.c.l.b16 %v265
      %v382 = vunpack.c.l.b16 %v279
      %v383 = vunpack.c.l.b16 %v293
      %v384 = vunpack.c.l.b16 %v307
      %v385 = vunpack.c.l.b16 %v321
      %v386 = vunpack.c.l.b16 %v335
      %v387 = vunpack.c.l.b16 %v349
      %v388 = vunpack.c.l.b16 %v363
      %v389 = vpack.c.b16 %v382, %v381
      %v390 = vpack.c.b16 %v384, %v383
      %v391 = vpack.c.b16 %v386, %v385
      %v392 = vpack.c.b16 %v388, %v387
      %v413 = vunpack.c.l.b16 %v365
      %v414 = vunpack.c.l.b16 %v366
      %v415 = vunpack.c.l.b16 %v367
      %v416 = vunpack.c.l.b16 %v368
      %v417 = vunpack.c.l.b16 %v369
      %v418 = vunpack.c.l.b16 %v370
      %v419 = vunpack.c.l.b16 %v371
      %v420 = vunpack.c.l.b16 %v372
      %v421 = vunpack.c.l.b16 %v373
      %v422 = vunpack.c.l.b16 %v374
      %v423 = vunpack.c.l.b16 %v375
      %v424 = vunpack.c.l.b16 %v376
      %v425 = vunpack.c.l.b16 %v377
      %v426 = vunpack.c.l.b16 %v378
      %v427 = vunpack.c.l.b16 %v379
      %v428 = vunpack.c.l.b16 %v380
      %v429 = vpack.c.b16 %v414, %v413
      %v430 = vpack.c.b16 %v416, %v415
      %v431 = vpack.c.b16 %v418, %v417
      %v432 = vpack.c.b16 %v420, %v419
      %v433 = vpack.c.b16 %v422, %v421
      %v434 = vpack.c.b16 %v424, %v423
      %v435 = vpack.c.b16 %v426, %v425
      %v436 = vpack.c.b16 %v428, %v427
      %445 = vmatprep.subr.bf16.mxu0 0
      %446 = vmatpush1.bf16.msra.mxu0 %v436
      %447 = vmatprep.subr.bf16.mxu0 0
      %448 = vmatpush1.bf16.msra.mxu0 %v435
      %449 = vmatprep.subr.bf16.mxu0 0
      %450 = vmatpush1.bf16.msra.mxu0 %v434
      %451 = vmatprep.subr.bf16.mxu0 0
      %452 = vmatpush1.bf16.msra.mxu0 %v433
      %453 = vmatprep.subr.bf16.mxu0 0
      %454 = vmatpush1.bf16.msra.mxu0 %v432
      %455 = vmatprep.subr.bf16.mxu0 0
      %456 = vmatpush1.bf16.msra.mxu0 %v431
      %457 = vmatprep.subr.bf16.mxu0 0
      %458 = vmatpush1.bf16.msra.mxu0 %v430
      %459 = vmatprep.subr.bf16.mxu0 0
      %460 = vmatpush1.bf16.msra.mxu0 %v429
      %461 = vmatprep.subr.bf16.mxu0 0
      %462 = vmatpush2.bf16.msra.mxu0 0
      %463 = vmatprep.subr.bf16.mxu0 0
      %464 = vmatpush2.bf16.msra.mxu0 0
      %465 = vmatprep.subr.bf16.mxu0 0
      %466 = vmatpush2.bf16.msra.mxu0 0
      %467 = vmatprep.subr.bf16.mxu0 0
      %468 = vmatpush2.bf16.msra.mxu0 0
      %469 = vmatprep.subr.bf16.mxu0 0
      %470 = vmatpush2.bf16.msra.mxu0 0
      %471 = vmatprep.subr.bf16.mxu0 0
      %472 = vmatpush2.bf16.msra.mxu0 0
      %473 = vmatprep.subr.bf16.mxu0 0
      %474 = vmatpush2.bf16.msra.mxu0 0
      %475 = vmatprep.subr.bf16.mxu0 0
      %476 = vmatpush2.bf16.msra.mxu0 0
      %477 = vmatprep.mubr.bf16.mxu0 0
      %478 = vmatmul.mubr.bf16.gmra.mxu0 %v389
      %v479 = vpop.f32.mrf.mxu0
      %v480 = vadd.f32 0.0, %v479
      %v481 = vpop.f32.mrf.mxu0
      %v482 = vpop.f32.mrf.mxu0
      %v483 = vadd.f32 0.0, %v482
      %v484 = vpop.f32.mrf.mxu0
      %485 = vmatprep.mubr.bf16.mxu0 0
      %486 = vmatmul.mubr.bf16.gmra.mxu0 %v390
      %v487 = vpop.f32.mrf.mxu0
      %v488 = vadd.f32 0.0, %v487
      %v489 = vpop.f32.mrf.mxu0
      %v490 = vpop.f32.mrf.mxu0
      %v491 = vadd.f32 0.0, %v490
      %v492 = vpop.f32.mrf.mxu0
      %493 = vmatprep.mubr.bf16.mxu0 0
      %494 = vmatmul.mubr.bf16.gmra.mxu0 %v391
      %v495 = vpop.f32.mrf.mxu0
      %v496 = vadd.f32 0.0, %v495
      %v497 = vpop.f32.mrf.mxu0
      %v498 = vpop.f32.mrf.mxu0
      %v499 = vadd.f32 0.0, %v498
      %v500 = vpop.f32.mrf.mxu0
      %501 = vmatprep.mubr.bf16.mxu0 0
      %502 = vmatmul.mubr.bf16.gmra.mxu0 %v392
      %v503 = vpop.f32.mrf.mxu0
      %v504 = vadd.f32 0.0, %v503
      %v505 = vpop.f32.mrf.mxu0
      %v506 = vpop.f32.mrf.mxu0
      %v507 = vadd.f32 0.0, %v506
      %v508 = vpop.f32.mrf.mxu0
      %509 = vdwg.mxu0
      %v518 = vunpack.c.l.b16 %v217
      %v519 = vunpack.c.l.b16 %v218
      %v520 = vunpack.c.l.b16 %v219
      %v521 = vunpack.c.l.b16 %v220
      %v522 = vunpack.c.l.b16 %v221
      %v523 = vunpack.c.l.b16 %v222
      %v524 = vunpack.c.l.b16 %v223
      %v525 = vunpack.c.l.b16 %v224
      %v526 = vpack.c.b16 %v519, %v518
      %v527 = vpack.c.b16 %v521, %v520
      %v528 = vpack.c.b16 %v523, %v522
      %v529 = vpack.c.b16 %v525, %v524
      %v550 = vunpack.c.l.b16 %v225
      %v551 = vunpack.c.l.b16 %v226
      %v552 = vunpack.c.l.b16 %v227
      %v553 = vunpack.c.l.b16 %v228
      %v554 = vunpack.c.l.b16 %v229
      %v555 = vunpack.c.l.b16 %v230
      %v556 = vunpack.c.l.b16 %v231
      %v557 = vunpack.c.l.b16 %v232
      %v558 = vunpack.c.l.b16 %v233
      %v559 = vunpack.c.l.b16 %v234
      %v560 = vunpack.c.l.b16 %v235
      %v561 = vunpack.c.l.b16 %v236
      %v562 = vunpack.c.l.b16 %v237
      %v563 = vunpack.c.l.b16 %v238
      %v564 = vunpack.c.l.b16 %v239
      %v565 = vunpack.c.l.b16 %v240
      %v566 = vpack.c.b16 %v551, %v550
      %v567 = vpack.c.b16 %v553, %v552
      %v568 = vpack.c.b16 %v555, %v554
      %v569 = vpack.c.b16 %v557, %v556
      %v570 = vpack.c.b16 %v559, %v558
      %v571 = vpack.c.b16 %v561, %v560
      %v572 = vpack.c.b16 %v563, %v562
      %v573 = vpack.c.b16 %v565, %v564
      %582 = vmatprep.subr.bf16.mxu0 0
      %583 = vmatpush1.bf16.msra.mxu0 %v573
      %584 = vmatprep.subr.bf16.mxu0 0
      %585 = vmatpush1.bf16.msra.mxu0 %v572
      %586 = vmatprep.subr.bf16.mxu0 0
      %587 = vmatpush1.bf16.msra.mxu0 %v571
      %588 = vmatprep.subr.bf16.mxu0 0
      %589 = vmatpush1.bf16.msra.mxu0 %v570
      %590 = vmatprep.subr.bf16.mxu0 0
      %591 = vmatpush1.bf16.msra.mxu0 %v569
      %592 = vmatprep.subr.bf16.mxu0 0
      %593 = vmatpush1.bf16.msra.mxu0 %v568
      %594 = vmatprep.subr.bf16.mxu0 0
      %595 = vmatpush1.bf16.msra.mxu0 %v567
      %596 = vmatprep.subr.bf16.mxu0 0
      %597 = vmatpush1.bf16.msra.mxu0 %v566
      %598 = vmatprep.subr.bf16.mxu0 0
      %599 = vmatpush2.bf16.msra.mxu0 0
      %600 = vmatprep.subr.bf16.mxu0 0
      %601 = vmatpush2.bf16.msra.mxu0 0
      %602 = vmatprep.subr.bf16.mxu0 0
      %603 = vmatpush2.bf16.msra.mxu0 0
      %604 = vmatprep.subr.bf16.mxu0 0
      %605 = vmatpush2.bf16.msra.mxu0 0
      %606 = vmatprep.subr.bf16.mxu0 0
      %607 = vmatpush2.bf16.msra.mxu0 0
      %608 = vmatprep.subr.bf16.mxu0 0
      %609 = vmatpush2.bf16.msra.mxu0 0
      %610 = vmatprep.subr.bf16.mxu0 0
      %611 = vmatpush2.bf16.msra.mxu0 0
      %612 = vmatprep.subr.bf16.mxu0 0
      %613 = vmatpush2.bf16.msra.mxu0 0
      %614 = vmatprep.mubr.bf16.mxu0 0
      %615 = vmatmul.mubr.bf16.gmra.mxu0 %v526
      %v616 = vpop.f32.mrf.mxu0
      %v617 = vadd.f32 %v480, %v616
      %v618 = vpop.f32.mrf.mxu0
      %v619 = vpop.f32.mrf.mxu0
      %v620 = vadd.f32 %v483, %v619
      %v621 = vpop.f32.mrf.mxu0
      %622 = vmatprep.mubr.bf16.mxu0 0
      %623 = vmatmul.mubr.bf16.gmra.mxu0 %v527
      %v624 = vpop.f32.mrf.mxu0
      %v625 = vadd.f32 %v488, %v624
      %v626 = vpop.f32.mrf.mxu0
      %v627 = vpop.f32.mrf.mxu0
      %v628 = vadd.f32 %v491, %v627
      %v629 = vpop.f32.mrf.mxu0
      %630 = vmatprep.mubr.bf16.mxu0 0
      %631 = vmatmul.mubr.bf16.gmra.mxu0 %v528
      %v632 = vpop.f32.mrf.mxu0
      %v633 = vadd.f32 %v496, %v632
      %v634 = vpop.f32.mrf.mxu0
      %v635 = vpop.f32.mrf.mxu0
      %v636 = vadd.f32 %v499, %v635
      %v637 = vpop.f32.mrf.mxu0
      %638 = vmatprep.mubr.bf16.mxu0 0
      %639 = vmatmul.mubr.bf16.gmra.mxu0 %v529
      %v640 = vpop.f32.mrf.mxu0
      %v641 = vadd.f32 %v504, %v640
      %v642 = vpop.f32.mrf.mxu0
      %v643 = vpop.f32.mrf.mxu0
      %v644 = vadd.f32 %v507, %v643
      %v645 = vpop.f32.mrf.mxu0
      %646 = vdwg.mxu0
      %v647 = vld [vmem:[%s216] sm:$0xe]
      %v648 = vld [vmem:[%s216 + $0x8] sm:$0xe]
      %v649 = vld [vmem:[%s216 + $0x10] sm:$0xe]
      %v650 = vld [vmem:[%s216 + $0x18] sm:$0xe]
      %v651 = vld [vmem:[%s216 + $0x20] sm:$0xe]
      %v652 = vld [vmem:[%s216 + $0x28] sm:$0xe]
      %v653 = vld [vmem:[%s216 + $0x30] sm:$0xe]
      %v654 = vld [vmem:[%s216 + $0x38] sm:$0xe]
      %vm671 = vcmask 1042432
      %vm672 = vcmask 1046532
      %vm673 = vmor %vm671, %vm672
      %v674 = vrot.slane %v647, 5
      %v675 = vrot.slane %v674, 4
      %v676 = vrot.slane %v241, 5
      %v677 = vsel %vm673, %v675, %v676
      %v678 = vrot.slane %v648, 5
      %v679 = vrot.slane %v678, 4
      %v680 = vrot.slane %v242, 5
      %v681 = vsel %vm673, %v679, %v680
      %v682 = vrot.slane %v649, 5
      %v683 = vrot.slane %v682, 4
      %v684 = vrot.slane %v243, 5
      %v685 = vsel %vm673, %v683, %v684
      %v686 = vrot.slane %v650, 5
      %v687 = vrot.slane %v686, 4
      %v688 = vrot.slane %v244, 5
      %v689 = vsel %vm673, %v687, %v688
      %v690 = vrot.slane %v651, 5
      %v691 = vrot.slane %v690, 4
      %v692 = vrot.slane %v245, 5
      %v693 = vsel %vm673, %v691, %v692
      %v694 = vrot.slane %v652, 5
      %v695 = vrot.slane %v694, 4
      %v696 = vrot.slane %v246, 5
      %v697 = vsel %vm673, %v695, %v696
      %v698 = vrot.slane %v653, 5
      %v699 = vrot.slane %v698, 4
      %v700 = vrot.slane %v247, 5
      %v701 = vsel %vm673, %v699, %v700
      %v702 = vrot.slane %v654, 5
      %v703 = vrot.slane %v702, 4
      %v704 = vrot.slane %v248, 5
      %v705 = vsel %vm673, %v703, %v704
      %s706 = scalar_lea.vmem %s1, 128
      %v707 = vld [vmem:[%s706] sm:$0xf]
      %v708 = vld [vmem:[%s706 + $0x4] sm:$0xf]
      %v709 = vld [vmem:[%s706 + $0x8] sm:$0xf]
      %v710 = vld [vmem:[%s706 + $0xc] sm:$0xf]
      %v711 = vld [vmem:[%s706 + $0x10] sm:$0xf]
      %v712 = vld [vmem:[%s706 + $0x14] sm:$0xf]
      %v713 = vld [vmem:[%s706 + $0x18] sm:$0xf]
      %v714 = vld [vmem:[%s706 + $0x1c] sm:$0xf]
      %v715 = vld [vmem:[%s706 + $0x20] sm:$0xf]
      %v716 = vld [vmem:[%s706 + $0x24] sm:$0xf]
      %v717 = vld [vmem:[%s706 + $0x28] sm:$0xf]
      %v718 = vld [vmem:[%s706 + $0x2c] sm:$0xf]
      %v719 = vld [vmem:[%s706 + $0x30] sm:$0xf]
      %v720 = vld [vmem:[%s706 + $0x34] sm:$0xf]
      %v721 = vld [vmem:[%s706 + $0x38] sm:$0xf]
      %v722 = vld [vmem:[%s706 + $0x3c] sm:$0xf]
      %v723 = vunpack.c.l.b16 %v677
      %v724 = vunpack.c.l.b16 %v681
      %v725 = vunpack.c.l.b16 %v685
      %v726 = vunpack.c.l.b16 %v689
      %v727 = vunpack.c.l.b16 %v693
      %v728 = vunpack.c.l.b16 %v697
      %v729 = vunpack.c.l.b16 %v701
      %v730 = vunpack.c.l.b16 %v705
      %v731 = vpack.c.b16 %v724, %v723
      %v732 = vpack.c.b16 %v726, %v725
      %v733 = vpack.c.b16 %v728, %v727
      %v734 = vpack.c.b16 %v730, %v729
      %v755 = vunpack.c.l.b16 %v707
      %v756 = vunpack.c.l.b16 %v708
      %v757 = vunpack.c.l.b16 %v709
      %v758 = vunpack.c.l.b16 %v710
      %v759 = vunpack.c.l.b16 %v711
      %v760 = vunpack.c.l.b16 %v712
      %v761 = vunpack.c.l.b16 %v713
      %v762 = vunpack.c.l.b16 %v714
      %v763 = vunpack.c.l.b16 %v715
      %v764 = vunpack.c.l.b16 %v716
      %v765 = vunpack.c.l.b16 %v717
      %v766 = vunpack.c.l.b16 %v718
      %v767 = vunpack.c.l.b16 %v719
      %v768 = vunpack.c.l.b16 %v720
      %v769 = vunpack.c.l.b16 %v721
      %v770 = vunpack.c.l.b16 %v722
      %v771 = vpack.c.b16 %v756, %v755
      %v772 = vpack.c.b16 %v758, %v757
      %v773 = vpack.c.b16 %v760, %v759
      %v774 = vpack.c.b16 %v762, %v761
      %v775 = vpack.c.b16 %v764, %v763
      %v776 = vpack.c.b16 %v766, %v765
      %v777 = vpack.c.b16 %v768, %v767
      %v778 = vpack.c.b16 %v770, %v769
      %787 = vmatprep.subr.bf16.mxu0 0
      %788 = vmatpush1.bf16.msra.mxu0 %v778
      %789 = vmatprep.subr.bf16.mxu0 0
      %790 = vmatpush1.bf16.msra.mxu0 %v777
      %791 = vmatprep.subr.bf16.mxu0 0
      %792 = vmatpush1.bf16.msra.mxu0 %v776
      %793 = vmatprep.subr.bf16.mxu0 0
      %794 = vmatpush1.bf16.msra.mxu0 %v775
      %795 = vmatprep.subr.bf16.mxu0 0
      %796 = vmatpush1.bf16.msra.mxu0 %v774
      %797 = vmatprep.subr.bf16.mxu0 0
      %798 = vmatpush1.bf16.msra.mxu0 %v773
      %799 = vmatprep.subr.bf16.mxu0 0
      %800 = vmatpush1.bf16.msra.mxu0 %v772
      %801 = vmatprep.subr.bf16.mxu0 0
      %802 = vmatpush1.bf16.msra.mxu0 %v771
      %803 = vmatprep.subr.bf16.mxu0 0
      %804 = vmatpush2.bf16.msra.mxu0 0
      %805 = vmatprep.subr.bf16.mxu0 0
      %806 = vmatpush2.bf16.msra.mxu0 0
      %807 = vmatprep.subr.bf16.mxu0 0
      %808 = vmatpush2.bf16.msra.mxu0 0
      %809 = vmatprep.subr.bf16.mxu0 0
      %810 = vmatpush2.bf16.msra.mxu0 0
      %811 = vmatprep.subr.bf16.mxu0 0
      %812 = vmatpush2.bf16.msra.mxu0 0
      %813 = vmatprep.subr.bf16.mxu0 0
      %814 = vmatpush2.bf16.msra.mxu0 0
      %815 = vmatprep.subr.bf16.mxu0 0
      %816 = vmatpush2.bf16.msra.mxu0 0
      %817 = vmatprep.subr.bf16.mxu0 0
      %818 = vmatpush2.bf16.msra.mxu0 0
      %819 = vmatprep.mubr.bf16.mxu0 0
      %820 = vmatmul.mubr.bf16.gmra.mxu0 %v731
      %v821 = vpop.f32.mrf.mxu0
      %v822 = vadd.f32 0.0, %v821
      %v823 = vpop.f32.mrf.mxu0
      %v824 = vpop.f32.mrf.mxu0
      %v825 = vadd.f32 0.0, %v824
      %v826 = vpop.f32.mrf.mxu0
      %827 = vmatprep.mubr.bf16.mxu0 0
      %828 = vmatmul.mubr.bf16.gmra.mxu0 %v732
      %v829 = vpop.f32.mrf.mxu0
      %v830 = vadd.f32 0.0, %v829
      %v831 = vpop.f32.mrf.mxu0
      %v832 = vpop.f32.mrf.mxu0
      %v833 = vadd.f32 0.0, %v832
      %v834 = vpop.f32.mrf.mxu0
      %835 = vmatprep.mubr.bf16.mxu0 0
      %836 = vmatmul.mubr.bf16.gmra.mxu0 %v733
      %v837 = vpop.f32.mrf.mxu0
      %v838 = vadd.f32 0.0, %v837
      %v839 = vpop.f32.mrf.mxu0
      %v840 = vpop.f32.mrf.mxu0
      %v841 = vadd.f32 0.0, %v840
      %v842 = vpop.f32.mrf.mxu0
      %843 = vmatprep.mubr.bf16.mxu0 0
      %844 = vmatmul.mubr.bf16.gmra.mxu0 %v734
      %v845 = vpop.f32.mrf.mxu0
      %v846 = vadd.f32 0.0, %v845
      %v847 = vpop.f32.mrf.mxu0
      %v848 = vpop.f32.mrf.mxu0
      %v849 = vadd.f32 0.0, %v848
      %v850 = vpop.f32.mrf.mxu0
      %851 = vdwg.mxu0
      %v852 = vadd.f32 %v617, %v822
      %v853 = vadd.f32 %v620, %v825
      %v854 = vadd.f32 %v625, %v830
      %v855 = vadd.f32 %v628, %v833
      %v856 = vadd.f32 %v633, %v838
      %v857 = vadd.f32 %v636, %v841
      %v858 = vadd.f32 %v641, %v846
      %v859 = vadd.f32 %v644, %v849
      %s860 = sadd.s32 %s213, 1
      %s861 = smul.u32 %s860, 2
      %s862 = smul.addr %s861, 4
      %s863 = scalar_lea.vmem %s195, %s862
      %v864 = vld [vmem:[%s863] sm:$0xf]
      %v865 = vld [vmem:[%s863 + $0x8] sm:$0xf]
      %v866 = vld [vmem:[%s863 + $0x10] sm:$0xf]
      %v867 = vld [vmem:[%s863 + $0x18] sm:$0xf]
      %v868 = vld [vmem:[%s863 + $0x20] sm:$0xf]
      %v869 = vld [vmem:[%s863 + $0x28] sm:$0xf]
      %v870 = vld [vmem:[%s863 + $0x30] sm:$0xf]
      %v871 = vld [vmem:[%s863 + $0x38] sm:$0xf]
      %s872 = scalar_lea.vmem %s1, 192
      %v873 = vld [vmem:[%s872] sm:$0xf]
      %v874 = vld [vmem:[%s872 + $0x4] sm:$0xf]
      %v875 = vld [vmem:[%s872 + $0x8] sm:$0xf]
      %v876 = vld [vmem:[%s872 + $0xc] sm:$0xf]
      %v877 = vld [vmem:[%s872 + $0x10] sm:$0xf]
      %v878 = vld [vmem:[%s872 + $0x14] sm:$0xf]
      %v879 = vld [vmem:[%s872 + $0x18] sm:$0xf]
      %v880 = vld [vmem:[%s872 + $0x1c] sm:$0xf]
      %v881 = vld [vmem:[%s872 + $0x20] sm:$0xf]
      %v882 = vld [vmem:[%s872 + $0x24] sm:$0xf]
      %v883 = vld [vmem:[%s872 + $0x28] sm:$0xf]
      %v884 = vld [vmem:[%s872 + $0x2c] sm:$0xf]
      %v885 = vld [vmem:[%s872 + $0x30] sm:$0xf]
      %v886 = vld [vmem:[%s872 + $0x34] sm:$0xf]
      %v887 = vld [vmem:[%s872 + $0x38] sm:$0xf]
      %v888 = vld [vmem:[%s872 + $0x3c] sm:$0xf]
      %v897 = vunpack.c.l.b16 %v864
      %v898 = vunpack.c.l.b16 %v865
      %v899 = vunpack.c.l.b16 %v866
      %v900 = vunpack.c.l.b16 %v867
      %v901 = vunpack.c.l.b16 %v868
      %v902 = vunpack.c.l.b16 %v869
      %v903 = vunpack.c.l.b16 %v870
      %v904 = vunpack.c.l.b16 %v871
      %v905 = vpack.c.b16 %v898, %v897
      %v906 = vpack.c.b16 %v900, %v899
      %v907 = vpack.c.b16 %v902, %v901
      %v908 = vpack.c.b16 %v904, %v903
      %v929 = vunpack.c.l.b16 %v873
      %v930 = vunpack.c.l.b16 %v874
      %v931 = vunpack.c.l.b16 %v875
      %v932 = vunpack.c.l.b16 %v876
      %v933 = vunpack.c.l.b16 %v877
      %v934 = vunpack.c.l.b16 %v878
      %v935 = vunpack.c.l.b16 %v879
      %v936 = vunpack.c.l.b16 %v880
      %v937 = vunpack.c.l.b16 %v881
      %v938 = vunpack.c.l.b16 %v882
      %v939 = vunpack.c.l.b16 %v883
      %v940 = vunpack.c.l.b16 %v884
      %v941 = vunpack.c.l.b16 %v885
      %v942 = vunpack.c.l.b16 %v886
      %v943 = vunpack.c.l.b16 %v887
      %v944 = vunpack.c.l.b16 %v888
      %v945 = vpack.c.b16 %v930, %v929
      %v946 = vpack.c.b16 %v932, %v931
      %v947 = vpack.c.b16 %v934, %v933
      %v948 = vpack.c.b16 %v936, %v935
      %v949 = vpack.c.b16 %v938, %v937
      %v950 = vpack.c.b16 %v940, %v939
      %v951 = vpack.c.b16 %v942, %v941
      %v952 = vpack.c.b16 %v944, %v943
      %961 = vmatprep.subr.bf16.mxu0 0
      %962 = vmatpush1.bf16.msra.mxu0 %v952
      %963 = vmatprep.subr.bf16.mxu0 0
      %964 = vmatpush1.bf16.msra.mxu0 %v951
      %965 = vmatprep.subr.bf16.mxu0 0
      %966 = vmatpush1.bf16.msra.mxu0 %v950
      %967 = vmatprep.subr.bf16.mxu0 0
      %968 = vmatpush1.bf16.msra.mxu0 %v949
      %969 = vmatprep.subr.bf16.mxu0 0
      %970 = vmatpush1.bf16.msra.mxu0 %v948
      %971 = vmatprep.subr.bf16.mxu0 0
      %972 = vmatpush1.bf16.msra.mxu0 %v947
      %973 = vmatprep.subr.bf16.mxu0 0
      %974 = vmatpush1.bf16.msra.mxu0 %v946
      %975 = vmatprep.subr.bf16.mxu0 0
      %976 = vmatpush1.bf16.msra.mxu0 %v945
      %977 = vmatprep.subr.bf16.mxu0 0
      %978 = vmatpush2.bf16.msra.mxu0 0
      %979 = vmatprep.subr.bf16.mxu0 0
      %980 = vmatpush2.bf16.msra.mxu0 0
      %981 = vmatprep.subr.bf16.mxu0 0
      %982 = vmatpush2.bf16.msra.mxu0 0
      %983 = vmatprep.subr.bf16.mxu0 0
      %984 = vmatpush2.bf16.msra.mxu0 0
      %985 = vmatprep.subr.bf16.mxu0 0
      %986 = vmatpush2.bf16.msra.mxu0 0
      %987 = vmatprep.subr.bf16.mxu0 0
      %988 = vmatpush2.bf16.msra.mxu0 0
      %989 = vmatprep.subr.bf16.mxu0 0
      %990 = vmatpush2.bf16.msra.mxu0 0
      %991 = vmatprep.subr.bf16.mxu0 0
      %992 = vmatpush2.bf16.msra.mxu0 0
      %993 = vmatprep.mubr.bf16.mxu0 0
      %994 = vmatmul.mubr.bf16.gmra.mxu0 %v905
      %v995 = vpop.f32.mrf.mxu0
      %v996 = vadd.f32 0.0, %v995
      %v997 = vpop.f32.mrf.mxu0
      %v998 = vpop.f32.mrf.mxu0
      %v999 = vadd.f32 0.0, %v998
      %v1000 = vpop.f32.mrf.mxu0
      %1001 = vmatprep.mubr.bf16.mxu0 0
      %1002 = vmatmul.mubr.bf16.gmra.mxu0 %v906
      %v1003 = vpop.f32.mrf.mxu0
      %v1004 = vadd.f32 0.0, %v1003
      %v1005 = vpop.f32.mrf.mxu0
      %v1006 = vpop.f32.mrf.mxu0
      %v1007 = vadd.f32 0.0, %v1006
      %v1008 = vpop.f32.mrf.mxu0
      %1009 = vmatprep.mubr.bf16.mxu0 0
      %1010 = vmatmul.mubr.bf16.gmra.mxu0 %v907
      %v1011 = vpop.f32.mrf.mxu0
      %v1012 = vadd.f32 0.0, %v1011
      %v1013 = vpop.f32.mrf.mxu0
      %v1014 = vpop.f32.mrf.mxu0
      %v1015 = vadd.f32 0.0, %v1014
      %v1016 = vpop.f32.mrf.mxu0
      %1017 = vmatprep.mubr.bf16.mxu0 0
      %1018 = vmatmul.mubr.bf16.gmra.mxu0 %v908
      %v1019 = vpop.f32.mrf.mxu0
      %v1020 = vadd.f32 0.0, %v1019
      %v1021 = vpop.f32.mrf.mxu0
      %v1022 = vpop.f32.mrf.mxu0
      %v1023 = vadd.f32 0.0, %v1022
      %v1024 = vpop.f32.mrf.mxu0
      %1025 = vdwg.mxu0
      %v1026 = vadd.f32 %v852, %v996
      %v1027 = vadd.f32 %v853, %v999
      %v1028 = vadd.f32 %v854, %v1004
      %v1029 = vadd.f32 %v855, %v1007
      %v1030 = vadd.f32 %v856, %v1012
      %v1031 = vadd.f32 %v857, %v1015
      %v1032 = vadd.f32 %v858, %v1020
      %v1033 = vadd.f32 %v859, %v1023
      %v1034 = vld [vmem:[%s863] sm:$0xf]
      %v1035 = vld [vmem:[%s863 + $0x4] sm:$0x1]
      %v1036 = vld [vmem:[%s863 + $0x8] sm:$0xf]
      %v1037 = vld [vmem:[%s863 + $0xc] sm:$0x1]
      %v1038 = vld [vmem:[%s863 + $0x10] sm:$0xf]
      %v1039 = vld [vmem:[%s863 + $0x14] sm:$0x1]
      %v1040 = vld [vmem:[%s863 + $0x18] sm:$0xf]
      %v1041 = vld [vmem:[%s863 + $0x1c] sm:$0x1]
      %v1042 = vld [vmem:[%s863 + $0x20] sm:$0xf]
      %v1043 = vld [vmem:[%s863 + $0x24] sm:$0x1]
      %v1044 = vld [vmem:[%s863 + $0x28] sm:$0xf]
      %v1045 = vld [vmem:[%s863 + $0x2c] sm:$0x1]
      %v1046 = vld [vmem:[%s863 + $0x30] sm:$0xf]
      %v1047 = vld [vmem:[%s863 + $0x34] sm:$0x1]
      %v1048 = vld [vmem:[%s863 + $0x38] sm:$0xf]
      %v1049 = vld [vmem:[%s863 + $0x3c] sm:$0x1]
      %v1051 = vshrl.u32 %v1034, 16
      %v1053 = vrot.slane %v1051, 4
      %v1054 = vshll.u32 %v1034, 16
      %v1056 = vrot.slane %v1054, 5
      %v1057 = vor.u32 %v1053, %v1056
      %v1058 = vrot.slane %v1057, 4
      %v1060 = vshll.u32 %v1035, 16
      %v1062 = vrot.slane %v1060, 5
      %v1063 = vsel %vm251, %v1058, %v1062
      %v1065 = vshrl.u32 %v1036, 16
      %v1067 = vrot.slane %v1065, 4
      %v1068 = vshll.u32 %v1036, 16
      %v1070 = vrot.slane %v1068, 5
      %v1071 = vor.u32 %v1067, %v1070
      %v1072 = vrot.slane %v1071, 4
      %v1074 = vshll.u32 %v1037, 16
      %v1076 = vrot.slane %v1074, 5
      %v1077 = vsel %vm251, %v1072, %v1076
      %v1079 = vshrl.u32 %v1038, 16
      %v1081 = vrot.slane %v1079, 4
      %v1082 = vshll.u32 %v1038, 16
      %v1084 = vrot.slane %v1082, 5
      %v1085 = vor.u32 %v1081, %v1084
      %v1086 = vrot.slane %v1085, 4
      %v1088 = vshll.u32 %v1039, 16
      %v1090 = vrot.slane %v1088, 5
      %v1091 = vsel %vm251, %v1086, %v1090
      %v1093 = vshrl.u32 %v1040, 16
      %v1095 = vrot.slane %v1093, 4
      %v1096 = vshll.u32 %v1040, 16
      %v1098 = vrot.slane %v1096, 5
      %v1099 = vor.u32 %v1095, %v1098
      %v1100 = vrot.slane %v1099, 4
      %v1102 = vshll.u32 %v1041, 16
      %v1104 = vrot.slane %v1102, 5
      %v1105 = vsel %vm251, %v1100, %v1104
      %v1107 = vshrl.u32 %v1042, 16
      %v1109 = vrot.slane %v1107, 4
      %v1110 = vshll.u32 %v1042, 16
      %v1112 = vrot.slane %v1110, 5
      %v1113 = vor.u32 %v1109, %v1112
      %v1114 = vrot.slane %v1113, 4
      %v1116 = vshll.u32 %v1043, 16
      %v1118 = vrot.slane %v1116, 5
      %v1119 = vsel %vm251, %v1114, %v1118
      %v1121 = vshrl.u32 %v1044, 16
      %v1123 = vrot.slane %v1121, 4
      %v1124 = vshll.u32 %v1044, 16
      %v1126 = vrot.slane %v1124, 5
      %v1127 = vor.u32 %v1123, %v1126
      %v1128 = vrot.slane %v1127, 4
      %v1130 = vshll.u32 %v1045, 16
      %v1132 = vrot.slane %v1130, 5
      %v1133 = vsel %vm251, %v1128, %v1132
      %v1135 = vshrl.u32 %v1046, 16
      %v1137 = vrot.slane %v1135, 4
      %v1138 = vshll.u32 %v1046, 16
      %v1140 = vrot.slane %v1138, 5
      %v1141 = vor.u32 %v1137, %v1140
      %v1142 = vrot.slane %v1141, 4
      %v1144 = vshll.u32 %v1047, 16
      %v1146 = vrot.slane %v1144, 5
      %v1147 = vsel %vm251, %v1142, %v1146
      %v1149 = vshrl.u32 %v1048, 16
      %v1151 = vrot.slane %v1149, 4
      %v1152 = vshll.u32 %v1048, 16
      %v1154 = vrot.slane %v1152, 5
      %v1155 = vor.u32 %v1151, %v1154
      %v1156 = vrot.slane %v1155, 4
      %v1158 = vshll.u32 %v1049, 16
      %v1160 = vrot.slane %v1158, 5
      %v1161 = vsel %vm251, %v1156, %v1160
      %s1162 = scalar_lea.vmem %s1, 256
      %v1163 = vld [vmem:[%s1162] sm:$0xf]
      %v1164 = vld [vmem:[%s1162 + $0x4] sm:$0xf]
      %v1165 = vld [vmem:[%s1162 + $0x8] sm:$0xf]
      %v1166 = vld [vmem:[%s1162 + $0xc] sm:$0xf]
      %v1167 = vld [vmem:[%s1162 + $0x10] sm:$0xf]
      %v1168 = vld [vmem:[%s1162 + $0x14] sm:$0xf]
      %v1169 = vld [vmem:[%s1162 + $0x18] sm:$0xf]
      %v1170 = vld [vmem:[%s1162 + $0x1c] sm:$0xf]
      %v1171 = vld [vmem:[%s1162 + $0x20] sm:$0xf]
      %v1172 = vld [vmem:[%s1162 + $0x24] sm:$0xf]
      %v1173 = vld [vmem:[%s1162 + $0x28] sm:$0xf]
      %v1174 = vld [vmem:[%s1162 + $0x2c] sm:$0xf]
      %v1175 = vld [vmem:[%s1162 + $0x30] sm:$0xf]
      %v1176 = vld [vmem:[%s1162 + $0x34] sm:$0xf]
      %v1177 = vld [vmem:[%s1162 + $0x38] sm:$0xf]
      %v1178 = vld [vmem:[%s1162 + $0x3c] sm:$0xf]
      %v1179 = vunpack.c.l.b16 %v1063
      %v1180 = vunpack.c.l.b16 %v1077
      %v1181 = vunpack.c.l.b16 %v1091
      %v1182 = vunpack.c.l.b16 %v1105
      %v1183 = vunpack.c.l.b16 %v1119
      %v1184 = vunpack.c.l.b16 %v1133
      %v1185 = vunpack.c.l.b16 %v1147
      %v1186 = vunpack.c.l.b16 %v1161
      %v1187 = vpack.c.b16 %v1180, %v1179
      %v1188 = vpack.c.b16 %v1182, %v1181
      %v1189 = vpack.c.b16 %v1184, %v1183
      %v1190 = vpack.c.b16 %v1186, %v1185
      %v1211 = vunpack.c.l.b16 %v1163
      %v1212 = vunpack.c.l.b16 %v1164
      %v1213 = vunpack.c.l.b16 %v1165
      %v1214 = vunpack.c.l.b16 %v1166
      %v1215 = vunpack.c.l.b16 %v1167
      %v1216 = vunpack.c.l.b16 %v1168
      %v1217 = vunpack.c.l.b16 %v1169
      %v1218 = vunpack.c.l.b16 %v1170
      %v1219 = vunpack.c.l.b16 %v1171
      %v1220 = vunpack.c.l.b16 %v1172
      %v1221 = vunpack.c.l.b16 %v1173
      %v1222 = vunpack.c.l.b16 %v1174
      %v1223 = vunpack.c.l.b16 %v1175
      %v1224 = vunpack.c.l.b16 %v1176
      %v1225 = vunpack.c.l.b16 %v1177
      %v1226 = vunpack.c.l.b16 %v1178
      %v1227 = vpack.c.b16 %v1212, %v1211
      %v1228 = vpack.c.b16 %v1214, %v1213
      %v1229 = vpack.c.b16 %v1216, %v1215
      %v1230 = vpack.c.b16 %v1218, %v1217
      %v1231 = vpack.c.b16 %v1220, %v1219
      %v1232 = vpack.c.b16 %v1222, %v1221
      %v1233 = vpack.c.b16 %v1224, %v1223
      %v1234 = vpack.c.b16 %v1226, %v1225
      %1243 = vmatprep.subr.bf16.mxu0 0
      %1244 = vmatpush1.bf16.msra.mxu0 %v1234
      %1245 = vmatprep.subr.bf16.mxu0 0
      %1246 = vmatpush1.bf16.msra.mxu0 %v1233
      %1247 = vmatprep.subr.bf16.mxu0 0
      %1248 = vmatpush1.bf16.msra.mxu0 %v1232
      %1249 = vmatprep.subr.bf16.mxu0 0
      %1250 = vmatpush1.bf16.msra.mxu0 %v1231
      %1251 = vmatprep.subr.bf16.mxu0 0
      %1252 = vmatpush1.bf16.msra.mxu0 %v1230
      %1253 = vmatprep.subr.bf16.mxu0 0
      %1254 = vmatpush1.bf16.msra.mxu0 %v1229
      %1255 = vmatprep.subr.bf16.mxu0 0
      %1256 = vmatpush1.bf16.msra.mxu0 %v1228
      %1257 = vmatprep.subr.bf16.mxu0 0
      %1258 = vmatpush1.bf16.msra.mxu0 %v1227
      %1259 = vmatprep.subr.bf16.mxu0 0
      %1260 = vmatpush2.bf16.msra.mxu0 0
      %1261 = vmatprep.subr.bf16.mxu0 0
      %1262 = vmatpush2.bf16.msra.mxu0 0
      %1263 = vmatprep.subr.bf16.mxu0 0
      %1264 = vmatpush2.bf16.msra.mxu0 0
      %1265 = vmatprep.subr.bf16.mxu0 0
      %1266 = vmatpush2.bf16.msra.mxu0 0
      %1267 = vmatprep.subr.bf16.mxu0 0
      %1268 = vmatpush2.bf16.msra.mxu0 0
      %1269 = vmatprep.subr.bf16.mxu0 0
      %1270 = vmatpush2.bf16.msra.mxu0 0
      %1271 = vmatprep.subr.bf16.mxu0 0
      %1272 = vmatpush2.bf16.msra.mxu0 0
      %1273 = vmatprep.subr.bf16.mxu0 0
      %1274 = vmatpush2.bf16.msra.mxu0 0
      %1275 = vmatprep.mubr.bf16.mxu0 0
      %1276 = vmatmul.mubr.bf16.gmra.mxu0 %v1187
      %v1277 = vpop.f32.mrf.mxu0
      %v1278 = vadd.f32 0.0, %v1277
      %v1279 = vpop.f32.mrf.mxu0
      %v1280 = vpop.f32.mrf.mxu0
      %v1281 = vadd.f32 0.0, %v1280
      %v1282 = vpop.f32.mrf.mxu0
      %1283 = vmatprep.mubr.bf16.mxu0 0
      %1284 = vmatmul.mubr.bf16.gmra.mxu0 %v1188
      %v1285 = vpop.f32.mrf.mxu0
      %v1286 = vadd.f32 0.0, %v1285
      %v1287 = vpop.f32.mrf.mxu0
      %v1288 = vpop.f32.mrf.mxu0
      %v1289 = vadd.f32 0.0, %v1288
      %v1290 = vpop.f32.mrf.mxu0
      %1291 = vmatprep.mubr.bf16.mxu0 0
      %1292 = vmatmul.mubr.bf16.gmra.mxu0 %v1189
      %v1293 = vpop.f32.mrf.mxu0
      %v1294 = vadd.f32 0.0, %v1293
      %v1295 = vpop.f32.mrf.mxu0
      %v1296 = vpop.f32.mrf.mxu0
      %v1297 = vadd.f32 0.0, %v1296
      %v1298 = vpop.f32.mrf.mxu0
      %1299 = vmatprep.mubr.bf16.mxu0 0
      %1300 = vmatmul.mubr.bf16.gmra.mxu0 %v1190
      %v1301 = vpop.f32.mrf.mxu0
      %v1302 = vadd.f32 0.0, %v1301
      %v1303 = vpop.f32.mrf.mxu0
      %v1304 = vpop.f32.mrf.mxu0
      %v1305 = vadd.f32 0.0, %v1304
      %v1306 = vpop.f32.mrf.mxu0
      %1307 = vdwg.mxu0
      %v1308 = vadd.f32 %v1026, %v1278
      %v1309 = vadd.f32 %v1027, %v1281
      %v1310 = vadd.f32 %v1028, %v1286
      %v1311 = vadd.f32 %v1029, %v1289
      %v1312 = vadd.f32 %v1030, %v1294
      %v1313 = vadd.f32 %v1031, %v1297
      %v1314 = vadd.f32 %v1032, %v1302
      %v1315 = vadd.f32 %v1033, %v1305
      %v1316 = vld [vmem:[%s863] sm:$0xe]
      %v1317 = vld [vmem:[%s863 + $0x8] sm:$0xe]
      %v1318 = vld [vmem:[%s863 + $0x10] sm:$0xe]
      %v1319 = vld [vmem:[%s863 + $0x18] sm:$0xe]
      %v1320 = vld [vmem:[%s863 + $0x20] sm:$0xe]
      %v1321 = vld [vmem:[%s863 + $0x28] sm:$0xe]
      %v1322 = vld [vmem:[%s863 + $0x30] sm:$0xe]
      %v1323 = vld [vmem:[%s863 + $0x38] sm:$0xe]
      %v1340 = vrot.slane %v1316, 5
      %v1341 = vrot.slane %v1340, 4
      %v1342 = vrot.slane %v1035, 5
      %v1343 = vsel %vm673, %v1341, %v1342
      %v1344 = vrot.slane %v1317, 5
      %v1345 = vrot.slane %v1344, 4
      %v1346 = vrot.slane %v1037, 5
      %v1347 = vsel %vm673, %v1345, %v1346
      %v1348 = vrot.slane %v1318, 5
      %v1349 = vrot.slane %v1348, 4
      %v1350 = vrot.slane %v1039, 5
      %v1351 = vsel %vm673, %v1349, %v1350
      %v1352 = vrot.slane %v1319, 5
      %v1353 = vrot.slane %v1352, 4
      %v1354 = vrot.slane %v1041, 5
      %v1355 = vsel %vm673, %v1353, %v1354
      %v1356 = vrot.slane %v1320, 5
      %v1357 = vrot.slane %v1356, 4
      %v1358 = vrot.slane %v1043, 5
      %v1359 = vsel %vm673, %v1357, %v1358
      %v1360 = vrot.slane %v1321, 5
      %v1361 = vrot.slane %v1360, 4
      %v1362 = vrot.slane %v1045, 5
      %v1363 = vsel %vm673, %v1361, %v1362
      %v1364 = vrot.slane %v1322, 5
      %v1365 = vrot.slane %v1364, 4
      %v1366 = vrot.slane %v1047, 5
      %v1367 = vsel %vm673, %v1365, %v1366
      %v1368 = vrot.slane %v1323, 5
      %v1369 = vrot.slane %v1368, 4
      %v1370 = vrot.slane %v1049, 5
      %v1371 = vsel %vm673, %v1369, %v1370
      %s1372 = scalar_lea.vmem %s1, 320
      %v1373 = vld [vmem:[%s1372] sm:$0xf]
      %v1374 = vld [vmem:[%s1372 + $0x4] sm:$0xf]
      %v1375 = vld [vmem:[%s1372 + $0x8] sm:$0xf]
      %v1376 = vld [vmem:[%s1372 + $0xc] sm:$0xf]
      %v1377 = vld [vmem:[%s1372 + $0x10] sm:$0xf]
      %v1378 = vld [vmem:[%s1372 + $0x14] sm:$0xf]
      %v1379 = vld [vmem:[%s1372 + $0x18] sm:$0xf]
      %v1380 = vld [vmem:[%s1372 + $0x1c] sm:$0xf]
      %v1381 = vld [vmem:[%s1372 + $0x20] sm:$0xf]
      %v1382 = vld [vmem:[%s1372 + $0x24] sm:$0xf]
      %v1383 = vld [vmem:[%s1372 + $0x28] sm:$0xf]
      %v1384 = vld [vmem:[%s1372 + $0x2c] sm:$0xf]
      %v1385 = vld [vmem:[%s1372 + $0x30] sm:$0xf]
      %v1386 = vld [vmem:[%s1372 + $0x34] sm:$0xf]
      %v1387 = vld [vmem:[%s1372 + $0x38] sm:$0xf]
      %v1388 = vld [vmem:[%s1372 + $0x3c] sm:$0xf]
      %v1389 = vunpack.c.l.b16 %v1343
      %v1390 = vunpack.c.l.b16 %v1347
      %v1391 = vunpack.c.l.b16 %v1351
      %v1392 = vunpack.c.l.b16 %v1355
      %v1393 = vunpack.c.l.b16 %v1359
      %v1394 = vunpack.c.l.b16 %v1363
      %v1395 = vunpack.c.l.b16 %v1367
      %v1396 = vunpack.c.l.b16 %v1371
      %v1397 = vpack.c.b16 %v1390, %v1389
      %v1398 = vpack.c.b16 %v1392, %v1391
      %v1399 = vpack.c.b16 %v1394, %v1393
      %v1400 = vpack.c.b16 %v1396, %v1395
      %v1421 = vunpack.c.l.b16 %v1373
      %v1422 = vunpack.c.l.b16 %v1374
      %v1423 = vunpack.c.l.b16 %v1375
      %v1424 = vunpack.c.l.b16 %v1376
      %v1425 = vunpack.c.l.b16 %v1377
      %v1426 = vunpack.c.l.b16 %v1378
      %v1427 = vunpack.c.l.b16 %v1379
      %v1428 = vunpack.c.l.b16 %v1380
      %v1429 = vunpack.c.l.b16 %v1381
      %v1430 = vunpack.c.l.b16 %v1382
      %v1431 = vunpack.c.l.b16 %v1383
      %v1432 = vunpack.c.l.b16 %v1384
      %v1433 = vunpack.c.l.b16 %v1385
      %v1434 = vunpack.c.l.b16 %v1386
      %v1435 = vunpack.c.l.b16 %v1387
      %v1436 = vunpack.c.l.b16 %v1388
      %v1437 = vpack.c.b16 %v1422, %v1421
      %v1438 = vpack.c.b16 %v1424, %v1423
      %v1439 = vpack.c.b16 %v1426, %v1425
      %v1440 = vpack.c.b16 %v1428, %v1427
      %v1441 = vpack.c.b16 %v1430, %v1429
      %v1442 = vpack.c.b16 %v1432, %v1431
      %v1443 = vpack.c.b16 %v1434, %v1433
      %v1444 = vpack.c.b16 %v1436, %v1435
      %1453 = vmatprep.subr.bf16.mxu0 0
      %1454 = vmatpush1.bf16.msra.mxu0 %v1444
      %1455 = vmatprep.subr.bf16.mxu0 0
      %1456 = vmatpush1.bf16.msra.mxu0 %v1443
      %1457 = vmatprep.subr.bf16.mxu0 0
      %1458 = vmatpush1.bf16.msra.mxu0 %v1442
      %1459 = vmatprep.subr.bf16.mxu0 0
      %1460 = vmatpush1.bf16.msra.mxu0 %v1441
      %1461 = vmatprep.subr.bf16.mxu0 0
      %1462 = vmatpush1.bf16.msra.mxu0 %v1440
      %1463 = vmatprep.subr.bf16.mxu0 0
      %1464 = vmatpush1.bf16.msra.mxu0 %v1439
      %1465 = vmatprep.subr.bf16.mxu0 0
      %1466 = vmatpush1.bf16.msra.mxu0 %v1438
      %1467 = vmatprep.subr.bf16.mxu0 0
      %1468 = vmatpush1.bf16.msra.mxu0 %v1437
      %1469 = vmatprep.subr.bf16.mxu0 0
      %1470 = vmatpush2.bf16.msra.mxu0 0
      %1471 = vmatprep.subr.bf16.mxu0 0
      %1472 = vmatpush2.bf16.msra.mxu0 0
      %1473 = vmatprep.subr.bf16.mxu0 0
      %1474 = vmatpush2.bf16.msra.mxu0 0
      %1475 = vmatprep.subr.bf16.mxu0 0
      %1476 = vmatpush2.bf16.msra.mxu0 0
      %1477 = vmatprep.subr.bf16.mxu0 0
      %1478 = vmatpush2.bf16.msra.mxu0 0
      %1479 = vmatprep.subr.bf16.mxu0 0
      %1480 = vmatpush2.bf16.msra.mxu0 0
      %1481 = vmatprep.subr.bf16.mxu0 0
      %1482 = vmatpush2.bf16.msra.mxu0 0
      %1483 = vmatprep.subr.bf16.mxu0 0
      %1484 = vmatpush2.bf16.msra.mxu0 0
      %1485 = vmatprep.mubr.bf16.mxu0 0
      %1486 = vmatmul.mubr.bf16.gmra.mxu0 %v1397
      %v1487 = vpop.f32.mrf.mxu0
      %v1488 = vadd.f32 0.0, %v1487
      %v1489 = vpop.f32.mrf.mxu0
      %v1490 = vpop.f32.mrf.mxu0
      %v1491 = vadd.f32 0.0, %v1490
      %v1492 = vpop.f32.mrf.mxu0
      %1493 = vmatprep.mubr.bf16.mxu0 0
      %1494 = vmatmul.mubr.bf16.gmra.mxu0 %v1398
      %v1495 = vpop.f32.mrf.mxu0
      %v1496 = vadd.f32 0.0, %v1495
      %v1497 = vpop.f32.mrf.mxu0
      %v1498 = vpop.f32.mrf.mxu0
      %v1499 = vadd.f32 0.0, %v1498
      %v1500 = vpop.f32.mrf.mxu0
      %1501 = vmatprep.mubr.bf16.mxu0 0
      %1502 = vmatmul.mubr.bf16.gmra.mxu0 %v1399
      %v1503 = vpop.f32.mrf.mxu0
      %v1504 = vadd.f32 0.0, %v1503
      %v1505 = vpop.f32.mrf.mxu0
      %v1506 = vpop.f32.mrf.mxu0
      %v1507 = vadd.f32 0.0, %v1506
      %v1508 = vpop.f32.mrf.mxu0
      %1509 = vmatprep.mubr.bf16.mxu0 0
      %1510 = vmatmul.mubr.bf16.gmra.mxu0 %v1400
      %v1511 = vpop.f32.mrf.mxu0
      %v1512 = vadd.f32 0.0, %v1511
      %v1513 = vpop.f32.mrf.mxu0
      %v1514 = vpop.f32.mrf.mxu0
      %v1515 = vadd.f32 0.0, %v1514
      %v1516 = vpop.f32.mrf.mxu0
      %1517 = vdwg.mxu0
      %v1518 = vadd.f32 %v1308, %v1488
      %v1519 = vadd.f32 %v1309, %v1491
      %v1520 = vadd.f32 %v1310, %v1496
      %v1521 = vadd.f32 %v1311, %v1499
      %v1522 = vadd.f32 %v1312, %v1504
      %v1523 = vadd.f32 %v1313, %v1507
      %v1524 = vadd.f32 %v1314, %v1512
      %v1525 = vadd.f32 %v1315, %v1515
      %s1526 = sadd.s32 %s213, 2
      %s1527 = smul.u32 %s1526, 2
      %s1528 = smul.addr %s1527, 4
      %s1529 = scalar_lea.vmem %s195, %s1528
      %v1530 = vld [vmem:[%s1529] sm:$0xf]
      %v1531 = vld [vmem:[%s1529 + $0x8] sm:$0xf]
      %v1532 = vld [vmem:[%s1529 + $0x10] sm:$0xf]
      %v1533 = vld [vmem:[%s1529 + $0x18] sm:$0xf]
      %v1534 = vld [vmem:[%s1529 + $0x20] sm:$0xf]
      %v1535 = vld [vmem:[%s1529 + $0x28] sm:$0xf]
      %v1536 = vld [vmem:[%s1529 + $0x30] sm:$0xf]
      %v1537 = vld [vmem:[%s1529 + $0x38] sm:$0xf]
      %s1538 = scalar_lea.vmem %s1, 384
      %v1539 = vld [vmem:[%s1538] sm:$0xf]
      %v1540 = vld [vmem:[%s1538 + $0x4] sm:$0xf]
      %v1541 = vld [vmem:[%s1538 + $0x8] sm:$0xf]
      %v1542 = vld [vmem:[%s1538 + $0xc] sm:$0xf]
      %v1543 = vld [vmem:[%s1538 + $0x10] sm:$0xf]
      %v1544 = vld [vmem:[%s1538 + $0x14] sm:$0xf]
      %v1545 = vld [vmem:[%s1538 + $0x18] sm:$0xf]
      %v1546 = vld [vmem:[%s1538 + $0x1c] sm:$0xf]
      %v1547 = vld [vmem:[%s1538 + $0x20] sm:$0xf]
      %v1548 = vld [vmem:[%s1538 + $0x24] sm:$0xf]
      %v1549 = vld [vmem:[%s1538 + $0x28] sm:$0xf]
      %v1550 = vld [vmem:[%s1538 + $0x2c] sm:$0xf]
      %v1551 = vld [vmem:[%s1538 + $0x30] sm:$0xf]
      %v1552 = vld [vmem:[%s1538 + $0x34] sm:$0xf]
      %v1553 = vld [vmem:[%s1538 + $0x38] sm:$0xf]
      %v1554 = vld [vmem:[%s1538 + $0x3c] sm:$0xf]
      %v1563 = vunpack.c.l.b16 %v1530
      %v1564 = vunpack.c.l.b16 %v1531
      %v1565 = vunpack.c.l.b16 %v1532
      %v1566 = vunpack.c.l.b16 %v1533
      %v1567 = vunpack.c.l.b16 %v1534
      %v1568 = vunpack.c.l.b16 %v1535
      %v1569 = vunpack.c.l.b16 %v1536
      %v1570 = vunpack.c.l.b16 %v1537
      %v1571 = vpack.c.b16 %v1564, %v1563
      %v1572 = vpack.c.b16 %v1566, %v1565
      %v1573 = vpack.c.b16 %v1568, %v1567
      %v1574 = vpack.c.b16 %v1570, %v1569
      %v1595 = vunpack.c.l.b16 %v1539
      %v1596 = vunpack.c.l.b16 %v1540
      %v1597 = vunpack.c.l.b16 %v1541
      %v1598 = vunpack.c.l.b16 %v1542
      %v1599 = vunpack.c.l.b16 %v1543
      %v1600 = vunpack.c.l.b16 %v1544
      %v1601 = vunpack.c.l.b16 %v1545
      %v1602 = vunpack.c.l.b16 %v1546
      %v1603 = vunpack.c.l.b16 %v1547
      %v1604 = vunpack.c.l.b16 %v1548
      %v1605 = vunpack.c.l.b16 %v1549
      %v1606 = vunpack.c.l.b16 %v1550
      %v1607 = vunpack.c.l.b16 %v1551
      %v1608 = vunpack.c.l.b16 %v1552
      %v1609 = vunpack.c.l.b16 %v1553
      %v1610 = vunpack.c.l.b16 %v1554
      %v1611 = vpack.c.b16 %v1596, %v1595
      %v1612 = vpack.c.b16 %v1598, %v1597
      %v1613 = vpack.c.b16 %v1600, %v1599
      %v1614 = vpack.c.b16 %v1602, %v1601
      %v1615 = vpack.c.b16 %v1604, %v1603
      %v1616 = vpack.c.b16 %v1606, %v1605
      %v1617 = vpack.c.b16 %v1608, %v1607
      %v1618 = vpack.c.b16 %v1610, %v1609
      %1627 = vmatprep.subr.bf16.mxu0 0
      %1628 = vmatpush1.bf16.msra.mxu0 %v1618
      %1629 = vmatprep.subr.bf16.mxu0 0
      %1630 = vmatpush1.bf16.msra.mxu0 %v1617
      %1631 = vmatprep.subr.bf16.mxu0 0
      %1632 = vmatpush1.bf16.msra.mxu0 %v1616
      %1633 = vmatprep.subr.bf16.mxu0 0
      %1634 = vmatpush1.bf16.msra.mxu0 %v1615
      %1635 = vmatprep.subr.bf16.mxu0 0
      %1636 = vmatpush1.bf16.msra.mxu0 %v1614
      %1637 = vmatprep.subr.bf16.mxu0 0
      %1638 = vmatpush1.bf16.msra.mxu0 %v1613
      %1639 = vmatprep.subr.bf16.mxu0 0
      %1640 = vmatpush1.bf16.msra.mxu0 %v1612
      %1641 = vmatprep.subr.bf16.mxu0 0
      %1642 = vmatpush1.bf16.msra.mxu0 %v1611
      %1643 = vmatprep.subr.bf16.mxu0 0
      %1644 = vmatpush2.bf16.msra.mxu0 0
      %1645 = vmatprep.subr.bf16.mxu0 0
      %1646 = vmatpush2.bf16.msra.mxu0 0
      %1647 = vmatprep.subr.bf16.mxu0 0
      %1648 = vmatpush2.bf16.msra.mxu0 0
      %1649 = vmatprep.subr.bf16.mxu0 0
      %1650 = vmatpush2.bf16.msra.mxu0 0
      %1651 = vmatprep.subr.bf16.mxu0 0
      %1652 = vmatpush2.bf16.msra.mxu0 0
      %1653 = vmatprep.subr.bf16.mxu0 0
      %1654 = vmatpush2.bf16.msra.mxu0 0
      %1655 = vmatprep.subr.bf16.mxu0 0
      %1656 = vmatpush2.bf16.msra.mxu0 0
      %1657 = vmatprep.subr.bf16.mxu0 0
      %1658 = vmatpush2.bf16.msra.mxu0 0
      %1659 = vmatprep.mubr.bf16.mxu0 0
      %1660 = vmatmul.mubr.bf16.gmra.mxu0 %v1571
      %v1661 = vpop.f32.mrf.mxu0
      %v1662 = vadd.f32 0.0, %v1661
      %v1663 = vpop.f32.mrf.mxu0
      %v1664 = vpop.f32.mrf.mxu0
      %v1665 = vadd.f32 0.0, %v1664
      %v1666 = vpop.f32.mrf.mxu0
      %1667 = vmatprep.mubr.bf16.mxu0 0
      %1668 = vmatmul.mubr.bf16.gmra.mxu0 %v1572
      %v1669 = vpop.f32.mrf.mxu0
      %v1670 = vadd.f32 0.0, %v1669
      %v1671 = vpop.f32.mrf.mxu0
      %v1672 = vpop.f32.mrf.mxu0
      %v1673 = vadd.f32 0.0, %v1672
      %v1674 = vpop.f32.mrf.mxu0
      %1675 = vmatprep.mubr.bf16.mxu0 0
      %1676 = vmatmul.mubr.bf16.gmra.mxu0 %v1573
      %v1677 = vpop.f32.mrf.mxu0
      %v1678 = vadd.f32 0.0, %v1677
      %v1679 = vpop.f32.mrf.mxu0
      %v1680 = vpop.f32.mrf.mxu0
      %v1681 = vadd.f32 0.0, %v1680
      %v1682 = vpop.f32.mrf.mxu0
      %1683 = vmatprep.mubr.bf16.mxu0 0
      %1684 = vmatmul.mubr.bf16.gmra.mxu0 %v1574
      %v1685 = vpop.f32.mrf.mxu0
      %v1686 = vadd.f32 0.0, %v1685
      %v1687 = vpop.f32.mrf.mxu0
      %v1688 = vpop.f32.mrf.mxu0
      %v1689 = vadd.f32 0.0, %v1688
      %v1690 = vpop.f32.mrf.mxu0
      %1691 = vdwg.mxu0
      %v1692 = vadd.f32 %v1518, %v1662
      %v1693 = vadd.f32 %v1519, %v1665
      %v1694 = vadd.f32 %v1520, %v1670
      %v1695 = vadd.f32 %v1521, %v1673
      %v1696 = vadd.f32 %v1522, %v1678
      %v1697 = vadd.f32 %v1523, %v1681
      %v1698 = vadd.f32 %v1524, %v1686
      %v1699 = vadd.f32 %v1525, %v1689
      %v1700 = vld [vmem:[%s1529] sm:$0xf]
      %v1701 = vld [vmem:[%s1529 + $0x4] sm:$0x1]
      %v1702 = vld [vmem:[%s1529 + $0x8] sm:$0xf]
      %v1703 = vld [vmem:[%s1529 + $0xc] sm:$0x1]
      %v1704 = vld [vmem:[%s1529 + $0x10] sm:$0xf]
      %v1705 = vld [vmem:[%s1529 + $0x14] sm:$0x1]
      %v1706 = vld [vmem:[%s1529 + $0x18] sm:$0xf]
      %v1707 = vld [vmem:[%s1529 + $0x1c] sm:$0x1]
      %v1708 = vld [vmem:[%s1529 + $0x20] sm:$0xf]
      %v1709 = vld [vmem:[%s1529 + $0x24] sm:$0x1]
      %v1710 = vld [vmem:[%s1529 + $0x28] sm:$0xf]
      %v1711 = vld [vmem:[%s1529 + $0x2c] sm:$0x1]
      %v1712 = vld [vmem:[%s1529 + $0x30] sm:$0xf]
      %v1713 = vld [vmem:[%s1529 + $0x34] sm:$0x1]
      %v1714 = vld [vmem:[%s1529 + $0x38] sm:$0xf]
      %v1715 = vld [vmem:[%s1529 + $0x3c] sm:$0x1]
      %v1717 = vshrl.u32 %v1700, 16
      %v1719 = vrot.slane %v1717, 4
      %v1720 = vshll.u32 %v1700, 16
      %v1722 = vrot.slane %v1720, 5
      %v1723 = vor.u32 %v1719, %v1722
      %v1724 = vrot.slane %v1723, 4
      %v1726 = vshll.u32 %v1701, 16
      %v1728 = vrot.slane %v1726, 5
      %v1729 = vsel %vm251, %v1724, %v1728
      %v1731 = vshrl.u32 %v1702, 16
      %v1733 = vrot.slane %v1731, 4
      %v1734 = vshll.u32 %v1702, 16
      %v1736 = vrot.slane %v1734, 5
      %v1737 = vor.u32 %v1733, %v1736
      %v1738 = vrot.slane %v1737, 4
      %v1740 = vshll.u32 %v1703, 16
      %v1742 = vrot.slane %v1740, 5
      %v1743 = vsel %vm251, %v1738, %v1742
      %v1745 = vshrl.u32 %v1704, 16
      %v1747 = vrot.slane %v1745, 4
      %v1748 = vshll.u32 %v1704, 16
      %v1750 = vrot.slane %v1748, 5
      %v1751 = vor.u32 %v1747, %v1750
      %v1752 = vrot.slane %v1751, 4
      %v1754 = vshll.u32 %v1705, 16
      %v1756 = vrot.slane %v1754, 5
      %v1757 = vsel %vm251, %v1752, %v1756
      %v1759 = vshrl.u32 %v1706, 16
      %v1761 = vrot.slane %v1759, 4
      %v1762 = vshll.u32 %v1706, 16
      %v1764 = vrot.slane %v1762, 5
      %v1765 = vor.u32 %v1761, %v1764
      %v1766 = vrot.slane %v1765, 4
      %v1768 = vshll.u32 %v1707, 16
      %v1770 = vrot.slane %v1768, 5
      %v1771 = vsel %vm251, %v1766, %v1770
      %v1773 = vshrl.u32 %v1708, 16
      %v1775 = vrot.slane %v1773, 4
      %v1776 = vshll.u32 %v1708, 16
      %v1778 = vrot.slane %v1776, 5
      %v1779 = vor.u32 %v1775, %v1778
      %v1780 = vrot.slane %v1779, 4
      %v1782 = vshll.u32 %v1709, 16
      %v1784 = vrot.slane %v1782, 5
      %v1785 = vsel %vm251, %v1780, %v1784
      %v1787 = vshrl.u32 %v1710, 16
      %v1789 = vrot.slane %v1787, 4
      %v1790 = vshll.u32 %v1710, 16
      %v1792 = vrot.slane %v1790, 5
      %v1793 = vor.u32 %v1789, %v1792
      %v1794 = vrot.slane %v1793, 4
      %v1796 = vshll.u32 %v1711, 16
      %v1798 = vrot.slane %v1796, 5
      %v1799 = vsel %vm251, %v1794, %v1798
      %v1801 = vshrl.u32 %v1712, 16
      %v1803 = vrot.slane %v1801, 4
      %v1804 = vshll.u32 %v1712, 16
      %v1806 = vrot.slane %v1804, 5
      %v1807 = vor.u32 %v1803, %v1806
      %v1808 = vrot.slane %v1807, 4
      %v1810 = vshll.u32 %v1713, 16
      %v1812 = vrot.slane %v1810, 5
      %v1813 = vsel %vm251, %v1808, %v1812
      %v1815 = vshrl.u32 %v1714, 16
      %v1817 = vrot.slane %v1815, 4
      %v1818 = vshll.u32 %v1714, 16
      %v1820 = vrot.slane %v1818, 5
      %v1821 = vor.u32 %v1817, %v1820
      %v1822 = vrot.slane %v1821, 4
      %v1824 = vshll.u32 %v1715, 16
      %v1826 = vrot.slane %v1824, 5
      %v1827 = vsel %vm251, %v1822, %v1826
      %s1828 = scalar_lea.vmem %s1, 448
      %v1829 = vld [vmem:[%s1828] sm:$0xf]
      %v1830 = vld [vmem:[%s1828 + $0x4] sm:$0xf]
      %v1831 = vld [vmem:[%s1828 + $0x8] sm:$0xf]
      %v1832 = vld [vmem:[%s1828 + $0xc] sm:$0xf]
      %v1833 = vld [vmem:[%s1828 + $0x10] sm:$0xf]
      %v1834 = vld [vmem:[%s1828 + $0x14] sm:$0xf]
      %v1835 = vld [vmem:[%s1828 + $0x18] sm:$0xf]
      %v1836 = vld [vmem:[%s1828 + $0x1c] sm:$0xf]
      %v1837 = vld [vmem:[%s1828 + $0x20] sm:$0xf]
      %v1838 = vld [vmem:[%s1828 + $0x24] sm:$0xf]
      %v1839 = vld [vmem:[%s1828 + $0x28] sm:$0xf]
      %v1840 = vld [vmem:[%s1828 + $0x2c] sm:$0xf]
      %v1841 = vld [vmem:[%s1828 + $0x30] sm:$0xf]
      %v1842 = vld [vmem:[%s1828 + $0x34] sm:$0xf]
      %v1843 = vld [vmem:[%s1828 + $0x38] sm:$0xf]
      %v1844 = vld [vmem:[%s1828 + $0x3c] sm:$0xf]
      %v1845 = vunpack.c.l.b16 %v1729
      %v1846 = vunpack.c.l.b16 %v1743
      %v1847 = vunpack.c.l.b16 %v1757
      %v1848 = vunpack.c.l.b16 %v1771
      %v1849 = vunpack.c.l.b16 %v1785
      %v1850 = vunpack.c.l.b16 %v1799
      %v1851 = vunpack.c.l.b16 %v1813
      %v1852 = vunpack.c.l.b16 %v1827
      %v1853 = vpack.c.b16 %v1846, %v1845
      %v1854 = vpack.c.b16 %v1848, %v1847
      %v1855 = vpack.c.b16 %v1850, %v1849
      %v1856 = vpack.c.b16 %v1852, %v1851
      %v1877 = vunpack.c.l.b16 %v1829
      %v1878 = vunpack.c.l.b16 %v1830
      %v1879 = vunpack.c.l.b16 %v1831
      %v1880 = vunpack.c.l.b16 %v1832
      %v1881 = vunpack.c.l.b16 %v1833
      %v1882 = vunpack.c.l.b16 %v1834
      %v1883 = vunpack.c.l.b16 %v1835
      %v1884 = vunpack.c.l.b16 %v1836
      %v1885 = vunpack.c.l.b16 %v1837
      %v1886 = vunpack.c.l.b16 %v1838
      %v1887 = vunpack.c.l.b16 %v1839
      %v1888 = vunpack.c.l.b16 %v1840
      %v1889 = vunpack.c.l.b16 %v1841
      %v1890 = vunpack.c.l.b16 %v1842
      %v1891 = vunpack.c.l.b16 %v1843
      %v1892 = vunpack.c.l.b16 %v1844
      %v1893 = vpack.c.b16 %v1878, %v1877
      %v1894 = vpack.c.b16 %v1880, %v1879
      %v1895 = vpack.c.b16 %v1882, %v1881
      %v1896 = vpack.c.b16 %v1884, %v1883
      %v1897 = vpack.c.b16 %v1886, %v1885
      %v1898 = vpack.c.b16 %v1888, %v1887
      %v1899 = vpack.c.b16 %v1890, %v1889
      %v1900 = vpack.c.b16 %v1892, %v1891
      %1909 = vmatprep.subr.bf16.mxu0 0
      %1910 = vmatpush1.bf16.msra.mxu0 %v1900
      %1911 = vmatprep.subr.bf16.mxu0 0
      %1912 = vmatpush1.bf16.msra.mxu0 %v1899
      %1913 = vmatprep.subr.bf16.mxu0 0
      %1914 = vmatpush1.bf16.msra.mxu0 %v1898
      %1915 = vmatprep.subr.bf16.mxu0 0
      %1916 = vmatpush1.bf16.msra.mxu0 %v1897
      %1917 = vmatprep.subr.bf16.mxu0 0
      %1918 = vmatpush1.bf16.msra.mxu0 %v1896
      %1919 = vmatprep.subr.bf16.mxu0 0
      %1920 = vmatpush1.bf16.msra.mxu0 %v1895
      %1921 = vmatprep.subr.bf16.mxu0 0
      %1922 = vmatpush1.bf16.msra.mxu0 %v1894
      %1923 = vmatprep.subr.bf16.mxu0 0
      %1924 = vmatpush1.bf16.msra.mxu0 %v1893
      %1925 = vmatprep.subr.bf16.mxu0 0
      %1926 = vmatpush2.bf16.msra.mxu0 0
      %1927 = vmatprep.subr.bf16.mxu0 0
      %1928 = vmatpush2.bf16.msra.mxu0 0
      %1929 = vmatprep.subr.bf16.mxu0 0
      %1930 = vmatpush2.bf16.msra.mxu0 0
      %1931 = vmatprep.subr.bf16.mxu0 0
      %1932 = vmatpush2.bf16.msra.mxu0 0
      %1933 = vmatprep.subr.bf16.mxu0 0
      %1934 = vmatpush2.bf16.msra.mxu0 0
      %1935 = vmatprep.subr.bf16.mxu0 0
      %1936 = vmatpush2.bf16.msra.mxu0 0
      %1937 = vmatprep.subr.bf16.mxu0 0
      %1938 = vmatpush2.bf16.msra.mxu0 0
      %1939 = vmatprep.subr.bf16.mxu0 0
      %1940 = vmatpush2.bf16.msra.mxu0 0
      %1941 = vmatprep.mubr.bf16.mxu0 0
      %1942 = vmatmul.mubr.bf16.gmra.mxu0 %v1853
      %v1943 = vpop.f32.mrf.mxu0
      %v1944 = vadd.f32 0.0, %v1943
      %v1945 = vpop.f32.mrf.mxu0
      %v1946 = vpop.f32.mrf.mxu0
      %v1947 = vadd.f32 0.0, %v1946
      %v1948 = vpop.f32.mrf.mxu0
      %1949 = vmatprep.mubr.bf16.mxu0 0
      %1950 = vmatmul.mubr.bf16.gmra.mxu0 %v1854
      %v1951 = vpop.f32.mrf.mxu0
      %v1952 = vadd.f32 0.0, %v1951
      %v1953 = vpop.f32.mrf.mxu0
      %v1954 = vpop.f32.mrf.mxu0
      %v1955 = vadd.f32 0.0, %v1954
      %v1956 = vpop.f32.mrf.mxu0
      %1957 = vmatprep.mubr.bf16.mxu0 0
      %1958 = vmatmul.mubr.bf16.gmra.mxu0 %v1855
      %v1959 = vpop.f32.mrf.mxu0
      %v1960 = vadd.f32 0.0, %v1959
      %v1961 = vpop.f32.mrf.mxu0
      %v1962 = vpop.f32.mrf.mxu0
      %v1963 = vadd.f32 0.0, %v1962
      %v1964 = vpop.f32.mrf.mxu0
      %1965 = vmatprep.mubr.bf16.mxu0 0
      %1966 = vmatmul.mubr.bf16.gmra.mxu0 %v1856
      %v1967 = vpop.f32.mrf.mxu0
      %v1968 = vadd.f32 0.0, %v1967
      %v1969 = vpop.f32.mrf.mxu0
      %v1970 = vpop.f32.mrf.mxu0
      %v1971 = vadd.f32 0.0, %v1970
      %v1972 = vpop.f32.mrf.mxu0
      %1973 = vdwg.mxu0
      %v1974 = vadd.f32 %v1692, %v1944
      %v1975 = vadd.f32 %v1693, %v1947
      %v1976 = vadd.f32 %v1694, %v1952
      %v1977 = vadd.f32 %v1695, %v1955
      %v1978 = vadd.f32 %v1696, %v1960
      %v1979 = vadd.f32 %v1697, %v1963
      %v1980 = vadd.f32 %v1698, %v1968
      %v1981 = vadd.f32 %v1699, %v1971
      %v1982 = vld [vmem:[%s1529] sm:$0xe]
      %v1983 = vld [vmem:[%s1529 + $0x8] sm:$0xe]
      %v1984 = vld [vmem:[%s1529 + $0x10] sm:$0xe]
      %v1985 = vld [vmem:[%s1529 + $0x18] sm:$0xe]
      %v1986 = vld [vmem:[%s1529 + $0x20] sm:$0xe]
      %v1987 = vld [vmem:[%s1529 + $0x28] sm:$0xe]
      %v1988 = vld [vmem:[%s1529 + $0x30] sm:$0xe]
      %v1989 = vld [vmem:[%s1529 + $0x38] sm:$0xe]
      %v2006 = vrot.slane %v1982, 5
      %v2007 = vrot.slane %v2006, 4
      %v2008 = vrot.slane %v1701, 5
      %v2009 = vsel %vm673, %v2007, %v2008
      %v2010 = vrot.slane %v1983, 5
      %v2011 = vrot.slane %v2010, 4
      %v2012 = vrot.slane %v1703, 5
      %v2013 = vsel %vm673, %v2011, %v2012
      %v2014 = vrot.slane %v1984, 5
      %v2015 = vrot.slane %v2014, 4
      %v2016 = vrot.slane %v1705, 5
      %v2017 = vsel %vm673, %v2015, %v2016
      %v2018 = vrot.slane %v1985, 5
      %v2019 = vrot.slane %v2018, 4
      %v2020 = vrot.slane %v1707, 5
      %v2021 = vsel %vm673, %v2019, %v2020
      %v2022 = vrot.slane %v1986, 5
      %v2023 = vrot.slane %v2022, 4
      %v2024 = vrot.slane %v1709, 5
      %v2025 = vsel %vm673, %v2023, %v2024
      %v2026 = vrot.slane %v1987, 5
      %v2027 = vrot.slane %v2026, 4
      %v2028 = vrot.slane %v1711, 5
      %v2029 = vsel %vm673, %v2027, %v2028
      %v2030 = vrot.slane %v1988, 5
      %v2031 = vrot.slane %v2030, 4
      %v2032 = vrot.slane %v1713, 5
      %v2033 = vsel %vm673, %v2031, %v2032
      %v2034 = vrot.slane %v1989, 5
      %v2035 = vrot.slane %v2034, 4
      %v2036 = vrot.slane %v1715, 5
      %v2037 = vsel %vm673, %v2035, %v2036
      %s2038 = scalar_lea.vmem %s1, 512
      %v2039 = vld [vmem:[%s2038] sm:$0xf]
      %v2040 = vld [vmem:[%s2038 + $0x4] sm:$0xf]
      %v2041 = vld [vmem:[%s2038 + $0x8] sm:$0xf]
      %v2042 = vld [vmem:[%s2038 + $0xc] sm:$0xf]
      %v2043 = vld [vmem:[%s2038 + $0x10] sm:$0xf]
      %v2044 = vld [vmem:[%s2038 + $0x14] sm:$0xf]
      %v2045 = vld [vmem:[%s2038 + $0x18] sm:$0xf]
      %v2046 = vld [vmem:[%s2038 + $0x1c] sm:$0xf]
      %v2047 = vld [vmem:[%s2038 + $0x20] sm:$0xf]
      %v2048 = vld [vmem:[%s2038 + $0x24] sm:$0xf]
      %v2049 = vld [vmem:[%s2038 + $0x28] sm:$0xf]
      %v2050 = vld [vmem:[%s2038 + $0x2c] sm:$0xf]
      %v2051 = vld [vmem:[%s2038 + $0x30] sm:$0xf]
      %v2052 = vld [vmem:[%s2038 + $0x34] sm:$0xf]
      %v2053 = vld [vmem:[%s2038 + $0x38] sm:$0xf]
      %v2054 = vld [vmem:[%s2038 + $0x3c] sm:$0xf]
      %v2055 = vunpack.c.l.b16 %v2009
      %v2056 = vunpack.c.l.b16 %v2013
      %v2057 = vunpack.c.l.b16 %v2017
      %v2058 = vunpack.c.l.b16 %v2021
      %v2059 = vunpack.c.l.b16 %v2025
      %v2060 = vunpack.c.l.b16 %v2029
      %v2061 = vunpack.c.l.b16 %v2033
      %v2062 = vunpack.c.l.b16 %v2037
      %v2063 = vpack.c.b16 %v2056, %v2055
      %v2064 = vpack.c.b16 %v2058, %v2057
      %v2065 = vpack.c.b16 %v2060, %v2059
      %v2066 = vpack.c.b16 %v2062, %v2061
      %v2087 = vunpack.c.l.b16 %v2039
      %v2088 = vunpack.c.l.b16 %v2040
      %v2089 = vunpack.c.l.b16 %v2041
      %v2090 = vunpack.c.l.b16 %v2042
      %v2091 = vunpack.c.l.b16 %v2043
      %v2092 = vunpack.c.l.b16 %v2044
      %v2093 = vunpack.c.l.b16 %v2045
      %v2094 = vunpack.c.l.b16 %v2046
      %v2095 = vunpack.c.l.b16 %v2047
      %v2096 = vunpack.c.l.b16 %v2048
      %v2097 = vunpack.c.l.b16 %v2049
      %v2098 = vunpack.c.l.b16 %v2050
      %v2099 = vunpack.c.l.b16 %v2051
      %v2100 = vunpack.c.l.b16 %v2052
      %v2101 = vunpack.c.l.b16 %v2053
      %v2102 = vunpack.c.l.b16 %v2054
      %v2103 = vpack.c.b16 %v2088, %v2087
      %v2104 = vpack.c.b16 %v2090, %v2089
      %v2105 = vpack.c.b16 %v2092, %v2091
      %v2106 = vpack.c.b16 %v2094, %v2093
      %v2107 = vpack.c.b16 %v2096, %v2095
      %v2108 = vpack.c.b16 %v2098, %v2097
      %v2109 = vpack.c.b16 %v2100, %v2099
      %v2110 = vpack.c.b16 %v2102, %v2101
      %2119 = vmatprep.subr.bf16.mxu0 0
      %2120 = vmatpush1.bf16.msra.mxu0 %v2110
      %2121 = vmatprep.subr.bf16.mxu0 0
      %2122 = vmatpush1.bf16.msra.mxu0 %v2109
      %2123 = vmatprep.subr.bf16.mxu0 0
      %2124 = vmatpush1.bf16.msra.mxu0 %v2108
      %2125 = vmatprep.subr.bf16.mxu0 0
      %2126 = vmatpush1.bf16.msra.mxu0 %v2107
      %2127 = vmatprep.subr.bf16.mxu0 0
      %2128 = vmatpush1.bf16.msra.mxu0 %v2106
      %2129 = vmatprep.subr.bf16.mxu0 0
      %2130 = vmatpush1.bf16.msra.mxu0 %v2105
      %2131 = vmatprep.subr.bf16.mxu0 0
      %2132 = vmatpush1.bf16.msra.mxu0 %v2104
      %2133 = vmatprep.subr.bf16.mxu0 0
      %2134 = vmatpush1.bf16.msra.mxu0 %v2103
      %2135 = vmatprep.subr.bf16.mxu0 0
      %2136 = vmatpush2.bf16.msra.mxu0 0
      %2137 = vmatprep.subr.bf16.mxu0 0
      %2138 = vmatpush2.bf16.msra.mxu0 0
      %2139 = vmatprep.subr.bf16.mxu0 0
      %2140 = vmatpush2.bf16.msra.mxu0 0
      %2141 = vmatprep.subr.bf16.mxu0 0
      %2142 = vmatpush2.bf16.msra.mxu0 0
      %2143 = vmatprep.subr.bf16.mxu0 0
      %2144 = vmatpush2.bf16.msra.mxu0 0
      %2145 = vmatprep.subr.bf16.mxu0 0
      %2146 = vmatpush2.bf16.msra.mxu0 0
      %2147 = vmatprep.subr.bf16.mxu0 0
      %2148 = vmatpush2.bf16.msra.mxu0 0
      %2149 = vmatprep.subr.bf16.mxu0 0
      %2150 = vmatpush2.bf16.msra.mxu0 0
      %2151 = vmatprep.mubr.bf16.mxu0 0
      %2152 = vmatmul.mubr.bf16.gmra.mxu0 %v2063
      %v2153 = vpop.f32.mrf.mxu0
      %v2154 = vadd.f32 0.0, %v2153
      %v2155 = vpop.f32.mrf.mxu0
      %v2156 = vpop.f32.mrf.mxu0
      %v2157 = vadd.f32 0.0, %v2156
      %v2158 = vpop.f32.mrf.mxu0
      %2159 = vmatprep.mubr.bf16.mxu0 0
      %2160 = vmatmul.mubr.bf16.gmra.mxu0 %v2064
      %v2161 = vpop.f32.mrf.mxu0
      %v2162 = vadd.f32 0.0, %v2161
      %v2163 = vpop.f32.mrf.mxu0
      %v2164 = vpop.f32.mrf.mxu0
      %v2165 = vadd.f32 0.0, %v2164
      %v2166 = vpop.f32.mrf.mxu0
      %2167 = vmatprep.mubr.bf16.mxu0 0
      %2168 = vmatmul.mubr.bf16.gmra.mxu0 %v2065
      %v2169 = vpop.f32.mrf.mxu0
      %v2170 = vadd.f32 0.0, %v2169
      %v2171 = vpop.f32.mrf.mxu0
      %v2172 = vpop.f32.mrf.mxu0
      %v2173 = vadd.f32 0.0, %v2172
      %v2174 = vpop.f32.mrf.mxu0
      %2175 = vmatprep.mubr.bf16.mxu0 0
      %2176 = vmatmul.mubr.bf16.gmra.mxu0 %v2066
      %v2177 = vpop.f32.mrf.mxu0
      %v2178 = vadd.f32 0.0, %v2177
      %v2179 = vpop.f32.mrf.mxu0
      %v2180 = vpop.f32.mrf.mxu0
      %v2181 = vadd.f32 0.0, %v2180
      %v2182 = vpop.f32.mrf.mxu0
      %2183 = vdwg.mxu0
      %v2184 = vadd.f32 %v1974, %v2154
      %v2185 = vadd.f32 %v1975, %v2157
      %v2186 = vadd.f32 %v1976, %v2162
      %v2187 = vadd.f32 %v1977, %v2165
      %v2188 = vadd.f32 %v1978, %v2170
      %v2189 = vadd.f32 %v1979, %v2173
      %v2190 = vadd.f32 %v1980, %v2178
      %v2191 = vadd.f32 %v1981, %v2181
      %2192 = vst [vmem:[%s204] sm:$0xff] %v2184
      %2193 = vst [vmem:[%s204 + $0x8] sm:$0xff] %v2185
      %2194 = vst [vmem:[%s204 + $0x10] sm:$0xff] %v2186
      %2195 = vst [vmem:[%s204 + $0x18] sm:$0xff] %v2187
      %2196 = vst [vmem:[%s204 + $0x20] sm:$0xff] %v2188
      %2197 = vst [vmem:[%s204 + $0x28] sm:$0xff] %v2189
      %2198 = vst [vmem:[%s204 + $0x30] sm:$0xff] %v2190
      %2199 = vst [vmem:[%s204 + $0x38] sm:$0xff] %v2191
      %v2200 = vadd.f32 %v2184, %v2185
      %v2201 = vadd.f32 %v2200, %v2186
      %v2202 = vadd.f32 %v2201, %v2187
      %v2203 = vadd.f32 %v2202, %v2188
      %v2204 = vadd.f32 %v2203, %v2189
      %v2205 = vadd.f32 %v2204, %v2190
      %v2206 = vadd.f32 %v2205, %v2191
      %v2207 = vrot.slane %v2206, 4
      %v2208 = vadd.f32 %v2206, %v2207
      %v2209 = vrot.slane %v2208, 2
      %v2210 = vadd.f32 %v2208, %v2209
      %v2211 = vrot.slane %v2210, 1
      %v2212 = vadd.f32 %v2210, %v2211
      %2213 = vst [vmem:[%s211] sm:$0x1] %v2212
      %v2214 = vmul.f32 %v2184, %v2184
      %v2215 = vmul.f32 %v2185, %v2185
      %v2216 = vmul.f32 %v2186, %v2186
      %v2217 = vmul.f32 %v2187, %v2187
      %v2218 = vmul.f32 %v2188, %v2188
      %v2219 = vmul.f32 %v2189, %v2189
      %v2220 = vmul.f32 %v2190, %v2190
      %v2221 = vmul.f32 %v2191, %v2191
      %v2222 = vadd.f32 %v2214, %v2215
      %v2223 = vadd.f32 %v2222, %v2216
      %v2224 = vadd.f32 %v2223, %v2217
      %v2225 = vadd.f32 %v2224, %v2218
      %v2226 = vadd.f32 %v2225, %v2219
      %v2227 = vadd.f32 %v2226, %v2220
      %v2228 = vadd.f32 %v2227, %v2221
      %v2229 = vrot.slane %v2228, 4
      %v2230 = vadd.f32 %v2228, %v2229
      %v2231 = vrot.slane %v2230, 2
      %v2232 = vadd.f32 %v2230, %v2231
      %v2233 = vrot.slane %v2232, 1
      %v2234 = vadd.f32 %v2232, %v2233
      %2235 = vst [vmem:[%s211 + $0x1] sm:$0x1] %v2234
      %p2236 = scmp.lt.s32.totalorder %s19, 1
      %s2237 = scalar_select %p2236, %s19, 1
      %p2238 = scmp.lt.s32.totalorder %s20, 0
      %s2239 = scalar_select %p2238, %s20, 0
      %s2240 = smul.addr %s2239, 8
      %s2241 = smul.addr %s2237, 8
      %s2242 = sadd.s32 %s2240, %s2241
      %s2243 = smul.addr %s2242, 8
      %s2244 = scalar_lea.vmem %s2, %s2243
      %p2245 = scmp.lt.s32.totalorder %s19, 1
      %s2246 = scalar_select %p2245, %s19, 1
      %p2247 = scmp.lt.s32.totalorder %s20, 0
      %s2248 = scalar_select %p2247, %s20, 0
      %s2249 = sadd.s32 %s2248, %s2246
      %s2250 = smul.addr %s2249, 2
      %s2251 = scalar_lea.vmem %s3, %s2250
      // Predicated region
      $region29: #{basic_block_forward.8} parent=27 // pred_check
        %p2252 = pneg %p94
      $region30: #{basic_block_forward.8} parent=27 // pred_check_branch
        %2254 = sbr.rel (%p2252) target = $region32
      $region31: #{basic_block_forward.8} parent=27 // pred_region
        _
      $region32: #{basic_block_forward.8} parent=27 // pred_fallthru
        _
      // Predicated region
      $region33: #{basic_block_forward.8} parent=27 // pred_check
        %p2255 = pneg %p122
      $region34: #{basic_block_forward.8} parent=27 // pred_check_branch
        %2257 = sbr.rel (%p2255) target = $region36
      $region35: #{basic_block_forward.8} parent=27 // pred_region
        _
      $region36: #{basic_block_forward.8} parent=27 // pred_fallthru
        _
    $region28: #{basic_block_forward.8} parent=5 // pred_fallthru
      _
    %p2258 = scmp.le.s32.totalorder 2, %s10
    // Predicated region
    $region37: #{basic_block_forward.8} parent=5 // pred_check
      %p2259 = pneg %p2258
    $region38: #{basic_block_forward.8} parent=5 // pred_check_branch
      %2261 = sbr.rel (%p2259) target = $region40
    $region39: #{basic_block_forward.8} parent=5 // pred_region
      %s2262 = ssub.s32 %s10, 2
      // Predicated region
      $region41: #{basic_block_forward.8} parent=39 // pred_check
        %p2263 = pneg %p100
      $region42: #{basic_block_forward.8} parent=39 // pred_check_branch
        %2265 = sbr.rel (%p2263) target = $region44
      $region43: #{basic_block_forward.8} parent=39 // pred_region
        %p2266 = scmp.lt.s32.totalorder %s21, 1
        %s2267 = scalar_select %p2266, %s21, 1
        %p2268 = scmp.lt.s32.totalorder %s22, 0
        %s2269 = scalar_select %p2268, %s22, 0
        %s2270 = smul.addr %s2269, 8
        %s2271 = smul.addr %s2267, 8
        %s2272 = sadd.s32 %s2270, %s2271
        %s2273 = smul.addr %s2272, 8
        %s2274 = scalar_lea.vmem %s2, %s2273
      $region44: #{basic_block_forward.8} parent=39 // pred_fallthru
        _
      // Predicated region
      $region45: #{basic_block_forward.8} parent=39 // pred_check
        %p2275 = pneg %p128
      $region46: #{basic_block_forward.8} parent=39 // pred_check_branch
        %2277 = sbr.rel (%p2275) target = $region48
      $region47: #{basic_block_forward.8} parent=39 // pred_region
        %p2278 = scmp.lt.s32.totalorder %s21, 1
        %s2279 = scalar_select %p2278, %s21, 1
        %p2280 = scmp.lt.s32.totalorder %s22, 0
        %s2281 = scalar_select %p2280, %s22, 0
        %s2282 = sadd.s32 %s2281, %s2279
        %s2283 = smul.addr %s2282, 2
        %s2284 = scalar_lea.vmem %s3, %s2283
      $region48: #{basic_block_forward.8} parent=39 // pred_fallthru
        _
    $region40: #{basic_block_forward.8} parent=5 // pred_fallthru
      _
  $region6: #{basic_block_forward.8} parent=0 // loop_footer
    %s14 = sadd.s32 1, %s10
  $region7: #{basic_block_forward.8} parent=0 // loop_footer_branch
    %9 = sbr.rel target = $region3
  $region8: #{basic_block_forward.8} parent=0 // loop_exit
    _

</llo_original>
